<compile_context>
chip_gen: v5e
topology: v5e:2x2
jax: 0.10.0
libtpu: 0.0.40
codegen_flags: <defaults>
</compile_context>

<pallas_src>
import functools

import jax
import jax.numpy as jnp
from jax import lax
from jax.experimental import pallas as pl
from jax.experimental.pallas import tpu as pltpu

EPS = 1e-5
LANE = 128


def _round_up(x, m):
    return (x + m - 1) // m * m


# ---------------------------------------------------------------------------
# Fused kernel: BatchNorm (precomputed batch stats) + ReLU + 3x3 conv (pad=1).
# One (image, channel-block) pair per grid step; 9 accumulating MXU dots.
# ---------------------------------------------------------------------------
def _bn_relu_conv3x3_kernel(x_ref, mu_ref, sc_ref, w_ref, o_ref, y_ref, *,
                            width, pad0):
    # x_ref : (HWP, CHB) f32   halo-padded flat image rows, one channel block
    # mu_ref: (1, CHB)   f32   per-channel batch mean
    # sc_ref: (1, CHB)   f32   per-channel rsqrt(var + eps)
    # w_ref : (9, CHB, G) bf16 conv taps (tap = 3*dy + dx) for this channel block
    # o_ref : (HW, G)    f32   conv output, accumulated over the channel-block axis
    # y_ref : (HWP, CHB) f32   VMEM scratch: ReLU(BN(x)) with zeroed halo rows
    hwp, chb = x_ref.shape
    hw, g = o_ref.shape
    k = pl.program_id(1)

    # --- BN + ReLU into the scratch; only the small halo rows are zeroed ----
    # (halo rows of the HBM buffer are zero raw-x, but BN would map them to
    #  relu(-mu*sc) != 0, so force the conv zero-padding here).
    y_ref[0:pad0, :] = jnp.zeros((pad0, chb), y_ref.dtype)
    y_ref[pad0 + hw:hwp, :] = jnp.zeros((hwp - pad0 - hw, chb), y_ref.dtype)
    y_ref[pad0:pad0 + hw, :] = jnp.maximum(
        (x_ref[pad0:pad0 + hw, :] - mu_ref[...]) * sc_ref[...], 0.0)

    # --- edge masks for the flattened-row wrap at the left/right border -----
    idx = lax.broadcasted_iota(jnp.int32, (hw, 1), 0)
    if width & (width - 1) == 0:          # power-of-two width: cheap AND
        col = jnp.bitwise_and(idx, width - 1)
    else:
        col = idx % width
    ml = (col != 0).astype(jnp.float32)          # kills dx == 0 taps at w == 0
    mr = (col != width - 1).astype(jnp.float32)  # kills dx == 2 taps at w == W-1

    # --- 9 accumulating MXU dots (no im2col slab, no lane concat) -----------
    base = pad0 - width - 1                      # static; dx==1 taps 8-row aligned
    acc = jnp.zeros((hw, g), jnp.float32)
    for dy in range(3):
        for dx in range(3):
            start = base + dy * width + dx
            s = y_ref[start:start + hw, :]
            if dx == 0:
                s = s * ml
            elif dx == 2:
                s = s * mr
            acc = acc + jnp.dot(s.astype(jnp.bfloat16), w_ref[3 * dy + dx],
                                preferred_element_type=jnp.float32)

    @pl.when(k == 0)
    def _():
        o_ref[...] = jnp.zeros_like(o_ref)

    o_ref[...] += acc


def _layer_conv(buf, mu, sc, w9, *, n, hw, hwp, width, pad0, chb, kb, growth):
    kernel = functools.partial(_bn_relu_conv3x3_kernel, width=width, pad0=pad0)
    return pl.pallas_call(
        kernel,
        out_shape=jax.ShapeDtypeStruct((n, hw, growth), jnp.float32),
        grid=(n, kb),                      # reduction (channel-block) axis last
        in_specs=[
            pl.BlockSpec((None, hwp, chb), lambda b, k: (b, 0, k)),
            pl.BlockSpec((1, chb), lambda b, k: (0, k)),
            pl.BlockSpec((1, chb), lambda b, k: (0, k)),
            pl.BlockSpec((9, chb, growth), lambda b, k: (0, k, 0)),
        ],
        out_specs=pl.BlockSpec((None, hw, growth), lambda b, k: (b, 0, 0)),
        scratch_shapes=[pltpu.VMEM((hwp, chb), jnp.float32)],
        compiler_params=pltpu.CompilerParams(
            dimension_semantics=("parallel", "arbitrary")),
    )(buf, mu, sc, w9)


# ---------------------------------------------------------------------------
# dense_block forward
# ---------------------------------------------------------------------------
@jax.jit
def dense_block_forward(x_nchw, weights):
    """x_nchw: (N, C_in, H, W); weights: list of (3,3,Cin_i,growth) HWIO f32
    (Cin channel order follows PyTorch's torch.cat((out, x), 1) convention)."""
    n, c0, h, w = x_nchw.shape
    num_layers = len(weights)
    growth = weights[0].shape[-1]
    hw = h * w
    pad0 = _round_up(w + 1, 8)                 # sublane-aligned halo in the buffer
    hwp = hw + 2 * pad0
    c_total = c0 + num_layers * growth
    if c_total <= LANE:                        # channel-block size for the K axis
        chb, c_buf = c_total, c_total
    else:
        chb, c_buf = LANE, _round_up(c_total, LANE)
    npix = n * hw

    # NCHW -> flat channels-last (N, HW, C0)
    x_flat = jnp.transpose(x_nchw, (0, 2, 3, 1)).astype(jnp.float32)
    x_flat = x_flat.reshape(n, hw, c0)

    # Preallocated activation buffer with the conv halo built in: rows
    # [pad0, pad0+hw) hold the image, the rest stays zero (= conv zero padding).
    # Channel layout: [x0 | out_1 | out_2 | ... | out_L] (+ optional lane padding).
    buf = jnp.zeros((n, hwp, c_buf), jnp.float32)
    buf = buf.at[:, pad0:pad0 + hw, :c0].set(x_flat)

    # Cached per-channel batch statistics (sum, sum of squares) in buffer order.
    ch_sum = jnp.sum(x_flat, axis=(0, 1))
    ch_sumsq = jnp.sum(jnp.square(x_flat), axis=(0, 1))

    for i, w_hwio in enumerate(weights):
        cin = c0 + i * growth
        assert w_hwio.shape == (3, 3, cin, growth), w_hwio.shape

        # PyTorch layer-i weight input channels are ordered
        #   [out_i, out_{i-1}, ..., out_1, x0]     (torch.cat((out, x), 1) per step).
        # Reorder them to the buffer layout [x0, out_1, ..., out_i].
        perm = list(range(i * growth, i * growth + c0))
        for kseg in range(1, i + 1):
            off = (i - kseg) * growth
            perm += list(range(off, off + growth))
        w_buf = jnp.take(w_hwio, jnp.asarray(perm, jnp.int32), axis=2)
        w9 = jnp.zeros((9, c_buf, growth), jnp.float32)
        w9 = w9.at[:, :cin, :].set(w_buf.reshape(9, cin, growth))
        w9 = w9.astype(jnp.bfloat16)           # zero rows for absent/pad channels

        # Training-mode BatchNorm2d stats from the cached sums (biased variance,
        # gamma=1 / beta=0).  Absent channels get mu=0, sc=1 (their y is 0 anyway).
        mean = ch_sum / npix
        var = jnp.maximum(ch_sumsq / npix - jnp.square(mean), 0.0)
        mu = jnp.zeros((1, c_buf), jnp.float32).at[0, :cin].set(mean)
        sc = jnp.ones((1, c_buf), jnp.float32).at[0, :cin].set(
            lax.rsqrt(var + EPS))

        kb = pl.cdiv(cin, chb)                 # only channel blocks that exist yet
        out = _layer_conv(buf, mu, sc, w9, n=n, hw=hw, hwp=hwp, width=w,
                          pad0=pad0, chb=chb, kb=kb, growth=growth)

        # Append the new channels in place (no concat of the whole tensor).
        c_off = c0 + i * growth
        buf = buf.at[:, pad0:pad0 + hw, c_off:c_off + growth].set(out)

        # Extend the cached statistics with the new channels only (one pass).
        ch_sum = jnp.concatenate([ch_sum, jnp.sum(out, axis=(0, 1))])
        ch_sumsq = jnp.concatenate([ch_sumsq,
                                    jnp.sum(jnp.square(out), axis=(0, 1))])

    # Restore torch.cat ordering once: [out_L, out_{L-1}, ..., out_1, x0].
    img = buf[:, pad0:pad0 + hw, :]
    segs = [img[:, :, c0 + i * growth: c0 + (i + 1) * growth]
            for i in reversed(range(num_layers))]
    segs.append(img[:, :, :c0])
    y = jnp.concatenate(segs, axis=-1)
    return jnp.transpose(y.reshape(n, h, w, c_total), (0, 3, 1, 2))   # -> NCHW


def init_weights(key, in_channel, growth_rate, num_layers):
    """Deterministic Kaiming-style init; PyTorch OIHW -> HWIO, f32."""
    ws = []
    c = in_channel
    for _ in range(num_layers):
        key, sub = jax.random.split(key)
        fan_in = c * 9
        w_oihw = jax.random.normal(sub, (growth_rate, c, 3, 3), jnp.float32)
        w_oihw = w_oihw * jnp.sqrt(2.0 / fan_in)
        ws.append(jnp.transpose(w_oihw, (2, 3, 1, 0)))   # (3,3,Cin,Cout)
        c += growth_rate
    return ws


# ---------------------------------------------------------------------------
# Pure-JAX reference (same math; conv operands cast to bf16 like the kernel).
# ---------------------------------------------------------------------------
def reference_forward(x_nchw, weights):
    x = jnp.transpose(x_nchw, (0, 2, 3, 1)).astype(jnp.float32)
    for w_hwio in weights:
        mean = jnp.mean(x, axis=(0, 1, 2), keepdims=True)
        var = jnp.mean(jnp.square(x - mean), axis=(0, 1, 2), keepdims=True)
        y = jnp.maximum((x - mean) * lax.rsqrt(var + EPS), 0.0)
        out = lax.conv_general_dilated(
            y.astype(jnp.bfloat16), w_hwio.astype(jnp.bfloat16),
            window_strides=(1, 1), padding="SAME",
            dimension_numbers=("NHWC", "HWIO", "NHWC"),
            preferred_element_type=jnp.float32)
        x = jnp.concatenate([out, x], axis=-1)
    return jnp.transpose(x, (0, 3, 1, 2))


if __name__ == "__main__":
    in_channel, growth_rate, num_layers = 4, 4, 3
    N, H, W = 2, 16, 16

    key = jax.random.PRNGKey(0)
    kx, kw = jax.random.split(key)
    x = jax.random.normal(kx, (N, in_channel, H, W), jnp.float32)
    weights = init_weights(kw, in_channel, growth_rate, num_layers)

    out = jax.block_until_ready(dense_block_forward(x, weights))

    expected_channels = in_channel + growth_rate * num_layers
    assert out.shape == (N, expected_channels, H, W), out.shape

    ref = jax.block_until_ready(reference_forward(x, weights))
    max_err = float(jnp.max(jnp.abs(out - ref)))
    assert jnp.allclose(out, ref, atol=2e-3, rtol=2e-3), max_err

    print("KERNEL_OK")
</pallas_src>

<mosaic_0001>
module attributes {stable_mosaic.version = 11 : i64} {
  func.func @_bn_relu_conv3x3_kernel(%arg0: i32, %arg1: i32, %arg2: memref<1x304x16xf32, #tpu.memory_space<vmem>>, %arg3: memref<1x16xf32, #tpu.memory_space<vmem>>, %arg4: memref<1x16xf32, #tpu.memory_space<vmem>>, %arg5: memref<9x16x4xbf16, #tpu.memory_space<vmem>>, %arg6: memref<1x256x4xf32, #tpu.memory_space<vmem>>, %arg7: memref<304x16xf32, #tpu.memory_space<vmem>>) attributes {dimension_semantics = [#tpu.dimension_semantics<parallel>, #tpu.dimension_semantics<arbitrary>], iteration_bounds = array<i64: 2, 1>, scalar_prefetch = 0 : i64, scratch_operands = 1 : i64, tpu.core_type = #tpu.core_type<tc>, window_params = [{transform_indices = @transform_0, window_bounds = array<i64: 1, 304, 16>}, {transform_indices = @transform_1, window_bounds = array<i64: 1, 16>}, {transform_indices = @transform_2, window_bounds = array<i64: 1, 16>}, {transform_indices = @transform_3, window_bounds = array<i64: 9, 16, 4>}, {transform_indices = @transform_4, window_bounds = array<i64: 1, 256, 4>}]} {
    %cst = arith.constant 0.000000e+00 : f32
    %0 = vector.broadcast %cst : f32 to vector<24x16xf32>
    %c0 = arith.constant 0 : index
    %c0_0 = arith.constant 0 : index
    %1 = vector.load %arg7[%c0, %c0_0] : memref<304x16xf32, #tpu.memory_space<vmem>>, vector<24x16xf32>
    tpu.vector_store %arg7[%c0, %c0_0], %0 {strides = array<i32>} : memref<304x16xf32, #tpu.memory_space<vmem>>, vector<24x16xf32>,
    %cst_1 = arith.constant 0.000000e+00 : f32
    %2 = vector.broadcast %cst_1 : f32 to vector<24x16xf32>
    %c280 = arith.constant 280 : index
    %c0_2 = arith.constant 0 : index
    %3 = vector.load %arg7[%c280, %c0_2] : memref<304x16xf32, #tpu.memory_space<vmem>>, vector<24x16xf32>
    tpu.vector_store %arg7[%c280, %c0_2], %2 {strides = array<i32>} : memref<304x16xf32, #tpu.memory_space<vmem>>, vector<24x16xf32>,
    %c0_3 = arith.constant 0 : index
    %c24 = arith.constant 24 : index
    %c0_4 = arith.constant 0 : index
    %4 = vector.load %arg2[%c0_3, %c24, %c0_4] : memref<1x304x16xf32, #tpu.memory_space<vmem>>, vector<1x256x16xf32>
    %5 = vector.shape_cast %4 : vector<1x256x16xf32> to vector<256x16xf32>
    %c0_5 = arith.constant 0 : index
    %c0_6 = arith.constant 0 : index
    %6 = vector.load %arg3[%c0_5, %c0_6] : memref<1x16xf32, #tpu.memory_space<vmem>>, vector<1x16xf32>
    %7 = vector.broadcast %6 : vector<1x16xf32> to vector<256x16xf32>
    %8 = arith.subf %5, %7 : vector<256x16xf32>
    %c0_7 = arith.constant 0 : index
    %c0_8 = arith.constant 0 : index
    %9 = vector.load %arg4[%c0_7, %c0_8] : memref<1x16xf32, #tpu.memory_space<vmem>>, vector<1x16xf32>
    %10 = vector.broadcast %9 : vector<1x16xf32> to vector<256x16xf32>
    %11 = arith.mulf %8, %10 : vector<256x16xf32>
    %cst_9 = arith.constant 0.000000e+00 : f32
    %12 = vector.broadcast %cst_9 : f32 to vector<256x16xf32>
    %13 = arith.maximumf %11, %12 : vector<256x16xf32>
    %c24_10 = arith.constant 24 : index
    %c0_11 = arith.constant 0 : index
    %14 = vector.load %arg7[%c24_10, %c0_11] : memref<304x16xf32, #tpu.memory_space<vmem>>, vector<256x16xf32>
    tpu.vector_store %arg7[%c24_10, %c0_11], %13 {strides = array<i32>} : memref<304x16xf32, #tpu.memory_space<vmem>>, vector<256x16xf32>,
    %15 = tpu.iota {dimensions = array<i32: 0>} : vector<256x1xi32>
    %c15_i32 = arith.constant 15 : i32
    %16 = vector.broadcast %c15_i32 : i32 to vector<256x1xi32>
    %17 = arith.andi %15, %16 : vector<256x1xi32>
    %c0_i32 = arith.constant 0 : i32
    %18 = vector.broadcast %c0_i32 : i32 to vector<256x1xi32>
    %19 = arith.cmpi ne, %17, %18 : vector<256x1xi32>
    %20 = arith.extui %19 : vector<256x1xi1> to vector<256x1xi32>
    %21 = arith.sitofp %20 : vector<256x1xi32> to vector<256x1xf32>
    %c15_i32_12 = arith.constant 15 : i32
    %22 = vector.broadcast %c15_i32_12 : i32 to vector<256x1xi32>
    %23 = arith.cmpi ne, %17, %22 : vector<256x1xi32>
    %24 = arith.extui %23 : vector<256x1xi1> to vector<256x1xi32>
    %25 = arith.sitofp %24 : vector<256x1xi32> to vector<256x1xf32>
    %cst_13 = arith.constant 0.000000e+00 : f32
    %26 = vector.broadcast %cst_13 : f32 to vector<256x4xf32>
    %c7 = arith.constant 7 : index
    %c0_14 = arith.constant 0 : index
    %27 = vector.load %arg7[%c7, %c0_14] : memref<304x16xf32, #tpu.memory_space<vmem>>, vector<256x16xf32>
    %28 = vector.broadcast %21 : vector<256x1xf32> to vector<256x16xf32>
    %29 = arith.mulf %27, %28 : vector<256x16xf32>
    %30 = arith.truncf %29 : vector<256x16xf32> to vector<256x16xbf16>
    %c0_15 = arith.constant 0 : index
    %c0_16 = arith.constant 0 : index
    %c0_17 = arith.constant 0 : index
    %31 = vector.load %arg5[%c0_15, %c0_16, %c0_17] : memref<9x16x4xbf16, #tpu.memory_space<vmem>>, vector<1x16x4xbf16>
    %32 = vector.shape_cast %31 : vector<1x16x4xbf16> to vector<16x4xbf16>
    %cst_18 = arith.constant dense<0.000000e+00> : vector<256x4xf32>
    %33 = tpu.matmul %30, %32, %cst_18 {dimension_numbers = #tpu.dot_dimension_numbers<[1], [0], [0], [1], [0, 0, 1, 1], [], []>} : vector<256x16xbf16>, vector<16x4xbf16>, vector<256x4xf32> -> vector<256x4xf32>
    %34 = arith.addf %26, %33 : vector<256x4xf32>
    %c8 = arith.constant 8 : index
    %c0_19 = arith.constant 0 : index
    %35 = vector.load %arg7[%c8, %c0_19] : memref<304x16xf32, #tpu.memory_space<vmem>>, vector<256x16xf32>
    %36 = arith.truncf %35 : vector<256x16xf32> to vector<256x16xbf16>
    %c1 = arith.constant 1 : index
    %c0_20 = arith.constant 0 : index
    %c0_21 = arith.constant 0 : index
    %37 = vector.load %arg5[%c1, %c0_20, %c0_21] : memref<9x16x4xbf16, #tpu.memory_space<vmem>>, vector<1x16x4xbf16>
    %38 = vector.shape_cast %37 : vector<1x16x4xbf16> to vector<16x4xbf16>
    %cst_22 = arith.constant dense<0.000000e+00> : vector<256x4xf32>
    %39 = tpu.matmul %36, %38, %cst_22 {dimension_numbers = #tpu.dot_dimension_numbers<[1], [0], [0], [1], [0, 0, 1, 1], [], []>} : vector<256x16xbf16>, vector<16x4xbf16>, vector<256x4xf32> -> vector<256x4xf32>
    %40 = arith.addf %34, %39 : vector<256x4xf32>
    %c9 = arith.constant 9 : index
    %c0_23 = arith.constant 0 : index
    %41 = vector.load %arg7[%c9, %c0_23] : memref<304x16xf32, #tpu.memory_space<vmem>>, vector<256x16xf32>
    %42 = vector.broadcast %25 : vector<256x1xf32> to vector<256x16xf32>
    %43 = arith.mulf %41, %42 : vector<256x16xf32>
    %44 = arith.truncf %43 : vector<256x16xf32> to vector<256x16xbf16>
    %c2 = arith.constant 2 : index
    %c0_24 = arith.constant 0 : index
    %c0_25 = arith.constant 0 : index
    %45 = vector.load %arg5[%c2, %c0_24, %c0_25] : memref<9x16x4xbf16, #tpu.memory_space<vmem>>, vector<1x16x4xbf16>
    %46 = vector.shape_cast %45 : vector<1x16x4xbf16> to vector<16x4xbf16>
    %cst_26 = arith.constant dense<0.000000e+00> : vector<256x4xf32>
    %47 = tpu.matmul %44, %46, %cst_26 {dimension_numbers = #tpu.dot_dimension_numbers<[1], [0], [0], [1], [0, 0, 1, 1], [], []>} : vector<256x16xbf16>, vector<16x4xbf16>, vector<256x4xf32> -> vector<256x4xf32>
    %48 = arith.addf %40, %47 : vector<256x4xf32>
    %c23 = arith.constant 23 : index
    %c0_27 = arith.constant 0 : index
    %49 = vector.load %arg7[%c23, %c0_27] : memref<304x16xf32, #tpu.memory_space<vmem>>, vector<256x16xf32>
    %50 = vector.broadcast %21 : vector<256x1xf32> to vector<256x16xf32>
    %51 = arith.mulf %49, %50 : vector<256x16xf32>
    %52 = arith.truncf %51 : vector<256x16xf32> to vector<256x16xbf16>
    %c3 = arith.constant 3 : index
    %c0_28 = arith.constant 0 : index
    %c0_29 = arith.constant 0 : index
    %53 = vector.load %arg5[%c3, %c0_28, %c0_29] : memref<9x16x4xbf16, #tpu.memory_space<vmem>>, vector<1x16x4xbf16>
    %54 = vector.shape_cast %53 : vector<1x16x4xbf16> to vector<16x4xbf16>
    %cst_30 = arith.constant dense<0.000000e+00> : vector<256x4xf32>
    %55 = tpu.matmul %52, %54, %cst_30 {dimension_numbers = #tpu.dot_dimension_numbers<[1], [0], [0], [1], [0, 0, 1, 1], [], []>} : vector<256x16xbf16>, vector<16x4xbf16>, vector<256x4xf32> -> vector<256x4xf32>
    %56 = arith.addf %48, %55 : vector<256x4xf32>
    %c24_31 = arith.constant 24 : index
    %c0_32 = arith.constant 0 : index
    %57 = vector.load %arg7[%c24_31, %c0_32] : memref<304x16xf32, #tpu.memory_space<vmem>>, vector<256x16xf32>
    %58 = arith.truncf %57 : vector<256x16xf32> to vector<256x16xbf16>
    %c4 = arith.constant 4 : index
    %c0_33 = arith.constant 0 : index
    %c0_34 = arith.constant 0 : index
    %59 = vector.load %arg5[%c4, %c0_33, %c0_34] : memref<9x16x4xbf16, #tpu.memory_space<vmem>>, vector<1x16x4xbf16>
    %60 = vector.shape_cast %59 : vector<1x16x4xbf16> to vector<16x4xbf16>
    %cst_35 = arith.constant dense<0.000000e+00> : vector<256x4xf32>
    %61 = tpu.matmul %58, %60, %cst_35 {dimension_numbers = #tpu.dot_dimension_numbers<[1], [0], [0], [1], [0, 0, 1, 1], [], []>} : vector<256x16xbf16>, vector<16x4xbf16>, vector<256x4xf32> -> vector<256x4xf32>
    %62 = arith.addf %56, %61 : vector<256x4xf32>
    %c25 = arith.constant 25 : index
    %c0_36 = arith.constant 0 : index
    %63 = vector.load %arg7[%c25, %c0_36] : memref<304x16xf32, #tpu.memory_space<vmem>>, vector<256x16xf32>
    %64 = vector.broadcast %25 : vector<256x1xf32> to vector<256x16xf32>
    %65 = arith.mulf %63, %64 : vector<256x16xf32>
    %66 = arith.truncf %65 : vector<256x16xf32> to vector<256x16xbf16>
    %c5 = arith.constant 5 : index
    %c0_37 = arith.constant 0 : index
    %c0_38 = arith.constant 0 : index
    %67 = vector.load %arg5[%c5, %c0_37, %c0_38] : memref<9x16x4xbf16, #tpu.memory_space<vmem>>, vector<1x16x4xbf16>
    %68 = vector.shape_cast %67 : vector<1x16x4xbf16> to vector<16x4xbf16>
    %cst_39 = arith.constant dense<0.000000e+00> : vector<256x4xf32>
    %69 = tpu.matmul %66, %68, %cst_39 {dimension_numbers = #tpu.dot_dimension_numbers<[1], [0], [0], [1], [0, 0, 1, 1], [], []>} : vector<256x16xbf16>, vector<16x4xbf16>, vector<256x4xf32> -> vector<256x4xf32>
    %70 = arith.addf %62, %69 : vector<256x4xf32>
    %c39 = arith.constant 39 : index
    %c0_40 = arith.constant 0 : index
    %71 = vector.load %arg7[%c39, %c0_40] : memref<304x16xf32, #tpu.memory_space<vmem>>, vector<256x16xf32>
    %72 = vector.broadcast %21 : vector<256x1xf32> to vector<256x16xf32>
    %73 = arith.mulf %71, %72 : vector<256x16xf32>
    %74 = arith.truncf %73 : vector<256x16xf32> to vector<256x16xbf16>
    %c6 = arith.constant 6 : index
    %c0_41 = arith.constant 0 : index
    %c0_42 = arith.constant 0 : index
    %75 = vector.load %arg5[%c6, %c0_41, %c0_42] : memref<9x16x4xbf16, #tpu.memory_space<vmem>>, vector<1x16x4xbf16>
    %76 = vector.shape_cast %75 : vector<1x16x4xbf16> to vector<16x4xbf16>
    %cst_43 = arith.constant dense<0.000000e+00> : vector<256x4xf32>
    %77 = tpu.matmul %74, %76, %cst_43 {dimension_numbers = #tpu.dot_dimension_numbers<[1], [0], [0], [1], [0, 0, 1, 1], [], []>} : vector<256x16xbf16>, vector<16x4xbf16>, vector<256x4xf32> -> vector<256x4xf32>
    %78 = arith.addf %70, %77 : vector<256x4xf32>
    %c40 = arith.constant 40 : index
    %c0_44 = arith.constant 0 : index
    %79 = vector.load %arg7[%c40, %c0_44] : memref<304x16xf32, #tpu.memory_space<vmem>>, vector<256x16xf32>
    %80 = arith.truncf %79 : vector<256x16xf32> to vector<256x16xbf16>
    %c7_45 = arith.constant 7 : index
    %c0_46 = arith.constant 0 : index
    %c0_47 = arith.constant 0 : index
    %81 = vector.load %arg5[%c7_45, %c0_46, %c0_47] : memref<9x16x4xbf16, #tpu.memory_space<vmem>>, vector<1x16x4xbf16>
    %82 = vector.shape_cast %81 : vector<1x16x4xbf16> to vector<16x4xbf16>
    %cst_48 = arith.constant dense<0.000000e+00> : vector<256x4xf32>
    %83 = tpu.matmul %80, %82, %cst_48 {dimension_numbers = #tpu.dot_dimension_numbers<[1], [0], [0], [1], [0, 0, 1, 1], [], []>} : vector<256x16xbf16>, vector<16x4xbf16>, vector<256x4xf32> -> vector<256x4xf32>
    %84 = arith.addf %78, %83 : vector<256x4xf32>
    %c41 = arith.constant 41 : index
    %c0_49 = arith.constant 0 : index
    %85 = vector.load %arg7[%c41, %c0_49] : memref<304x16xf32, #tpu.memory_space<vmem>>, vector<256x16xf32>
    %86 = vector.broadcast %25 : vector<256x1xf32> to vector<256x16xf32>
    %87 = arith.mulf %85, %86 : vector<256x16xf32>
    %88 = arith.truncf %87 : vector<256x16xf32> to vector<256x16xbf16>
    %c8_50 = arith.constant 8 : index
    %c0_51 = arith.constant 0 : index
    %c0_52 = arith.constant 0 : index
    %89 = vector.load %arg5[%c8_50, %c0_51, %c0_52] : memref<9x16x4xbf16, #tpu.memory_space<vmem>>, vector<1x16x4xbf16>
    %90 = vector.shape_cast %89 : vector<1x16x4xbf16> to vector<16x4xbf16>
    %cst_53 = arith.constant dense<0.000000e+00> : vector<256x4xf32>
    %91 = tpu.matmul %88, %90, %cst_53 {dimension_numbers = #tpu.dot_dimension_numbers<[1], [0], [0], [1], [0, 0, 1, 1], [], []>} : vector<256x16xbf16>, vector<16x4xbf16>, vector<256x4xf32> -> vector<256x4xf32>
    %92 = arith.addf %84, %91 : vector<256x4xf32>
    %c0_i32_54 = arith.constant 0 : i32
    %93 = arith.cmpi eq, %arg1, %c0_i32_54 : i32
    %94 = arith.extui %93 : i1 to i32
    %c0_i32_55 = arith.constant 0 : i32
    %95 = arith.cmpi ne, %94, %c0_i32_55 : i32
    scf.if %95 {
      %cst_62 = arith.constant 0.000000e+00 : f32
      %102 = vector.broadcast %cst_62 : f32 to vector<256x4xf32>
      %c0_63 = arith.constant 0 : index
      %c0_64 = arith.constant 0 : index
      %c0_65 = arith.constant 0 : index
      %103 = vector.load %arg6[%c0_63, %c0_64, %c0_65] : memref<1x256x4xf32, #tpu.memory_space<vmem>>, vector<1x256x4xf32>
      %104 = vector.shape_cast %103 : vector<1x256x4xf32> to vector<256x4xf32>
      %105 = vector.shape_cast %102 : vector<256x4xf32> to vector<1x256x4xf32>
      tpu.vector_store %arg6[%c0_63, %c0_64, %c0_65], %105 {strides = array<i32>} : memref<1x256x4xf32, #tpu.memory_space<vmem>>, vector<1x256x4xf32>,
    } else {
    }
    %c0_56 = arith.constant 0 : index
    %c0_57 = arith.constant 0 : index
    %c0_58 = arith.constant 0 : index
    %96 = vector.load %arg6[%c0_56, %c0_57, %c0_58] : memref<1x256x4xf32, #tpu.memory_space<vmem>>, vector<1x256x4xf32>
    %97 = vector.shape_cast %96 : vector<1x256x4xf32> to vector<256x4xf32>
    %98 = arith.addf %97, %92 : vector<256x4xf32>
    %c0_59 = arith.constant 0 : index
    %c0_60 = arith.constant 0 : index
    %c0_61 = arith.constant 0 : index
    %99 = vector.load %arg6[%c0_59, %c0_60, %c0_61] : memref<1x256x4xf32, #tpu.memory_space<vmem>>, vector<1x256x4xf32>
    %100 = vector.shape_cast %99 : vector<1x256x4xf32> to vector<256x4xf32>
    %101 = vector.shape_cast %98 : vector<256x4xf32> to vector<1x256x4xf32>
    tpu.vector_store %arg6[%c0_59, %c0_60, %c0_61], %101 {strides = array<i32>} : memref<1x256x4xf32, #tpu.memory_space<vmem>>, vector<1x256x4xf32>,
    return
  }
  func.func @transform_0(%arg0: i32, %arg1: i32) -> (i32, i32, i32) {
    %c0_i32 = arith.constant 0 : i32
    %c0_i32_0 = arith.constant 0 : i32
    return %arg0, %c0_i32, %arg1 : i32, i32, i32
  }
  func.func @transform_1(%arg0: i32, %arg1: i32) -> (i32, i32) {
    %c0_i32 = arith.constant 0 : i32
    %c0_i32_0 = arith.constant 0 : i32
    return %c0_i32, %arg1 : i32, i32
  }
  func.func @transform_2(%arg0: i32, %arg1: i32) -> (i32, i32) {
    %c0_i32 = arith.constant 0 : i32
    %c0_i32_0 = arith.constant 0 : i32
    return %c0_i32, %arg1 : i32, i32
  }
  func.func @transform_3(%arg0: i32, %arg1: i32) -> (i32, i32, i32) {
    %c0_i32 = arith.constant 0 : i32
    %c0_i32_0 = arith.constant 0 : i32
    %c0_i32_1 = arith.constant 0 : i32
    return %c0_i32, %arg1, %c0_i32_0 : i32, i32, i32
  }
  func.func @transform_4(%arg0: i32, %arg1: i32) -> (i32, i32, i32) {
    %c0_i32 = arith.constant 0 : i32
    %c0_i32_0 = arith.constant 0 : i32
    %c0_i32_1 = arith.constant 0 : i32
    return %arg0, %c0_i32, %c0_i32_0 : i32, i32, i32
  }
}

</mosaic_0001>

<llo_original>
// kernel: dense_block_forward.3
$region0: #{dense_block_forward.3}
  #allocation0 [shape = 'u32[]', space=smem, size = 0x4, offset = 0x4, fixed_abs, tag = 'smem constant byte address 0x4 - core index']
  #allocation1 [shape = 'u32[72,128]{1,0:T(1,128)}', space=vmem, size = 0x9000, scoped, tag = 'internal scratch']
  #allocation2 [shape = 'f32[304,16]{1,0:T(8,128)}', space=vmem, size = 0x26000, scoped, tag = 'scratch operand']
  %s0 = inlined_call_operand.vmem [shape: f32[2,304,16], index: 0, kind: input, shape index: {}]
  %s1 = inlined_call_operand.vmem [shape: f32[1,16], index: 1, kind: input, shape index: {}]
  %s2 = inlined_call_operand.vmem [shape: f32[1,16], index: 2, kind: input, shape index: {}]
  %s3 = inlined_call_operand.vmem [shape: bf16[9,16,4], index: 3, kind: input, shape index: {}]
  %s4 = inlined_call_operand.vmem [shape: f32[2,256,4], index: 4, kind: output, shape index: {}]
  %s5 = sld [smem:[#allocation0]]
  $region53: #{dense_block_forward.3} parent=0
    _
  %s7 = ssub.s32 1, %s5
  %s8 = scalar_select 0, %s7, %s5
  loop: start=0, step=1, limit=4
  $region2: #{dense_block_forward.3} parent=0 // loop_pre_header
    _
  $region3: #{dense_block_forward.3} parent=0 // loop_header
    %s10 = sphi 0, %s14
    %p11 = scmp.ge.s32.totalorder %s10, 4
    %s17 = sphi 0, %s29
    %s18 = sphi 0, %s25
    %s19 = sphi 0, %s17
    %s20 = sphi 0, %s18
    %s21 = sphi 0, %s19
    %s22 = sphi 0, %s20
    %s34 = sphi 0, %s36
    %s37 = sphi 0, %s34
    %s38 = sphi 0, %s37
    %s54 = sphi 0, %s38
    %s60 = sphi 0, %s62
    %s63 = sphi 0, %s60
    %s64 = sphi 0, %s63
    %s80 = sphi 0, %s64
    %s86 = sphi 0, %s88
    %s89 = sphi 0, %s86
    %s90 = sphi 0, %s89
    %s106 = sphi 0, %s90
    %s112 = sphi 0, %s114
    %s115 = sphi 0, %s112
    %s116 = sphi 0, %s115
    %s132 = sphi 0, %s116
    %s138 = sphi 0, %s140
    %s141 = sphi 0, %s138
    %s142 = sphi 0, %s141
    %s158 = sphi 0, %s142
  $region4: #{dense_block_forward.3} parent=0 // loop_header_branch
    %13 = sbr.rel (%p11) target = $region8
  $region5: #{dense_block_forward.3} parent=0 // loop_body
    %s15 = ssub.s32 %s10, 1
    %s16 = ssub.s32 %s10, 2
    %s23 = sadd.s32 1, %s18
    %p24 = scmp.ge.s32.totalorder %s23, 1
    %s25 = scalar_select %p24, 0, %s23
    %s26 = sadd.s32 1, %s17
    %s27 = scalar_select %p24, %s26, %s17
    %p28 = scmp.ge.s32.totalorder %s27, 2
    %s29 = scalar_select %p28, 0, %s27
    %s30 = ssub.s32 %s17, %s29
    %s31 = ssub.s32 %s18, %s25
    %s32 = sor.u32 %s30, %s31
    %p33 = scmp.eq.s32.totalorder %s32, 0
    %s35 = sadd.s32 %s34, 1
    %s36 = scalar_select %p33, %s34, %s35
    %p39 = pneg %p33
    %p40 = scmp.eq.s32.totalorder %s10, 1
    %p41 = por %p39, %p40
    %p42 = scmp.ne.s32.totalorder %s34, %s37
    %p43 = scmp.eq.s32.totalorder %s10, 0
    %p44 = por %p42, %p43
    %p45 = scmp.ne.s32.totalorder %s34, %s37
    %p46 = scmp.eq.s32.totalorder %s15, 1
    %p47 = por %p45, %p46
    %p48 = scmp.ne.s32.totalorder %s37, %s38
    %p49 = scmp.eq.s32.totalorder %s15, 0
    %p50 = por %p48, %p49
    %p51 = scmp.ne.s32.totalorder %s37, %s38
    %p52 = scmp.eq.s32.totalorder %s16, 1
    %p53 = por %p51, %p52
    %p55 = scmp.ne.s32.totalorder %s38, %s54
    %p56 = scmp.eq.s32.totalorder %s16, 0
    %p57 = por %p55, %p56
    %s58 = ssub.s32 %s18, %s25
    %p59 = scmp.eq.s32.totalorder %s58, 0
    %s61 = sadd.s32 %s60, 1
    %s62 = scalar_select %p59, %s60, %s61
    %p65 = pneg %p59
    %p66 = scmp.eq.s32.totalorder %s10, 1
    %p67 = por %p65, %p66
    %p68 = scmp.ne.s32.totalorder %s60, %s63
    %p69 = scmp.eq.s32.totalorder %s10, 0
    %p70 = por %p68, %p69
    %p71 = scmp.ne.s32.totalorder %s60, %s63
    %p72 = scmp.eq.s32.totalorder %s15, 1
    %p73 = por %p71, %p72
    %p74 = scmp.ne.s32.totalorder %s63, %s64
    %p75 = scmp.eq.s32.totalorder %s15, 0
    %p76 = por %p74, %p75
    %p77 = scmp.ne.s32.totalorder %s63, %s64
    %p78 = scmp.eq.s32.totalorder %s16, 1
    %p79 = por %p77, %p78
    %p81 = scmp.ne.s32.totalorder %s64, %s80
    %p82 = scmp.eq.s32.totalorder %s16, 0
    %p83 = por %p81, %p82
    %s84 = ssub.s32 %s18, %s25
    %p85 = scmp.eq.s32.totalorder %s84, 0
    %s87 = sadd.s32 %s86, 1
    %s88 = scalar_select %p85, %s86, %s87
    %p91 = pneg %p85
    %p92 = scmp.eq.s32.totalorder %s10, 1
    %p93 = por %p91, %p92
    %p94 = scmp.ne.s32.totalorder %s86, %s89
    %p95 = scmp.eq.s32.totalorder %s10, 0
    %p96 = por %p94, %p95
    %p97 = scmp.ne.s32.totalorder %s86, %s89
    %p98 = scmp.eq.s32.totalorder %s15, 1
    %p99 = por %p97, %p98
    %p100 = scmp.ne.s32.totalorder %s89, %s90
    %p101 = scmp.eq.s32.totalorder %s15, 0
    %p102 = por %p100, %p101
    %p103 = scmp.ne.s32.totalorder %s89, %s90
    %p104 = scmp.eq.s32.totalorder %s16, 1
    %p105 = por %p103, %p104
    %p107 = scmp.ne.s32.totalorder %s90, %s106
    %p108 = scmp.eq.s32.totalorder %s16, 0
    %p109 = por %p107, %p108
    %s110 = ssub.s32 %s18, %s25
    %p111 = scmp.eq.s32.totalorder %s110, 0
    %s113 = sadd.s32 %s112, 1
    %s114 = scalar_select %p111, %s112, %s113
    %p117 = pneg %p111
    %p118 = scmp.eq.s32.totalorder %s10, 1
    %p119 = por %p117, %p118
    %p120 = scmp.ne.s32.totalorder %s112, %s115
    %p121 = scmp.eq.s32.totalorder %s10, 0
    %p122 = por %p120, %p121
    %p123 = scmp.ne.s32.totalorder %s112, %s115
    %p124 = scmp.eq.s32.totalorder %s15, 1
    %p125 = por %p123, %p124
    %p126 = scmp.ne.s32.totalorder %s115, %s116
    %p127 = scmp.eq.s32.totalorder %s15, 0
    %p128 = por %p126, %p127
    %p129 = scmp.ne.s32.totalorder %s115, %s116
    %p130 = scmp.eq.s32.totalorder %s16, 1
    %p131 = por %p129, %p130
    %p133 = scmp.ne.s32.totalorder %s116, %s132
    %p134 = scmp.eq.s32.totalorder %s16, 0
    %p135 = por %p133, %p134
    %s136 = ssub.s32 %s17, %s29
    %p137 = scmp.eq.s32.totalorder %s136, 0
    %s139 = sadd.s32 %s138, 1
    %s140 = scalar_select %p137, %s138, %s139
    %p143 = pneg %p137
    %p144 = scmp.eq.s32.totalorder %s10, 1
    %p145 = por %p143, %p144
    %p146 = scmp.ne.s32.totalorder %s138, %s141
    %p147 = scmp.eq.s32.totalorder %s10, 0
    %p148 = por %p146, %p147
    %p149 = scmp.ne.s32.totalorder %s138, %s141
    %p150 = scmp.eq.s32.totalorder %s15, 1
    %p151 = por %p149, %p150
    %p152 = scmp.ne.s32.totalorder %s141, %s142
    %p153 = scmp.eq.s32.totalorder %s15, 0
    %p154 = por %p152, %p153
    %p155 = scmp.ne.s32.totalorder %s141, %s142
    %p156 = scmp.eq.s32.totalorder %s16, 1
    %p157 = por %p155, %p156
    %p159 = scmp.ne.s32.totalorder %s142, %s158
    %p160 = scmp.eq.s32.totalorder %s16, 0
    %p161 = por %p159, %p160
    %p162 = scmp.le.s32.totalorder 1, %s10
    %p163 = scmp.lt.s32.totalorder %s10, 3
    %p164 = pnand %p162, %p163
    %p165 = pneg %p164
    // Predicated region
    $region9: #{dense_block_forward.3} parent=5 // pred_check
      _
    $region10: #{dense_block_forward.3} parent=5 // pred_check_branch
      %167 = sbr.rel (%p164) target = $region12
    $region11: #{dense_block_forward.3} parent=5 // pred_region
      %s168 = ssub.s32 %s10, 1
      // Predicated region
      $region13: #{dense_block_forward.3} parent=11 // pred_check
        %p169 = pneg %p76
      $region14: #{dense_block_forward.3} parent=11 // pred_check_branch
        %171 = sbr.rel (%p169) target = $region16
      $region15: #{dense_block_forward.3} parent=11 // pred_region
        %p172 = scmp.lt.s32.totalorder %s20, 0
        %s173 = scalar_select %p172, %s20, 0
        %s174 = scalar_lea.vmem %s1, %s173
      $region16: #{dense_block_forward.3} parent=11 // pred_fallthru
        _
      // Predicated region
      $region17: #{dense_block_forward.3} parent=11 // pred_check
        %p175 = pneg %p102
      $region18: #{dense_block_forward.3} parent=11 // pred_check_branch
        %177 = sbr.rel (%p175) target = $region20
      $region19: #{dense_block_forward.3} parent=11 // pred_region
        %p178 = scmp.lt.s32.totalorder %s20, 0
        %s179 = scalar_select %p178, %s20, 0
        %s180 = scalar_lea.vmem %s2, %s179
      $region20: #{dense_block_forward.3} parent=11 // pred_fallthru
        _
      // Predicated region
      $region21: #{dense_block_forward.3} parent=11 // pred_check
        %p181 = pneg %p128
      $region22: #{dense_block_forward.3} parent=11 // pred_check_branch
        %183 = sbr.rel (%p181) target = $region24
      $region23: #{dense_block_forward.3} parent=11 // pred_region
        %s184 = smul.u32 2, %s20
        %p185 = scmp.lt.s32.totalorder %s184, 1
        %s186 = scalar_select %p185, %s184, 1
        %s187 = smul.addr %s186, 4
        %s188 = scalar_lea.vmem %s3, %s187
        %s189 = smul.u32 2, %s20
      $region24: #{dense_block_forward.3} parent=11 // pred_fallthru
        _
    $region12: #{dense_block_forward.3} parent=5 // pred_fallthru
      _
    %p190 = scmp.lt.s32.totalorder %s10, 2
    // Predicated region
    $region25: #{dense_block_forward.3} parent=5 // pred_check
      %p191 = pneg %p190
    $region26: #{dense_block_forward.3} parent=5 // pred_check_branch
      %193 = sbr.rel (%p191) target = $region28
    $region27: #{dense_block_forward.3} parent=5 // pred_region
      // Predicated region
      $region29: #{dense_block_forward.3} parent=27 // pred_check
        %p194 = pneg %p44
      $region30: #{dense_block_forward.3} parent=27 // pred_check_branch
        %196 = sbr.rel (%p194) target = $region32
      $region31: #{dense_block_forward.3} parent=27 // pred_region
        %p197 = scmp.lt.s32.totalorder %s17, 1
        %s198 = scalar_select %p197, %s17, 1
        %p199 = scmp.lt.s32.totalorder %s18, 0
        %s200 = scalar_select %p199, %s18, 0
        %s201 = smul.addr %s198, 38
        %s202 = sadd.s32 %s200, %s201
        %s203 = smul.addr %s202, 8
        %s204 = scalar_lea.vmem %s0, %s203
      $region32: #{dense_block_forward.3} parent=27 // pred_fallthru
        _
    $region28: #{dense_block_forward.3} parent=5 // pred_fallthru
      _
    %p205 = scmp.le.s32.totalorder 1, %s10
    %p206 = scmp.lt.s32.totalorder %s10, 3
    %p207 = pnand %p205, %p206
    %p208 = pneg %p207
    // Predicated region
    $region33: #{dense_block_forward.3} parent=5 // pred_check
      _
    $region34: #{dense_block_forward.3} parent=5 // pred_check_branch
      %210 = sbr.rel (%p207) target = $region36
    $region35: #{dense_block_forward.3} parent=5 // pred_region
      %s211 = ssub.s32 %s10, 1
      %p212 = scmp.lt.s32.totalorder %s19, 1
      %s213 = scalar_select %p212, %s19, 1
      %p214 = scmp.lt.s32.totalorder %s20, 0
      %s215 = scalar_select %p214, %s20, 0
      %s216 = smul.addr %s213, 38
      %s217 = sadd.s32 %s215, %s216
      %s218 = smul.addr %s217, 8
      %s219 = scalar_lea.vmem %s0, %s218
      %p220 = pneg %p50
      %p221 = pneg %p47
      %p222 = scmp.lt.s32.totalorder %s20, 0
      %s223 = scalar_select %p222, %s20, 0
      %s224 = scalar_lea.vmem %s1, %s223
      %p225 = pneg %p76
      %p226 = pneg %p73
      %p227 = scmp.lt.s32.totalorder %s20, 0
      %s228 = scalar_select %p227, %s20, 0
      %s229 = scalar_lea.vmem %s2, %s228
      %p230 = pneg %p102
      %p231 = pneg %p99
      %s232 = smul.u32 2, %s20
      %p233 = scmp.lt.s32.totalorder %s232, 1
      %s234 = scalar_select %p233, %s232, 1
      %s235 = smul.addr %s234, 4
      %s236 = scalar_lea.vmem %s3, %s235
      %p237 = pneg %p128
      %p238 = pneg %p125
      %p239 = pneg %p154
      %p240 = pneg %p151
      %p241 = scmp.lt.s32.totalorder %s19, 1
      %s242 = scalar_select %p241, %s19, 1
      %s243 = smul.addr %s242, 32
      %s244 = smul.addr %s243, 8
      %s245 = scalar_lea.vmem %s4, %s244
      %p246 = scmp.lt.s32.totalorder %s19, 1
      %s247 = scalar_select %p246, %s19, 1
      %p248 = scmp.lt.s32.totalorder %s20, 0
      %s249 = scalar_select %p248, %s20, 0
      %s250 = smul.addr %s247, 38
      %s251 = sadd.s32 %s249, %s250
      %s252 = smul.addr %s251, 8
      %s253 = scalar_lea.vmem %s0, %s252
      %p254 = scmp.lt.s32.totalorder %s20, 0
      %s255 = scalar_select %p254, %s20, 0
      %s256 = scalar_lea.vmem %s1, %s255
      %p257 = scmp.lt.s32.totalorder %s20, 0
      %s258 = scalar_select %p257, %s20, 0
      %s259 = scalar_lea.vmem %s2, %s258
      %s260 = smul.u32 2, %s20
      %p261 = scmp.lt.s32.totalorder %s260, 1
      %s262 = scalar_select %p261, %s260, 1
      %s263 = smul.addr %s262, 4
      %s264 = scalar_lea.vmem %s3, %s263
      %s265 = smul.u32 2, %s20
      %p266 = scmp.lt.s32.totalorder %s19, 1
      %s267 = scalar_select %p266, %s19, 1
      %s268 = smul.addr %s267, 32
      %s269 = smul.addr %s268, 8
      %s270 = scalar_lea.vmem %s4, %s269
      %vm272 = vcmask 130048
      %273 = vst.msk [vmem:[#allocation2] sm:$0xff] %vm272, 0.0
      %274 = vst.msk [vmem:[#allocation2 + $0x8] sm:$0xff] %vm272, 0.0
      %275 = vst.msk [vmem:[#allocation2 + $0x10] sm:$0xff] %vm272, 0.0
      %276 = vst.msk [vmem:[#allocation2 + $0x118] sm:$0xff] %vm272, 0.0
      %277 = vst.msk [vmem:[#allocation2 + $0x120] sm:$0xff] %vm272, 0.0
      %278 = vst.msk [vmem:[#allocation2 + $0x128] sm:$0xff] %vm272, 0.0
      %v279 = vld [vmem:[%s253 + $0x18] sm:$0xff]
      %v280 = vld [vmem:[%s253 + $0x20] sm:$0xff]
      %v281 = vld [vmem:[%s253 + $0x28] sm:$0xff]
      %v282 = vld [vmem:[%s253 + $0x30] sm:$0xff]
      %v283 = vld [vmem:[%s253 + $0x38] sm:$0xff]
      %v284 = vld [vmem:[%s253 + $0x40] sm:$0xff]
      %v285 = vld [vmem:[%s253 + $0x48] sm:$0xff]
      %v286 = vld [vmem:[%s253 + $0x50] sm:$0xff]
      %v287 = vld [vmem:[%s253 + $0x58] sm:$0xff]
      %v288 = vld [vmem:[%s253 + $0x60] sm:$0xff]
      %v289 = vld [vmem:[%s253 + $0x68] sm:$0xff]
      %v290 = vld [vmem:[%s253 + $0x70] sm:$0xff]
      %v291 = vld [vmem:[%s253 + $0x78] sm:$0xff]
      %v292 = vld [vmem:[%s253 + $0x80] sm:$0xff]
      %v293 = vld [vmem:[%s253 + $0x88] sm:$0xff]
      %v294 = vld [vmem:[%s253 + $0x90] sm:$0xff]
      %v295 = vld [vmem:[%s253 + $0x98] sm:$0xff]
      %v296 = vld [vmem:[%s253 + $0xa0] sm:$0xff]
      %v297 = vld [vmem:[%s253 + $0xa8] sm:$0xff]
      %v298 = vld [vmem:[%s253 + $0xb0] sm:$0xff]
      %v299 = vld [vmem:[%s253 + $0xb8] sm:$0xff]
      %v300 = vld [vmem:[%s253 + $0xc0] sm:$0xff]
      %v301 = vld [vmem:[%s253 + $0xc8] sm:$0xff]
      %v302 = vld [vmem:[%s253 + $0xd0] sm:$0xff]
      %v303 = vld [vmem:[%s253 + $0xd8] sm:$0xff]
      %v304 = vld [vmem:[%s253 + $0xe0] sm:$0xff]
      %v305 = vld [vmem:[%s253 + $0xe8] sm:$0xff]
      %v306 = vld [vmem:[%s253 + $0xf0] sm:$0xff]
      %v307 = vld [vmem:[%s253 + $0xf8] sm:$0xff]
      %v308 = vld [vmem:[%s253 + $0x100] sm:$0xff]
      %v309 = vld [vmem:[%s253 + $0x108] sm:$0xff]
      %v310 = vld [vmem:[%s253 + $0x110] sm:$0xff]
      %v311 = vld [vmem:[%s256] sm:$0x1]
      %v313 = vperm.slane %v311, 0
      %v315 = vsub.f32 %v279, %v313
      %v316 = vsub.f32 %v280, %v313
      %v317 = vsub.f32 %v281, %v313
      %v318 = vsub.f32 %v282, %v313
      %v319 = vsub.f32 %v283, %v313
      %v320 = vsub.f32 %v284, %v313
      %v321 = vsub.f32 %v285, %v313
      %v322 = vsub.f32 %v286, %v313
      %v323 = vsub.f32 %v287, %v313
      %v324 = vsub.f32 %v288, %v313
      %v325 = vsub.f32 %v289, %v313
      %v326 = vsub.f32 %v290, %v313
      %v327 = vsub.f32 %v291, %v313
      %v328 = vsub.f32 %v292, %v313
      %v329 = vsub.f32 %v293, %v313
      %v330 = vsub.f32 %v294, %v313
      %v331 = vsub.f32 %v295, %v313
      %v332 = vsub.f32 %v296, %v313
      %v333 = vsub.f32 %v297, %v313
      %v334 = vsub.f32 %v298, %v313
      %v335 = vsub.f32 %v299, %v313
      %v336 = vsub.f32 %v300, %v313
      %v337 = vsub.f32 %v301, %v313
      %v338 = vsub.f32 %v302, %v313
      %v339 = vsub.f32 %v303, %v313
      %v340 = vsub.f32 %v304, %v313
      %v341 = vsub.f32 %v305, %v313
      %v342 = vsub.f32 %v306, %v313
      %v343 = vsub.f32 %v307, %v313
      %v344 = vsub.f32 %v308, %v313
      %v345 = vsub.f32 %v309, %v313
      %v346 = vsub.f32 %v310, %v313
      %v347 = vld [vmem:[%s259] sm:$0x1]
      %v349 = vperm.slane %v347, 0
      %v351 = vmul.f32 %v315, %v349
      %v352 = vmul.f32 %v316, %v349
      %v353 = vmul.f32 %v317, %v349
      %v354 = vmul.f32 %v318, %v349
      %v355 = vmul.f32 %v319, %v349
      %v356 = vmul.f32 %v320, %v349
      %v357 = vmul.f32 %v321, %v349
      %v358 = vmul.f32 %v322, %v349
      %v359 = vmul.f32 %v323, %v349
      %v360 = vmul.f32 %v324, %v349
      %v361 = vmul.f32 %v325, %v349
      %v362 = vmul.f32 %v326, %v349
      %v363 = vmul.f32 %v327, %v349
      %v364 = vmul.f32 %v328, %v349
      %v365 = vmul.f32 %v329, %v349
      %v366 = vmul.f32 %v330, %v349
      %v367 = vmul.f32 %v331, %v349
      %v368 = vmul.f32 %v332, %v349
      %v369 = vmul.f32 %v333, %v349
      %v370 = vmul.f32 %v334, %v349
      %v371 = vmul.f32 %v335, %v349
      %v372 = vmul.f32 %v336, %v349
      %v373 = vmul.f32 %v337, %v349
      %v374 = vmul.f32 %v338, %v349
      %v375 = vmul.f32 %v339, %v349
      %v376 = vmul.f32 %v340, %v349
      %v377 = vmul.f32 %v341, %v349
      %v378 = vmul.f32 %v342, %v349
      %v379 = vmul.f32 %v343, %v349
      %v380 = vmul.f32 %v344, %v349
      %v381 = vmul.f32 %v345, %v349
      %v382 = vmul.f32 %v346, %v349
      %v383 = vmax.f32 %v351, 0.0
      %v384 = vmax.f32 %v352, 0.0
      %v385 = vmax.f32 %v353, 0.0
      %v386 = vmax.f32 %v354, 0.0
      %v387 = vmax.f32 %v355, 0.0
      %v388 = vmax.f32 %v356, 0.0
      %v389 = vmax.f32 %v357, 0.0
      %v390 = vmax.f32 %v358, 0.0
      %v391 = vmax.f32 %v359, 0.0
      %v392 = vmax.f32 %v360, 0.0
      %v393 = vmax.f32 %v361, 0.0
      %v394 = vmax.f32 %v362, 0.0
      %v395 = vmax.f32 %v363, 0.0
      %v396 = vmax.f32 %v364, 0.0
      %v397 = vmax.f32 %v365, 0.0
      %v398 = vmax.f32 %v366, 0.0
      %v399 = vmax.f32 %v367, 0.0
      %v400 = vmax.f32 %v368, 0.0
      %v401 = vmax.f32 %v369, 0.0
      %v402 = vmax.f32 %v370, 0.0
      %v403 = vmax.f32 %v371, 0.0
      %v404 = vmax.f32 %v372, 0.0
      %v405 = vmax.f32 %v373, 0.0
      %v406 = vmax.f32 %v374, 0.0
      %v407 = vmax.f32 %v375, 0.0
      %v408 = vmax.f32 %v376, 0.0
      %v409 = vmax.f32 %v377, 0.0
      %v410 = vmax.f32 %v378, 0.0
      %v411 = vmax.f32 %v379, 0.0
      %v412 = vmax.f32 %v380, 0.0
      %v413 = vmax.f32 %v381, 0.0
      %v414 = vmax.f32 %v382, 0.0
      %415 = vst.msk [vmem:[#allocation2 + $0x18] sm:$0xff] %vm272, %v383
      %416 = vst.msk [vmem:[#allocation2 + $0x20] sm:$0xff] %vm272, %v384
      %417 = vst.msk [vmem:[#allocation2 + $0x28] sm:$0xff] %vm272, %v385
      %418 = vst.msk [vmem:[#allocation2 + $0x30] sm:$0xff] %vm272, %v386
      %419 = vst.msk [vmem:[#allocation2 + $0x38] sm:$0xff] %vm272, %v387
      %420 = vst.msk [vmem:[#allocation2 + $0x40] sm:$0xff] %vm272, %v388
      %421 = vst.msk [vmem:[#allocation2 + $0x48] sm:$0xff] %vm272, %v389
      %422 = vst.msk [vmem:[#allocation2 + $0x50] sm:$0xff] %vm272, %v390
      %423 = vst.msk [vmem:[#allocation2 + $0x58] sm:$0xff] %vm272, %v391
      %424 = vst.msk [vmem:[#allocation2 + $0x60] sm:$0xff] %vm272, %v392
      %425 = vst.msk [vmem:[#allocation2 + $0x68] sm:$0xff] %vm272, %v393
      %426 = vst.msk [vmem:[#allocation2 + $0x70] sm:$0xff] %vm272, %v394
      %427 = vst.msk [vmem:[#allocation2 + $0x78] sm:$0xff] %vm272, %v395
      %428 = vst.msk [vmem:[#allocation2 + $0x80] sm:$0xff] %vm272, %v396
      %429 = vst.msk [vmem:[#allocation2 + $0x88] sm:$0xff] %vm272, %v397
      %430 = vst.msk [vmem:[#allocation2 + $0x90] sm:$0xff] %vm272, %v398
      %431 = vst.msk [vmem:[#allocation2 + $0x98] sm:$0xff] %vm272, %v399
      %432 = vst.msk [vmem:[#allocation2 + $0xa0] sm:$0xff] %vm272, %v400
      %433 = vst.msk [vmem:[#allocation2 + $0xa8] sm:$0xff] %vm272, %v401
      %434 = vst.msk [vmem:[#allocation2 + $0xb0] sm:$0xff] %vm272, %v402
      %435 = vst.msk [vmem:[#allocation2 + $0xb8] sm:$0xff] %vm272, %v403
      %436 = vst.msk [vmem:[#allocation2 + $0xc0] sm:$0xff] %vm272, %v404
      %437 = vst.msk [vmem:[#allocation2 + $0xc8] sm:$0xff] %vm272, %v405
      %438 = vst.msk [vmem:[#allocation2 + $0xd0] sm:$0xff] %vm272, %v406
      %439 = vst.msk [vmem:[#allocation2 + $0xd8] sm:$0xff] %vm272, %v407
      %440 = vst.msk [vmem:[#allocation2 + $0xe0] sm:$0xff] %vm272, %v408
      %441 = vst.msk [vmem:[#allocation2 + $0xe8] sm:$0xff] %vm272, %v409
      %442 = vst.msk [vmem:[#allocation2 + $0xf0] sm:$0xff] %vm272, %v410
      %443 = vst.msk [vmem:[#allocation2 + $0xf8] sm:$0xff] %vm272, %v411
      %444 = vst.msk [vmem:[#allocation2 + $0x100] sm:$0xff] %vm272, %v412
      %445 = vst.msk [vmem:[#allocation2 + $0x108] sm:$0xff] %vm272, %v413
      %446 = vst.msk [vmem:[#allocation2 + $0x110] sm:$0xff] %vm272, %v414
      %v447 = vlaneseq
      %v448 = vshrl.u32 %v447, 7
      %v449 = vadd.s32 %v448, 8
      %v450 = vadd.s32 %v448, 16
      %v451 = vadd.s32 %v448, 24
      %v452 = vadd.s32 %v448, 32
      %v453 = vadd.s32 %v448, 40
      %v454 = vadd.s32 %v448, 48
      %v455 = vadd.s32 %v448, 56
      %v456 = vadd.s32 %v448, 64
      %v457 = vadd.s32 %v448, 72
      %v458 = vadd.s32 %v448, 80
      %v459 = vadd.s32 %v448, 88
      %v460 = vadd.s32 %v448, 96
      %v461 = vadd.s32 %v448, 104
      %v462 = vadd.s32 %v448, 112
      %v463 = vadd.s32 %v448, 120
      %v464 = vadd.s32 %v448, 128
      %v465 = vadd.s32 %v448, 136
      %v466 = vadd.s32 %v448, 144
      %v467 = vadd.s32 %v448, 152
      %v468 = vadd.s32 %v448, 160
      %v469 = vadd.s32 %v448, 168
      %v470 = vadd.s32 %v448, 176
      %v471 = vadd.s32 %v448, 184
      %v472 = vadd.s32 %v448, 192
      %v473 = vadd.s32 %v448, 200
      %v474 = vadd.s32 %v448, 208
      %v475 = vadd.s32 %v448, 216
      %v476 = vadd.s32 %v448, 224
      %v477 = vadd.s32 %v448, 232
      %v478 = vadd.s32 %v448, 240
      %v479 = vadd.s32 %v448, 248
      %v480 = vand.u32 %v448, 15
      %v481 = vand.u32 %v449, 15
      %v482 = vand.u32 %v450, 15
      %v483 = vand.u32 %v451, 15
      %v484 = vand.u32 %v452, 15
      %v485 = vand.u32 %v453, 15
      %v486 = vand.u32 %v454, 15
      %v487 = vand.u32 %v455, 15
      %v488 = vand.u32 %v456, 15
      %v489 = vand.u32 %v457, 15
      %v490 = vand.u32 %v458, 15
      %v491 = vand.u32 %v459, 15
      %v492 = vand.u32 %v460, 15
      %v493 = vand.u32 %v461, 15
      %v494 = vand.u32 %v462, 15
      %v495 = vand.u32 %v463, 15
      %v496 = vand.u32 %v464, 15
      %v497 = vand.u32 %v465, 15
      %v498 = vand.u32 %v466, 15
      %v499 = vand.u32 %v467, 15
      %v500 = vand.u32 %v468, 15
      %v501 = vand.u32 %v469, 15
      %v502 = vand.u32 %v470, 15
      %v503 = vand.u32 %v471, 15
      %v504 = vand.u32 %v472, 15
      %v505 = vand.u32 %v473, 15
      %v506 = vand.u32 %v474, 15
      %v507 = vand.u32 %v475, 15
      %v508 = vand.u32 %v476, 15
      %v509 = vand.u32 %v477, 15
      %v510 = vand.u32 %v478, 15
      %v511 = vand.u32 %v479, 15
      %vm512 = vcmp.ne.s32.totalorder %v480, 0
      %vm513 = vcmp.ne.s32.totalorder %v481, 0
      %vm514 = vcmp.ne.s32.totalorder %v482, 0
      %vm515 = vcmp.ne.s32.totalorder %v483, 0
      %vm516 = vcmp.ne.s32.totalorder %v484, 0
      %vm517 = vcmp.ne.s32.totalorder %v485, 0
      %vm518 = vcmp.ne.s32.totalorder %v486, 0
      %vm519 = vcmp.ne.s32.totalorder %v487, 0
      %vm520 = vcmp.ne.s32.totalorder %v488, 0
      %vm521 = vcmp.ne.s32.totalorder %v489, 0
      %vm522 = vcmp.ne.s32.totalorder %v490, 0
      %vm523 = vcmp.ne.s32.totalorder %v491, 0
      %vm524 = vcmp.ne.s32.totalorder %v492, 0
      %vm525 = vcmp.ne.s32.totalorder %v493, 0
      %vm526 = vcmp.ne.s32.totalorder %v494, 0
      %vm527 = vcmp.ne.s32.totalorder %v495, 0
      %vm528 = vcmp.ne.s32.totalorder %v496, 0
      %vm529 = vcmp.ne.s32.totalorder %v497, 0
      %vm530 = vcmp.ne.s32.totalorder %v498, 0
      %vm531 = vcmp.ne.s32.totalorder %v499, 0
      %vm532 = vcmp.ne.s32.totalorder %v500, 0
      %vm533 = vcmp.ne.s32.totalorder %v501, 0
      %vm534 = vcmp.ne.s32.totalorder %v502, 0
      %vm535 = vcmp.ne.s32.totalorder %v503, 0
      %vm536 = vcmp.ne.s32.totalorder %v504, 0
      %vm537 = vcmp.ne.s32.totalorder %v505, 0
      %vm538 = vcmp.ne.s32.totalorder %v506, 0
      %vm539 = vcmp.ne.s32.totalorder %v507, 0
      %vm540 = vcmp.ne.s32.totalorder %v508, 0
      %vm541 = vcmp.ne.s32.totalorder %v509, 0
      %vm542 = vcmp.ne.s32.totalorder %v510, 0
      %vm543 = vcmp.ne.s32.totalorder %v511, 0
      %v544 = vsel %vm512, 1, 0
      %v545 = vsel %vm513, 1, 0
      %v546 = vsel %vm514, 1, 0
      %v547 = vsel %vm515, 1, 0
      %v548 = vsel %vm516, 1, 0
      %v549 = vsel %vm517, 1, 0
      %v550 = vsel %vm518, 1, 0
      %v551 = vsel %vm519, 1, 0
      %v552 = vsel %vm520, 1, 0
      %v553 = vsel %vm521, 1, 0
      %v554 = vsel %vm522, 1, 0
      %v555 = vsel %vm523, 1, 0
      %v556 = vsel %vm524, 1, 0
      %v557 = vsel %vm525, 1, 0
      %v558 = vsel %vm526, 1, 0
      %v559 = vsel %vm527, 1, 0
      %v560 = vsel %vm528, 1, 0
      %v561 = vsel %vm529, 1, 0
      %v562 = vsel %vm530, 1, 0
      %v563 = vsel %vm531, 1, 0
      %v564 = vsel %vm532, 1, 0
      %v565 = vsel %vm533, 1, 0
      %v566 = vsel %vm534, 1, 0
      %v567 = vsel %vm535, 1, 0
      %v568 = vsel %vm536, 1, 0
      %v569 = vsel %vm537, 1, 0
      %v570 = vsel %vm538, 1, 0
      %v571 = vsel %vm539, 1, 0
      %v572 = vsel %vm540, 1, 0
      %v573 = vsel %vm541, 1, 0
      %v574 = vsel %vm542, 1, 0
      %v575 = vsel %vm543, 1, 0
      %v576 = vcvt.s32.f32 %v544
      %v577 = vcvt.s32.f32 %v545
      %v578 = vcvt.s32.f32 %v546
      %v579 = vcvt.s32.f32 %v547
      %v580 = vcvt.s32.f32 %v548
      %v581 = vcvt.s32.f32 %v549
      %v582 = vcvt.s32.f32 %v550
      %v583 = vcvt.s32.f32 %v551
      %v584 = vcvt.s32.f32 %v552
      %v585 = vcvt.s32.f32 %v553
      %v586 = vcvt.s32.f32 %v554
      %v587 = vcvt.s32.f32 %v555
      %v588 = vcvt.s32.f32 %v556
      %v589 = vcvt.s32.f32 %v557
      %v590 = vcvt.s32.f32 %v558
      %v591 = vcvt.s32.f32 %v559
      %v592 = vcvt.s32.f32 %v560
      %v593 = vcvt.s32.f32 %v561
      %v594 = vcvt.s32.f32 %v562
      %v595 = vcvt.s32.f32 %v563
      %v596 = vcvt.s32.f32 %v564
      %v597 = vcvt.s32.f32 %v565
      %v598 = vcvt.s32.f32 %v566
      %v599 = vcvt.s32.f32 %v567
      %v600 = vcvt.s32.f32 %v568
      %v601 = vcvt.s32.f32 %v569
      %v602 = vcvt.s32.f32 %v570
      %v603 = vcvt.s32.f32 %v571
      %v604 = vcvt.s32.f32 %v572
      %v605 = vcvt.s32.f32 %v573
      %v606 = vcvt.s32.f32 %v574
      %v607 = vcvt.s32.f32 %v575
      %vm608 = vcmp.ne.s32.totalorder %v480, 15
      %vm609 = vcmp.ne.s32.totalorder %v481, 15
      %vm610 = vcmp.ne.s32.totalorder %v482, 15
      %vm611 = vcmp.ne.s32.totalorder %v483, 15
      %vm612 = vcmp.ne.s32.totalorder %v484, 15
      %vm613 = vcmp.ne.s32.totalorder %v485, 15
      %vm614 = vcmp.ne.s32.totalorder %v486, 15
      %vm615 = vcmp.ne.s32.totalorder %v487, 15
      %vm616 = vcmp.ne.s32.totalorder %v488, 15
      %vm617 = vcmp.ne.s32.totalorder %v489, 15
      %vm618 = vcmp.ne.s32.totalorder %v490, 15
      %vm619 = vcmp.ne.s32.totalorder %v491, 15
      %vm620 = vcmp.ne.s32.totalorder %v492, 15
      %vm621 = vcmp.ne.s32.totalorder %v493, 15
      %vm622 = vcmp.ne.s32.totalorder %v494, 15
      %vm623 = vcmp.ne.s32.totalorder %v495, 15
      %vm624 = vcmp.ne.s32.totalorder %v496, 15
      %vm625 = vcmp.ne.s32.totalorder %v497, 15
      %vm626 = vcmp.ne.s32.totalorder %v498, 15
      %vm627 = vcmp.ne.s32.totalorder %v499, 15
      %vm628 = vcmp.ne.s32.totalorder %v500, 15
      %vm629 = vcmp.ne.s32.totalorder %v501, 15
      %vm630 = vcmp.ne.s32.totalorder %v502, 15
      %vm631 = vcmp.ne.s32.totalorder %v503, 15
      %vm632 = vcmp.ne.s32.totalorder %v504, 15
      %vm633 = vcmp.ne.s32.totalorder %v505, 15
      %vm634 = vcmp.ne.s32.totalorder %v506, 15
      %vm635 = vcmp.ne.s32.totalorder %v507, 15
      %vm636 = vcmp.ne.s32.totalorder %v508, 15
      %vm637 = vcmp.ne.s32.totalorder %v509, 15
      %vm638 = vcmp.ne.s32.totalorder %v510, 15
      %vm639 = vcmp.ne.s32.totalorder %v511, 15
      %v640 = vsel %vm608, 1, 0
      %v641 = vsel %vm609, 1, 0
      %v642 = vsel %vm610, 1, 0
      %v643 = vsel %vm611, 1, 0
      %v644 = vsel %vm612, 1, 0
      %v645 = vsel %vm613, 1, 0
      %v646 = vsel %vm614, 1, 0
      %v647 = vsel %vm615, 1, 0
      %v648 = vsel %vm616, 1, 0
      %v649 = vsel %vm617, 1, 0
      %v650 = vsel %vm618, 1, 0
      %v651 = vsel %vm619, 1, 0
      %v652 = vsel %vm620, 1, 0
      %v653 = vsel %vm621, 1, 0
      %v654 = vsel %vm622, 1, 0
      %v655 = vsel %vm623, 1, 0
      %v656 = vsel %vm624, 1, 0
      %v657 = vsel %vm625, 1, 0
      %v658 = vsel %vm626, 1, 0
      %v659 = vsel %vm627, 1, 0
      %v660 = vsel %vm628, 1, 0
      %v661 = vsel %vm629, 1, 0
      %v662 = vsel %vm630, 1, 0
      %v663 = vsel %vm631, 1, 0
      %v664 = vsel %vm632, 1, 0
      %v665 = vsel %vm633, 1, 0
      %v666 = vsel %vm634, 1, 0
      %v667 = vsel %vm635, 1, 0
      %v668 = vsel %vm636, 1, 0
      %v669 = vsel %vm637, 1, 0
      %v670 = vsel %vm638, 1, 0
      %v671 = vsel %vm639, 1, 0
      %v672 = vcvt.s32.f32 %v640
      %v673 = vcvt.s32.f32 %v641
      %v674 = vcvt.s32.f32 %v642
      %v675 = vcvt.s32.f32 %v643
      %v676 = vcvt.s32.f32 %v644
      %v677 = vcvt.s32.f32 %v645
      %v678 = vcvt.s32.f32 %v646
      %v679 = vcvt.s32.f32 %v647
      %v680 = vcvt.s32.f32 %v648
      %v681 = vcvt.s32.f32 %v649
      %v682 = vcvt.s32.f32 %v650
      %v683 = vcvt.s32.f32 %v651
      %v684 = vcvt.s32.f32 %v652
      %v685 = vcvt.s32.f32 %v653
      %v686 = vcvt.s32.f32 %v654
      %v687 = vcvt.s32.f32 %v655
      %v688 = vcvt.s32.f32 %v656
      %v689 = vcvt.s32.f32 %v657
      %v690 = vcvt.s32.f32 %v658
      %v691 = vcvt.s32.f32 %v659
      %v692 = vcvt.s32.f32 %v660
      %v693 = vcvt.s32.f32 %v661
      %v694 = vcvt.s32.f32 %v662
      %v695 = vcvt.s32.f32 %v663
      %v696 = vcvt.s32.f32 %v664
      %v697 = vcvt.s32.f32 %v665
      %v698 = vcvt.s32.f32 %v666
      %v699 = vcvt.s32.f32 %v667
      %v700 = vcvt.s32.f32 %v668
      %v701 = vcvt.s32.f32 %v669
      %v702 = vcvt.s32.f32 %v670
      %v703 = vcvt.s32.f32 %v671
      %v704 = vld [vmem:[#allocation2 + $0x7] sm:$0xff]
      %v705 = vld [vmem:[#allocation2 + $0xf] sm:$0xff]
      %v706 = vld [vmem:[#allocation2 + $0x17] sm:$0xff]
      %v707 = vld [vmem:[#allocation2 + $0x1f] sm:$0xff]
      %v708 = vld [vmem:[#allocation2 + $0x27] sm:$0xff]
      %v709 = vld [vmem:[#allocation2 + $0x2f] sm:$0xff]
      %v710 = vld [vmem:[#allocation2 + $0x37] sm:$0xff]
      %v711 = vld [vmem:[#allocation2 + $0x3f] sm:$0xff]
      %v712 = vld [vmem:[#allocation2 + $0x47] sm:$0xff]
      %v713 = vld [vmem:[#allocation2 + $0x4f] sm:$0xff]
      %v714 = vld [vmem:[#allocation2 + $0x57] sm:$0xff]
      %v715 = vld [vmem:[#allocation2 + $0x5f] sm:$0xff]
      %v716 = vld [vmem:[#allocation2 + $0x67] sm:$0xff]
      %v717 = vld [vmem:[#allocation2 + $0x6f] sm:$0xff]
      %v718 = vld [vmem:[#allocation2 + $0x77] sm:$0xff]
      %v719 = vld [vmem:[#allocation2 + $0x7f] sm:$0xff]
      %v720 = vld [vmem:[#allocation2 + $0x87] sm:$0xff]
      %v721 = vld [vmem:[#allocation2 + $0x8f] sm:$0xff]
      %v722 = vld [vmem:[#allocation2 + $0x97] sm:$0xff]
      %v723 = vld [vmem:[#allocation2 + $0x9f] sm:$0xff]
      %v724 = vld [vmem:[#allocation2 + $0xa7] sm:$0xff]
      %v725 = vld [vmem:[#allocation2 + $0xaf] sm:$0xff]
      %v726 = vld [vmem:[#allocation2 + $0xb7] sm:$0xff]
      %v727 = vld [vmem:[#allocation2 + $0xbf] sm:$0xff]
      %v728 = vld [vmem:[#allocation2 + $0xc7] sm:$0xff]
      %v729 = vld [vmem:[#allocation2 + $0xcf] sm:$0xff]
      %v730 = vld [vmem:[#allocation2 + $0xd7] sm:$0xff]
      %v731 = vld [vmem:[#allocation2 + $0xdf] sm:$0xff]
      %v732 = vld [vmem:[#allocation2 + $0xe7] sm:$0xff]
      %v733 = vld [vmem:[#allocation2 + $0xef] sm:$0xff]
      %v734 = vld [vmem:[#allocation2 + $0xf7] sm:$0xff]
      %v735 = vld [vmem:[#allocation2 + $0xff] sm:$0xff]
      %v736 = vmul.f32 %v704, %v576
      %v737 = vmul.f32 %v705, %v577
      %v738 = vmul.f32 %v706, %v578
      %v739 = vmul.f32 %v707, %v579
      %v740 = vmul.f32 %v708, %v580
      %v741 = vmul.f32 %v709, %v581
      %v742 = vmul.f32 %v710, %v582
      %v743 = vmul.f32 %v711, %v583
      %v744 = vmul.f32 %v712, %v584
      %v745 = vmul.f32 %v713, %v585
      %v746 = vmul.f32 %v714, %v586
      %v747 = vmul.f32 %v715, %v587
      %v748 = vmul.f32 %v716, %v588
      %v749 = vmul.f32 %v717, %v589
      %v750 = vmul.f32 %v718, %v590
      %v751 = vmul.f32 %v719, %v591
      %v752 = vmul.f32 %v720, %v592
      %v753 = vmul.f32 %v721, %v593
      %v754 = vmul.f32 %v722, %v594
      %v755 = vmul.f32 %v723, %v595
      %v756 = vmul.f32 %v724, %v596
      %v757 = vmul.f32 %v725, %v597
      %v758 = vmul.f32 %v726, %v598
      %v759 = vmul.f32 %v727, %v599
      %v760 = vmul.f32 %v728, %v600
      %v761 = vmul.f32 %v729, %v601
      %v762 = vmul.f32 %v730, %v602
      %v763 = vmul.f32 %v731, %v603
      %v764 = vmul.f32 %v732, %v604
      %v765 = vmul.f32 %v733, %v605
      %v766 = vmul.f32 %v734, %v606
      %v767 = vmul.f32 %v735, %v607
      %v768 = vpack.c.bf16 %v737, %v736
      %v769 = vpack.c.bf16 %v739, %v738
      %v770 = vpack.c.bf16 %v741, %v740
      %v771 = vpack.c.bf16 %v743, %v742
      %v772 = vpack.c.bf16 %v745, %v744
      %v773 = vpack.c.bf16 %v747, %v746
      %v774 = vpack.c.bf16 %v749, %v748
      %v775 = vpack.c.bf16 %v751, %v750
      %v776 = vpack.c.bf16 %v753, %v752
      %v777 = vpack.c.bf16 %v755, %v754
      %v778 = vpack.c.bf16 %v757, %v756
      %v779 = vpack.c.bf16 %v759, %v758
      %v780 = vpack.c.bf16 %v761, %v760
      %v781 = vpack.c.bf16 %v763, %v762
      %v782 = vpack.c.bf16 %v765, %v764
      %v783 = vpack.c.bf16 %v767, %v766
      %v784 = vld [vmem:[%s264] sm:$0xf]
      %v785 = vld [vmem:[%s264 + $0x4] sm:$0xf]
      %v786 = vld [vmem:[#allocation2 + $0x8] sm:$0xff]
      %v787 = vld [vmem:[#allocation2 + $0x10] sm:$0xff]
      %v788 = vld [vmem:[#allocation2 + $0x18] sm:$0xff]
      %v789 = vld [vmem:[#allocation2 + $0x20] sm:$0xff]
      %v790 = vld [vmem:[#allocation2 + $0x28] sm:$0xff]
      %v791 = vld [vmem:[#allocation2 + $0x30] sm:$0xff]
      %v792 = vld [vmem:[#allocation2 + $0x38] sm:$0xff]
      %v793 = vld [vmem:[#allocation2 + $0x40] sm:$0xff]
      %v794 = vld [vmem:[#allocation2 + $0x48] sm:$0xff]
      %v795 = vld [vmem:[#allocation2 + $0x50] sm:$0xff]
      %v796 = vld [vmem:[#allocation2 + $0x58] sm:$0xff]
      %v797 = vld [vmem:[#allocation2 + $0x60] sm:$0xff]
      %v798 = vld [vmem:[#allocation2 + $0x68] sm:$0xff]
      %v799 = vld [vmem:[#allocation2 + $0x70] sm:$0xff]
      %v800 = vld [vmem:[#allocation2 + $0x78] sm:$0xff]
      %v801 = vld [vmem:[#allocation2 + $0x80] sm:$0xff]
      %v802 = vld [vmem:[#allocation2 + $0x88] sm:$0xff]
      %v803 = vld [vmem:[#allocation2 + $0x90] sm:$0xff]
      %v804 = vld [vmem:[#allocation2 + $0x98] sm:$0xff]
      %v805 = vld [vmem:[#allocation2 + $0xa0] sm:$0xff]
      %v806 = vld [vmem:[#allocation2 + $0xa8] sm:$0xff]
      %v807 = vld [vmem:[#allocation2 + $0xb0] sm:$0xff]
      %v808 = vld [vmem:[#allocation2 + $0xb8] sm:$0xff]
      %v809 = vld [vmem:[#allocation2 + $0xc0] sm:$0xff]
      %v810 = vld [vmem:[#allocation2 + $0xc8] sm:$0xff]
      %v811 = vld [vmem:[#allocation2 + $0xd0] sm:$0xff]
      %v812 = vld [vmem:[#allocation2 + $0xd8] sm:$0xff]
      %v813 = vld [vmem:[#allocation2 + $0xe0] sm:$0xff]
      %v814 = vld [vmem:[#allocation2 + $0xe8] sm:$0xff]
      %v815 = vld [vmem:[#allocation2 + $0xf0] sm:$0xff]
      %v816 = vld [vmem:[#allocation2 + $0xf8] sm:$0xff]
      %v817 = vld [vmem:[#allocation2 + $0x100] sm:$0xff]
      %v818 = vpack.c.bf16 %v787, %v786
      %v819 = vpack.c.bf16 %v789, %v788
      %v820 = vpack.c.bf16 %v791, %v790
      %v821 = vpack.c.bf16 %v793, %v792
      %v822 = vpack.c.bf16 %v795, %v794
      %v823 = vpack.c.bf16 %v797, %v796
      %v824 = vpack.c.bf16 %v799, %v798
      %v825 = vpack.c.bf16 %v801, %v800
      %v826 = vpack.c.bf16 %v803, %v802
      %v827 = vpack.c.bf16 %v805, %v804
      %v828 = vpack.c.bf16 %v807, %v806
      %v829 = vpack.c.bf16 %v809, %v808
      %v830 = vpack.c.bf16 %v811, %v810
      %v831 = vpack.c.bf16 %v813, %v812
      %v832 = vpack.c.bf16 %v815, %v814
      %v833 = vpack.c.bf16 %v817, %v816
      %s834 = scalar_lea.vmem %s264, 8
      %v835 = vld [vmem:[%s834] sm:$0xf]
      %v836 = vld [vmem:[%s834 + $0x4] sm:$0xf]
      %v839 = vunpack.c.l.b16 %v835
      %v840 = vunpack.c.l.b16 %v836
      %v841 = vpack.c.b16 %v840, %v839
      %v844 = vsel %vm272, %v818, 0
      %v847 = vsel %vm272, %v819, 0
      %v850 = vsel %vm272, %v820, 0
      %v853 = vsel %vm272, %v821, 0
      %v856 = vsel %vm272, %v822, 0
      %v859 = vsel %vm272, %v823, 0
      %v862 = vsel %vm272, %v824, 0
      %v865 = vsel %vm272, %v825, 0
      %v868 = vsel %vm272, %v826, 0
      %v871 = vsel %vm272, %v827, 0
      %v874 = vsel %vm272, %v828, 0
      %v877 = vsel %vm272, %v829, 0
      %v880 = vsel %vm272, %v830, 0
      %v883 = vsel %vm272, %v831, 0
      %v886 = vsel %vm272, %v832, 0
      %v889 = vsel %vm272, %v833, 0
      %891 = vmatpush.bf16.msra.mxu0 0
      %892 = vmatpush.bf16.msra.mxu0 0
      %893 = vmatpush.bf16.msra.mxu0 0
      %894 = vmatpush.bf16.msra.mxu0 0
      %895 = vmatpush.bf16.msra.mxu0 0
      %896 = vmatpush.bf16.msra.mxu0 0
      %897 = vmatpush.bf16.msra.mxu0 0
      %898 = vmatpush.bf16.msra.mxu0 %v841
      %899 = vmatmul.bf16.gmra.mxu0 %v844
      %v900 = vpop.f32.mrf.mxu0
      %v901 = vadd.f32 0.0, %v900
      %v902 = vpop.f32.mrf.mxu0
      %v903 = vadd.f32 0.0, %v902
      %904 = vmatmul.bf16.gmra.mxu0 %v847
      %v905 = vpop.f32.mrf.mxu0
      %v906 = vadd.f32 0.0, %v905
      %v907 = vpop.f32.mrf.mxu0
      %v908 = vadd.f32 0.0, %v907
      %909 = vmatmul.bf16.gmra.mxu0 %v850
      %v910 = vpop.f32.mrf.mxu0
      %v911 = vadd.f32 0.0, %v910
      %v912 = vpop.f32.mrf.mxu0
      %v913 = vadd.f32 0.0, %v912
      %914 = vmatmul.bf16.gmra.mxu0 %v853
      %v915 = vpop.f32.mrf.mxu0
      %v916 = vadd.f32 0.0, %v915
      %v917 = vpop.f32.mrf.mxu0
      %v918 = vadd.f32 0.0, %v917
      %919 = vmatmul.bf16.gmra.mxu0 %v856
      %v920 = vpop.f32.mrf.mxu0
      %v921 = vadd.f32 0.0, %v920
      %v922 = vpop.f32.mrf.mxu0
      %v923 = vadd.f32 0.0, %v922
      %924 = vmatmul.bf16.gmra.mxu0 %v859
      %v925 = vpop.f32.mrf.mxu0
      %v926 = vadd.f32 0.0, %v925
      %v927 = vpop.f32.mrf.mxu0
      %v928 = vadd.f32 0.0, %v927
      %929 = vmatmul.bf16.gmra.mxu0 %v862
      %v930 = vpop.f32.mrf.mxu0
      %v931 = vadd.f32 0.0, %v930
      %v932 = vpop.f32.mrf.mxu0
      %v933 = vadd.f32 0.0, %v932
      %934 = vmatmul.bf16.gmra.mxu0 %v865
      %v935 = vpop.f32.mrf.mxu0
      %v936 = vadd.f32 0.0, %v935
      %v937 = vpop.f32.mrf.mxu0
      %v938 = vadd.f32 0.0, %v937
      %939 = vmatmul.bf16.gmra.mxu0 %v868
      %v940 = vpop.f32.mrf.mxu0
      %v941 = vadd.f32 0.0, %v940
      %v942 = vpop.f32.mrf.mxu0
      %v943 = vadd.f32 0.0, %v942
      %944 = vmatmul.bf16.gmra.mxu0 %v871
      %v945 = vpop.f32.mrf.mxu0
      %v946 = vadd.f32 0.0, %v945
      %v947 = vpop.f32.mrf.mxu0
      %v948 = vadd.f32 0.0, %v947
      %949 = vmatmul.bf16.gmra.mxu0 %v874
      %v950 = vpop.f32.mrf.mxu0
      %v951 = vadd.f32 0.0, %v950
      %v952 = vpop.f32.mrf.mxu0
      %v953 = vadd.f32 0.0, %v952
      %954 = vmatmul.bf16.gmra.mxu0 %v877
      %v955 = vpop.f32.mrf.mxu0
      %v956 = vadd.f32 0.0, %v955
      %v957 = vpop.f32.mrf.mxu0
      %v958 = vadd.f32 0.0, %v957
      %959 = vmatmul.bf16.gmra.mxu0 %v880
      %v960 = vpop.f32.mrf.mxu0
      %v961 = vadd.f32 0.0, %v960
      %v962 = vpop.f32.mrf.mxu0
      %v963 = vadd.f32 0.0, %v962
      %964 = vmatmul.bf16.gmra.mxu0 %v883
      %v965 = vpop.f32.mrf.mxu0
      %v966 = vadd.f32 0.0, %v965
      %v967 = vpop.f32.mrf.mxu0
      %v968 = vadd.f32 0.0, %v967
      %969 = vmatmul.bf16.gmra.mxu0 %v886
      %v970 = vpop.f32.mrf.mxu0
      %v971 = vadd.f32 0.0, %v970
      %v972 = vpop.f32.mrf.mxu0
      %v973 = vadd.f32 0.0, %v972
      %974 = vmatmul.bf16.gmra.mxu0 %v889
      %v975 = vpop.f32.mrf.mxu0
      %v976 = vadd.f32 0.0, %v975
      %v977 = vpop.f32.mrf.mxu0
      %v978 = vadd.f32 0.0, %v977
      %979 = vdwg.mxu0
      %v982 = vunpack.c.l.b16 %v784
      %v983 = vunpack.c.l.b16 %v785
      %v984 = vpack.c.b16 %v983, %v982
      %v987 = vsel %vm272, %v768, 0
      %v990 = vsel %vm272, %v769, 0
      %v993 = vsel %vm272, %v770, 0
      %v996 = vsel %vm272, %v771, 0
      %v999 = vsel %vm272, %v772, 0
      %v1002 = vsel %vm272, %v773, 0
      %v1005 = vsel %vm272, %v774, 0
      %v1008 = vsel %vm272, %v775, 0
      %v1011 = vsel %vm272, %v776, 0
      %v1014 = vsel %vm272, %v777, 0
      %v1017 = vsel %vm272, %v778, 0
      %v1020 = vsel %vm272, %v779, 0
      %v1023 = vsel %vm272, %v780, 0
      %v1026 = vsel %vm272, %v781, 0
      %v1029 = vsel %vm272, %v782, 0
      %v1032 = vsel %vm272, %v783, 0
      %1034 = vmatpush.bf16.msra.mxu0 0
      %1035 = vmatpush.bf16.msra.mxu0 0
      %1036 = vmatpush.bf16.msra.mxu0 0
      %1037 = vmatpush.bf16.msra.mxu0 0
      %1038 = vmatpush.bf16.msra.mxu0 0
      %1039 = vmatpush.bf16.msra.mxu0 0
      %1040 = vmatpush.bf16.msra.mxu0 0
      %1041 = vmatpush.bf16.msra.mxu0 %v984
      %1042 = vmatmul.bf16.gmra.mxu0 %v987
      %v1043 = vpop.f32.mrf.mxu0
      %v1044 = vadd.f32 %v901, %v1043
      %v1045 = vpop.f32.mrf.mxu0
      %v1046 = vadd.f32 %v903, %v1045
      %1047 = vmatmul.bf16.gmra.mxu0 %v990
      %v1048 = vpop.f32.mrf.mxu0
      %v1049 = vadd.f32 %v906, %v1048
      %v1050 = vpop.f32.mrf.mxu0
      %v1051 = vadd.f32 %v908, %v1050
      %1052 = vmatmul.bf16.gmra.mxu0 %v993
      %v1053 = vpop.f32.mrf.mxu0
      %v1054 = vadd.f32 %v911, %v1053
      %v1055 = vpop.f32.mrf.mxu0
      %v1056 = vadd.f32 %v913, %v1055
      %1057 = vmatmul.bf16.gmra.mxu0 %v996
      %v1058 = vpop.f32.mrf.mxu0
      %v1059 = vadd.f32 %v916, %v1058
      %v1060 = vpop.f32.mrf.mxu0
      %v1061 = vadd.f32 %v918, %v1060
      %1062 = vmatmul.bf16.gmra.mxu0 %v999
      %v1063 = vpop.f32.mrf.mxu0
      %v1064 = vadd.f32 %v921, %v1063
      %v1065 = vpop.f32.mrf.mxu0
      %v1066 = vadd.f32 %v923, %v1065
      %1067 = vmatmul.bf16.gmra.mxu0 %v1002
      %v1068 = vpop.f32.mrf.mxu0
      %v1069 = vadd.f32 %v926, %v1068
      %v1070 = vpop.f32.mrf.mxu0
      %v1071 = vadd.f32 %v928, %v1070
      %1072 = vmatmul.bf16.gmra.mxu0 %v1005
      %v1073 = vpop.f32.mrf.mxu0
      %v1074 = vadd.f32 %v931, %v1073
      %v1075 = vpop.f32.mrf.mxu0
      %v1076 = vadd.f32 %v933, %v1075
      %1077 = vmatmul.bf16.gmra.mxu0 %v1008
      %v1078 = vpop.f32.mrf.mxu0
      %v1079 = vadd.f32 %v936, %v1078
      %v1080 = vpop.f32.mrf.mxu0
      %v1081 = vadd.f32 %v938, %v1080
      %1082 = vmatmul.bf16.gmra.mxu0 %v1011
      %v1083 = vpop.f32.mrf.mxu0
      %v1084 = vadd.f32 %v941, %v1083
      %v1085 = vpop.f32.mrf.mxu0
      %v1086 = vadd.f32 %v943, %v1085
      %1087 = vmatmul.bf16.gmra.mxu0 %v1014
      %v1088 = vpop.f32.mrf.mxu0
      %v1089 = vadd.f32 %v946, %v1088
      %v1090 = vpop.f32.mrf.mxu0
      %v1091 = vadd.f32 %v948, %v1090
      %1092 = vmatmul.bf16.gmra.mxu0 %v1017
      %v1093 = vpop.f32.mrf.mxu0
      %v1094 = vadd.f32 %v951, %v1093
      %v1095 = vpop.f32.mrf.mxu0
      %v1096 = vadd.f32 %v953, %v1095
      %1097 = vmatmul.bf16.gmra.mxu0 %v1020
      %v1098 = vpop.f32.mrf.mxu0
      %v1099 = vadd.f32 %v956, %v1098
      %v1100 = vpop.f32.mrf.mxu0
      %v1101 = vadd.f32 %v958, %v1100
      %1102 = vmatmul.bf16.gmra.mxu0 %v1023
      %v1103 = vpop.f32.mrf.mxu0
      %v1104 = vadd.f32 %v961, %v1103
      %v1105 = vpop.f32.mrf.mxu0
      %v1106 = vadd.f32 %v963, %v1105
      %1107 = vmatmul.bf16.gmra.mxu0 %v1026
      %v1108 = vpop.f32.mrf.mxu0
      %v1109 = vadd.f32 %v966, %v1108
      %v1110 = vpop.f32.mrf.mxu0
      %v1111 = vadd.f32 %v968, %v1110
      %1112 = vmatmul.bf16.gmra.mxu0 %v1029
      %v1113 = vpop.f32.mrf.mxu0
      %v1114 = vadd.f32 %v971, %v1113
      %v1115 = vpop.f32.mrf.mxu0
      %v1116 = vadd.f32 %v973, %v1115
      %1117 = vmatmul.bf16.gmra.mxu0 %v1032
      %v1118 = vpop.f32.mrf.mxu0
      %v1119 = vadd.f32 %v976, %v1118
      %v1120 = vpop.f32.mrf.mxu0
      %v1121 = vadd.f32 %v978, %v1120
      %1122 = vdwg.mxu0
      %v1123 = vld [vmem:[#allocation2 + $0x9] sm:$0xff]
      %v1124 = vld [vmem:[#allocation2 + $0x11] sm:$0xff]
      %v1125 = vld [vmem:[#allocation2 + $0x19] sm:$0xff]
      %v1126 = vld [vmem:[#allocation2 + $0x21] sm:$0xff]
      %v1127 = vld [vmem:[#allocation2 + $0x29] sm:$0xff]
      %v1128 = vld [vmem:[#allocation2 + $0x31] sm:$0xff]
      %v1129 = vld [vmem:[#allocation2 + $0x39] sm:$0xff]
      %v1130 = vld [vmem:[#allocation2 + $0x41] sm:$0xff]
      %v1131 = vld [vmem:[#allocation2 + $0x49] sm:$0xff]
      %v1132 = vld [vmem:[#allocation2 + $0x51] sm:$0xff]
      %v1133 = vld [vmem:[#allocation2 + $0x59] sm:$0xff]
      %v1134 = vld [vmem:[#allocation2 + $0x61] sm:$0xff]
      %v1135 = vld [vmem:[#allocation2 + $0x69] sm:$0xff]
      %v1136 = vld [vmem:[#allocation2 + $0x71] sm:$0xff]
      %v1137 = vld [vmem:[#allocation2 + $0x79] sm:$0xff]
      %v1138 = vld [vmem:[#allocation2 + $0x81] sm:$0xff]
      %v1139 = vld [vmem:[#allocation2 + $0x89] sm:$0xff]
      %v1140 = vld [vmem:[#allocation2 + $0x91] sm:$0xff]
      %v1141 = vld [vmem:[#allocation2 + $0x99] sm:$0xff]
      %v1142 = vld [vmem:[#allocation2 + $0xa1] sm:$0xff]
      %v1143 = vld [vmem:[#allocation2 + $0xa9] sm:$0xff]
      %v1144 = vld [vmem:[#allocation2 + $0xb1] sm:$0xff]
      %v1145 = vld [vmem:[#allocation2 + $0xb9] sm:$0xff]
      %v1146 = vld [vmem:[#allocation2 + $0xc1] sm:$0xff]
      %v1147 = vld [vmem:[#allocation2 + $0xc9] sm:$0xff]
      %v1148 = vld [vmem:[#allocation2 + $0xd1] sm:$0xff]
      %v1149 = vld [vmem:[#allocation2 + $0xd9] sm:$0xff]
      %v1150 = vld [vmem:[#allocation2 + $0xe1] sm:$0xff]
      %v1151 = vld [vmem:[#allocation2 + $0xe9] sm:$0xff]
      %v1152 = vld [vmem:[#allocation2 + $0xf1] sm:$0xff]
      %v1153 = vld [vmem:[#allocation2 + $0xf9] sm:$0xff]
      %v1154 = vld [vmem:[#allocation2 + $0x101] sm:$0xff]
      %v1155 = vmul.f32 %v1123, %v672
      %v1156 = vmul.f32 %v1124, %v673
      %v1157 = vmul.f32 %v1125, %v674
      %v1158 = vmul.f32 %v1126, %v675
      %v1159 = vmul.f32 %v1127, %v676
      %v1160 = vmul.f32 %v1128, %v677
      %v1161 = vmul.f32 %v1129, %v678
      %v1162 = vmul.f32 %v1130, %v679
      %v1163 = vmul.f32 %v1131, %v680
      %v1164 = vmul.f32 %v1132, %v681
      %v1165 = vmul.f32 %v1133, %v682
      %v1166 = vmul.f32 %v1134, %v683
      %v1167 = vmul.f32 %v1135, %v684
      %v1168 = vmul.f32 %v1136, %v685
      %v1169 = vmul.f32 %v1137, %v686
      %v1170 = vmul.f32 %v1138, %v687
      %v1171 = vmul.f32 %v1139, %v688
      %v1172 = vmul.f32 %v1140, %v689
      %v1173 = vmul.f32 %v1141, %v690
      %v1174 = vmul.f32 %v1142, %v691
      %v1175 = vmul.f32 %v1143, %v692
      %v1176 = vmul.f32 %v1144, %v693
      %v1177 = vmul.f32 %v1145, %v694
      %v1178 = vmul.f32 %v1146, %v695
      %v1179 = vmul.f32 %v1147, %v696
      %v1180 = vmul.f32 %v1148, %v697
      %v1181 = vmul.f32 %v1149, %v698
      %v1182 = vmul.f32 %v1150, %v699
      %v1183 = vmul.f32 %v1151, %v700
      %v1184 = vmul.f32 %v1152, %v701
      %v1185 = vmul.f32 %v1153, %v702
      %v1186 = vmul.f32 %v1154, %v703
      %v1187 = vpack.c.bf16 %v1156, %v1155
      %v1188 = vpack.c.bf16 %v1158, %v1157
      %v1189 = vpack.c.bf16 %v1160, %v1159
      %v1190 = vpack.c.bf16 %v1162, %v1161
      %v1191 = vpack.c.bf16 %v1164, %v1163
      %v1192 = vpack.c.bf16 %v1166, %v1165
      %v1193 = vpack.c.bf16 %v1168, %v1167
      %v1194 = vpack.c.bf16 %v1170, %v1169
      %v1195 = vpack.c.bf16 %v1172, %v1171
      %v1196 = vpack.c.bf16 %v1174, %v1173
      %v1197 = vpack.c.bf16 %v1176, %v1175
      %v1198 = vpack.c.bf16 %v1178, %v1177
      %v1199 = vpack.c.bf16 %v1180, %v1179
      %v1200 = vpack.c.bf16 %v1182, %v1181
      %v1201 = vpack.c.bf16 %v1184, %v1183
      %v1202 = vpack.c.bf16 %v1186, %v1185
      %s1203 = scalar_lea.vmem %s264, 16
      %v1204 = vld [vmem:[%s1203] sm:$0xf]
      %v1205 = vld [vmem:[%s1203 + $0x4] sm:$0xf]
      %v1208 = vunpack.c.l.b16 %v1204
      %v1209 = vunpack.c.l.b16 %v1205
      %v1210 = vpack.c.b16 %v1209, %v1208
      %v1213 = vsel %vm272, %v1187, 0
      %v1216 = vsel %vm272, %v1188, 0
      %v1219 = vsel %vm272, %v1189, 0
      %v1222 = vsel %vm272, %v1190, 0
      %v1225 = vsel %vm272, %v1191, 0
      %v1228 = vsel %vm272, %v1192, 0
      %v1231 = vsel %vm272, %v1193, 0
      %v1234 = vsel %vm272, %v1194, 0
      %v1237 = vsel %vm272, %v1195, 0
      %v1240 = vsel %vm272, %v1196, 0
      %v1243 = vsel %vm272, %v1197, 0
      %v1246 = vsel %vm272, %v1198, 0
      %v1249 = vsel %vm272, %v1199, 0
      %v1252 = vsel %vm272, %v1200, 0
      %v1255 = vsel %vm272, %v1201, 0
      %v1258 = vsel %vm272, %v1202, 0
      %1260 = vmatpush.bf16.msra.mxu0 0
      %1261 = vmatpush.bf16.msra.mxu0 0
      %1262 = vmatpush.bf16.msra.mxu0 0
      %1263 = vmatpush.bf16.msra.mxu0 0
      %1264 = vmatpush.bf16.msra.mxu0 0
      %1265 = vmatpush.bf16.msra.mxu0 0
      %1266 = vmatpush.bf16.msra.mxu0 0
      %1267 = vmatpush.bf16.msra.mxu0 %v1210
      %1268 = vmatmul.bf16.gmra.mxu0 %v1213
      %v1269 = vpop.f32.mrf.mxu0
      %v1270 = vadd.f32 0.0, %v1269
      %v1271 = vpop.f32.mrf.mxu0
      %v1272 = vadd.f32 0.0, %v1271
      %1273 = vmatmul.bf16.gmra.mxu0 %v1216
      %v1274 = vpop.f32.mrf.mxu0
      %v1275 = vadd.f32 0.0, %v1274
      %v1276 = vpop.f32.mrf.mxu0
      %v1277 = vadd.f32 0.0, %v1276
      %1278 = vmatmul.bf16.gmra.mxu0 %v1219
      %v1279 = vpop.f32.mrf.mxu0
      %v1280 = vadd.f32 0.0, %v1279
      %v1281 = vpop.f32.mrf.mxu0
      %v1282 = vadd.f32 0.0, %v1281
      %1283 = vmatmul.bf16.gmra.mxu0 %v1222
      %v1284 = vpop.f32.mrf.mxu0
      %v1285 = vadd.f32 0.0, %v1284
      %v1286 = vpop.f32.mrf.mxu0
      %v1287 = vadd.f32 0.0, %v1286
      %1288 = vmatmul.bf16.gmra.mxu0 %v1225
      %v1289 = vpop.f32.mrf.mxu0
      %v1290 = vadd.f32 0.0, %v1289
      %v1291 = vpop.f32.mrf.mxu0
      %v1292 = vadd.f32 0.0, %v1291
      %1293 = vmatmul.bf16.gmra.mxu0 %v1228
      %v1294 = vpop.f32.mrf.mxu0
      %v1295 = vadd.f32 0.0, %v1294
      %v1296 = vpop.f32.mrf.mxu0
      %v1297 = vadd.f32 0.0, %v1296
      %1298 = vmatmul.bf16.gmra.mxu0 %v1231
      %v1299 = vpop.f32.mrf.mxu0
      %v1300 = vadd.f32 0.0, %v1299
      %v1301 = vpop.f32.mrf.mxu0
      %v1302 = vadd.f32 0.0, %v1301
      %1303 = vmatmul.bf16.gmra.mxu0 %v1234
      %v1304 = vpop.f32.mrf.mxu0
      %v1305 = vadd.f32 0.0, %v1304
      %v1306 = vpop.f32.mrf.mxu0
      %v1307 = vadd.f32 0.0, %v1306
      %1308 = vmatmul.bf16.gmra.mxu0 %v1237
      %v1309 = vpop.f32.mrf.mxu0
      %v1310 = vadd.f32 0.0, %v1309
      %v1311 = vpop.f32.mrf.mxu0
      %v1312 = vadd.f32 0.0, %v1311
      %1313 = vmatmul.bf16.gmra.mxu0 %v1240
      %v1314 = vpop.f32.mrf.mxu0
      %v1315 = vadd.f32 0.0, %v1314
      %v1316 = vpop.f32.mrf.mxu0
      %v1317 = vadd.f32 0.0, %v1316
      %1318 = vmatmul.bf16.gmra.mxu0 %v1243
      %v1319 = vpop.f32.mrf.mxu0
      %v1320 = vadd.f32 0.0, %v1319
      %v1321 = vpop.f32.mrf.mxu0
      %v1322 = vadd.f32 0.0, %v1321
      %1323 = vmatmul.bf16.gmra.mxu0 %v1246
      %v1324 = vpop.f32.mrf.mxu0
      %v1325 = vadd.f32 0.0, %v1324
      %v1326 = vpop.f32.mrf.mxu0
      %v1327 = vadd.f32 0.0, %v1326
      %1328 = vmatmul.bf16.gmra.mxu0 %v1249
      %v1329 = vpop.f32.mrf.mxu0
      %v1330 = vadd.f32 0.0, %v1329
      %v1331 = vpop.f32.mrf.mxu0
      %v1332 = vadd.f32 0.0, %v1331
      %1333 = vmatmul.bf16.gmra.mxu0 %v1252
      %v1334 = vpop.f32.mrf.mxu0
      %v1335 = vadd.f32 0.0, %v1334
      %v1336 = vpop.f32.mrf.mxu0
      %v1337 = vadd.f32 0.0, %v1336
      %1338 = vmatmul.bf16.gmra.mxu0 %v1255
      %v1339 = vpop.f32.mrf.mxu0
      %v1340 = vadd.f32 0.0, %v1339
      %v1341 = vpop.f32.mrf.mxu0
      %v1342 = vadd.f32 0.0, %v1341
      %1343 = vmatmul.bf16.gmra.mxu0 %v1258
      %v1344 = vpop.f32.mrf.mxu0
      %v1345 = vadd.f32 0.0, %v1344
      %v1346 = vpop.f32.mrf.mxu0
      %v1347 = vadd.f32 0.0, %v1346
      %1348 = vdwg.mxu0
      %v1349 = vadd.f32 %v1044, %v1270
      %v1350 = vadd.f32 %v1046, %v1272
      %v1351 = vadd.f32 %v1049, %v1275
      %v1352 = vadd.f32 %v1051, %v1277
      %v1353 = vadd.f32 %v1054, %v1280
      %v1354 = vadd.f32 %v1056, %v1282
      %v1355 = vadd.f32 %v1059, %v1285
      %v1356 = vadd.f32 %v1061, %v1287
      %v1357 = vadd.f32 %v1064, %v1290
      %v1358 = vadd.f32 %v1066, %v1292
      %v1359 = vadd.f32 %v1069, %v1295
      %v1360 = vadd.f32 %v1071, %v1297
      %v1361 = vadd.f32 %v1074, %v1300
      %v1362 = vadd.f32 %v1076, %v1302
      %v1363 = vadd.f32 %v1079, %v1305
      %v1364 = vadd.f32 %v1081, %v1307
      %v1365 = vadd.f32 %v1084, %v1310
      %v1366 = vadd.f32 %v1086, %v1312
      %v1367 = vadd.f32 %v1089, %v1315
      %v1368 = vadd.f32 %v1091, %v1317
      %v1369 = vadd.f32 %v1094, %v1320
      %v1370 = vadd.f32 %v1096, %v1322
      %v1371 = vadd.f32 %v1099, %v1325
      %v1372 = vadd.f32 %v1101, %v1327
      %v1373 = vadd.f32 %v1104, %v1330
      %v1374 = vadd.f32 %v1106, %v1332
      %v1375 = vadd.f32 %v1109, %v1335
      %v1376 = vadd.f32 %v1111, %v1337
      %v1377 = vadd.f32 %v1114, %v1340
      %v1378 = vadd.f32 %v1116, %v1342
      %v1379 = vadd.f32 %v1119, %v1345
      %v1380 = vadd.f32 %v1121, %v1347
      %v1381 = vld [vmem:[#allocation2 + $0x17] sm:$0xff]
      %v1382 = vld [vmem:[#allocation2 + $0x1f] sm:$0xff]
      %v1383 = vld [vmem:[#allocation2 + $0x27] sm:$0xff]
      %v1384 = vld [vmem:[#allocation2 + $0x2f] sm:$0xff]
      %v1385 = vld [vmem:[#allocation2 + $0x37] sm:$0xff]
      %v1386 = vld [vmem:[#allocation2 + $0x3f] sm:$0xff]
      %v1387 = vld [vmem:[#allocation2 + $0x47] sm:$0xff]
      %v1388 = vld [vmem:[#allocation2 + $0x4f] sm:$0xff]
      %v1389 = vld [vmem:[#allocation2 + $0x57] sm:$0xff]
      %v1390 = vld [vmem:[#allocation2 + $0x5f] sm:$0xff]
      %v1391 = vld [vmem:[#allocation2 + $0x67] sm:$0xff]
      %v1392 = vld [vmem:[#allocation2 + $0x6f] sm:$0xff]
      %v1393 = vld [vmem:[#allocation2 + $0x77] sm:$0xff]
      %v1394 = vld [vmem:[#allocation2 + $0x7f] sm:$0xff]
      %v1395 = vld [vmem:[#allocation2 + $0x87] sm:$0xff]
      %v1396 = vld [vmem:[#allocation2 + $0x8f] sm:$0xff]
      %v1397 = vld [vmem:[#allocation2 + $0x97] sm:$0xff]
      %v1398 = vld [vmem:[#allocation2 + $0x9f] sm:$0xff]
      %v1399 = vld [vmem:[#allocation2 + $0xa7] sm:$0xff]
      %v1400 = vld [vmem:[#allocation2 + $0xaf] sm:$0xff]
      %v1401 = vld [vmem:[#allocation2 + $0xb7] sm:$0xff]
      %v1402 = vld [vmem:[#allocation2 + $0xbf] sm:$0xff]
      %v1403 = vld [vmem:[#allocation2 + $0xc7] sm:$0xff]
      %v1404 = vld [vmem:[#allocation2 + $0xcf] sm:$0xff]
      %v1405 = vld [vmem:[#allocation2 + $0xd7] sm:$0xff]
      %v1406 = vld [vmem:[#allocation2 + $0xdf] sm:$0xff]
      %v1407 = vld [vmem:[#allocation2 + $0xe7] sm:$0xff]
      %v1408 = vld [vmem:[#allocation2 + $0xef] sm:$0xff]
      %v1409 = vld [vmem:[#allocation2 + $0xf7] sm:$0xff]
      %v1410 = vld [vmem:[#allocation2 + $0xff] sm:$0xff]
      %v1411 = vld [vmem:[#allocation2 + $0x107] sm:$0xff]
      %v1412 = vld [vmem:[#allocation2 + $0x10f] sm:$0xff]
      %v1413 = vmul.f32 %v1381, %v576
      %v1414 = vmul.f32 %v1382, %v577
      %v1415 = vmul.f32 %v1383, %v578
      %v1416 = vmul.f32 %v1384, %v579
      %v1417 = vmul.f32 %v1385, %v580
      %v1418 = vmul.f32 %v1386, %v581
      %v1419 = vmul.f32 %v1387, %v582
      %v1420 = vmul.f32 %v1388, %v583
      %v1421 = vmul.f32 %v1389, %v584
      %v1422 = vmul.f32 %v1390, %v585
      %v1423 = vmul.f32 %v1391, %v586
      %v1424 = vmul.f32 %v1392, %v587
      %v1425 = vmul.f32 %v1393, %v588
      %v1426 = vmul.f32 %v1394, %v589
      %v1427 = vmul.f32 %v1395, %v590
      %v1428 = vmul.f32 %v1396, %v591
      %v1429 = vmul.f32 %v1397, %v592
      %v1430 = vmul.f32 %v1398, %v593
      %v1431 = vmul.f32 %v1399, %v594
      %v1432 = vmul.f32 %v1400, %v595
      %v1433 = vmul.f32 %v1401, %v596
      %v1434 = vmul.f32 %v1402, %v597
      %v1435 = vmul.f32 %v1403, %v598
      %v1436 = vmul.f32 %v1404, %v599
      %v1437 = vmul.f32 %v1405, %v600
      %v1438 = vmul.f32 %v1406, %v601
      %v1439 = vmul.f32 %v1407, %v602
      %v1440 = vmul.f32 %v1408, %v603
      %v1441 = vmul.f32 %v1409, %v604
      %v1442 = vmul.f32 %v1410, %v605
      %v1443 = vmul.f32 %v1411, %v606
      %v1444 = vmul.f32 %v1412, %v607
      %v1445 = vpack.c.bf16 %v1414, %v1413
      %v1446 = vpack.c.bf16 %v1416, %v1415
      %v1447 = vpack.c.bf16 %v1418, %v1417
      %v1448 = vpack.c.bf16 %v1420, %v1419
      %v1449 = vpack.c.bf16 %v1422, %v1421
      %v1450 = vpack.c.bf16 %v1424, %v1423
      %v1451 = vpack.c.bf16 %v1426, %v1425
      %v1452 = vpack.c.bf16 %v1428, %v1427
      %v1453 = vpack.c.bf16 %v1430, %v1429
      %v1454 = vpack.c.bf16 %v1432, %v1431
      %v1455 = vpack.c.bf16 %v1434, %v1433
      %v1456 = vpack.c.bf16 %v1436, %v1435
      %v1457 = vpack.c.bf16 %v1438, %v1437
      %v1458 = vpack.c.bf16 %v1440, %v1439
      %v1459 = vpack.c.bf16 %v1442, %v1441
      %v1460 = vpack.c.bf16 %v1444, %v1443
      %s1461 = scalar_lea.vmem %s264, 24
      %v1462 = vld [vmem:[%s1461] sm:$0xf]
      %v1463 = vld [vmem:[%s1461 + $0x4] sm:$0xf]
      %v1466 = vunpack.c.l.b16 %v1462
      %v1467 = vunpack.c.l.b16 %v1463
      %v1468 = vpack.c.b16 %v1467, %v1466
      %v1471 = vsel %vm272, %v1445, 0
      %v1474 = vsel %vm272, %v1446, 0
      %v1477 = vsel %vm272, %v1447, 0
      %v1480 = vsel %vm272, %v1448, 0
      %v1483 = vsel %vm272, %v1449, 0
      %v1486 = vsel %vm272, %v1450, 0
      %v1489 = vsel %vm272, %v1451, 0
      %v1492 = vsel %vm272, %v1452, 0
      %v1495 = vsel %vm272, %v1453, 0
      %v1498 = vsel %vm272, %v1454, 0
      %v1501 = vsel %vm272, %v1455, 0
      %v1504 = vsel %vm272, %v1456, 0
      %v1507 = vsel %vm272, %v1457, 0
      %v1510 = vsel %vm272, %v1458, 0
      %v1513 = vsel %vm272, %v1459, 0
      %v1516 = vsel %vm272, %v1460, 0
      %1518 = vmatpush.bf16.msra.mxu0 0
      %1519 = vmatpush.bf16.msra.mxu0 0
      %1520 = vmatpush.bf16.msra.mxu0 0
      %1521 = vmatpush.bf16.msra.mxu0 0
      %1522 = vmatpush.bf16.msra.mxu0 0
      %1523 = vmatpush.bf16.msra.mxu0 0
      %1524 = vmatpush.bf16.msra.mxu0 0
      %1525 = vmatpush.bf16.msra.mxu0 %v1468
      %1526 = vmatmul.bf16.gmra.mxu0 %v1471
      %v1527 = vpop.f32.mrf.mxu0
      %v1528 = vadd.f32 0.0, %v1527
      %v1529 = vpop.f32.mrf.mxu0
      %v1530 = vadd.f32 0.0, %v1529
      %1531 = vmatmul.bf16.gmra.mxu0 %v1474
      %v1532 = vpop.f32.mrf.mxu0
      %v1533 = vadd.f32 0.0, %v1532
      %v1534 = vpop.f32.mrf.mxu0
      %v1535 = vadd.f32 0.0, %v1534
      %1536 = vmatmul.bf16.gmra.mxu0 %v1477
      %v1537 = vpop.f32.mrf.mxu0
      %v1538 = vadd.f32 0.0, %v1537
      %v1539 = vpop.f32.mrf.mxu0
      %v1540 = vadd.f32 0.0, %v1539
      %1541 = vmatmul.bf16.gmra.mxu0 %v1480
      %v1542 = vpop.f32.mrf.mxu0
      %v1543 = vadd.f32 0.0, %v1542
      %v1544 = vpop.f32.mrf.mxu0
      %v1545 = vadd.f32 0.0, %v1544
      %1546 = vmatmul.bf16.gmra.mxu0 %v1483
      %v1547 = vpop.f32.mrf.mxu0
      %v1548 = vadd.f32 0.0, %v1547
      %v1549 = vpop.f32.mrf.mxu0
      %v1550 = vadd.f32 0.0, %v1549
      %1551 = vmatmul.bf16.gmra.mxu0 %v1486
      %v1552 = vpop.f32.mrf.mxu0
      %v1553 = vadd.f32 0.0, %v1552
      %v1554 = vpop.f32.mrf.mxu0
      %v1555 = vadd.f32 0.0, %v1554
      %1556 = vmatmul.bf16.gmra.mxu0 %v1489
      %v1557 = vpop.f32.mrf.mxu0
      %v1558 = vadd.f32 0.0, %v1557
      %v1559 = vpop.f32.mrf.mxu0
      %v1560 = vadd.f32 0.0, %v1559
      %1561 = vmatmul.bf16.gmra.mxu0 %v1492
      %v1562 = vpop.f32.mrf.mxu0
      %v1563 = vadd.f32 0.0, %v1562
      %v1564 = vpop.f32.mrf.mxu0
      %v1565 = vadd.f32 0.0, %v1564
      %1566 = vmatmul.bf16.gmra.mxu0 %v1495
      %v1567 = vpop.f32.mrf.mxu0
      %v1568 = vadd.f32 0.0, %v1567
      %v1569 = vpop.f32.mrf.mxu0
      %v1570 = vadd.f32 0.0, %v1569
      %1571 = vmatmul.bf16.gmra.mxu0 %v1498
      %v1572 = vpop.f32.mrf.mxu0
      %v1573 = vadd.f32 0.0, %v1572
      %v1574 = vpop.f32.mrf.mxu0
      %v1575 = vadd.f32 0.0, %v1574
      %1576 = vmatmul.bf16.gmra.mxu0 %v1501
      %v1577 = vpop.f32.mrf.mxu0
      %v1578 = vadd.f32 0.0, %v1577
      %v1579 = vpop.f32.mrf.mxu0
      %v1580 = vadd.f32 0.0, %v1579
      %1581 = vmatmul.bf16.gmra.mxu0 %v1504
      %v1582 = vpop.f32.mrf.mxu0
      %v1583 = vadd.f32 0.0, %v1582
      %v1584 = vpop.f32.mrf.mxu0
      %v1585 = vadd.f32 0.0, %v1584
      %1586 = vmatmul.bf16.gmra.mxu0 %v1507
      %v1587 = vpop.f32.mrf.mxu0
      %v1588 = vadd.f32 0.0, %v1587
      %v1589 = vpop.f32.mrf.mxu0
      %v1590 = vadd.f32 0.0, %v1589
      %1591 = vmatmul.bf16.gmra.mxu0 %v1510
      %v1592 = vpop.f32.mrf.mxu0
      %v1593 = vadd.f32 0.0, %v1592
      %v1594 = vpop.f32.mrf.mxu0
      %v1595 = vadd.f32 0.0, %v1594
      %1596 = vmatmul.bf16.gmra.mxu0 %v1513
      %v1597 = vpop.f32.mrf.mxu0
      %v1598 = vadd.f32 0.0, %v1597
      %v1599 = vpop.f32.mrf.mxu0
      %v1600 = vadd.f32 0.0, %v1599
      %1601 = vmatmul.bf16.gmra.mxu0 %v1516
      %v1602 = vpop.f32.mrf.mxu0
      %v1603 = vadd.f32 0.0, %v1602
      %v1604 = vpop.f32.mrf.mxu0
      %v1605 = vadd.f32 0.0, %v1604
      %1606 = vdwg.mxu0
      %v1607 = vadd.f32 %v1349, %v1528
      %v1608 = vadd.f32 %v1350, %v1530
      %v1609 = vadd.f32 %v1351, %v1533
      %v1610 = vadd.f32 %v1352, %v1535
      %v1611 = vadd.f32 %v1353, %v1538
      %v1612 = vadd.f32 %v1354, %v1540
      %v1613 = vadd.f32 %v1355, %v1543
      %v1614 = vadd.f32 %v1356, %v1545
      %v1615 = vadd.f32 %v1357, %v1548
      %v1616 = vadd.f32 %v1358, %v1550
      %v1617 = vadd.f32 %v1359, %v1553
      %v1618 = vadd.f32 %v1360, %v1555
      %v1619 = vadd.f32 %v1361, %v1558
      %v1620 = vadd.f32 %v1362, %v1560
      %v1621 = vadd.f32 %v1363, %v1563
      %v1622 = vadd.f32 %v1364, %v1565
      %v1623 = vadd.f32 %v1365, %v1568
      %v1624 = vadd.f32 %v1366, %v1570
      %v1625 = vadd.f32 %v1367, %v1573
      %v1626 = vadd.f32 %v1368, %v1575
      %v1627 = vadd.f32 %v1369, %v1578
      %v1628 = vadd.f32 %v1370, %v1580
      %v1629 = vadd.f32 %v1371, %v1583
      %v1630 = vadd.f32 %v1372, %v1585
      %v1631 = vadd.f32 %v1373, %v1588
      %v1632 = vadd.f32 %v1374, %v1590
      %v1633 = vadd.f32 %v1375, %v1593
      %v1634 = vadd.f32 %v1376, %v1595
      %v1635 = vadd.f32 %v1377, %v1598
      %v1636 = vadd.f32 %v1378, %v1600
      %v1637 = vadd.f32 %v1379, %v1603
      %v1638 = vadd.f32 %v1380, %v1605
      %v1639 = vld [vmem:[#allocation2 + $0x18] sm:$0xff]
      %v1640 = vld [vmem:[#allocation2 + $0x20] sm:$0xff]
      %v1641 = vld [vmem:[#allocation2 + $0x28] sm:$0xff]
      %v1642 = vld [vmem:[#allocation2 + $0x30] sm:$0xff]
      %v1643 = vld [vmem:[#allocation2 + $0x38] sm:$0xff]
      %v1644 = vld [vmem:[#allocation2 + $0x40] sm:$0xff]
      %v1645 = vld [vmem:[#allocation2 + $0x48] sm:$0xff]
      %v1646 = vld [vmem:[#allocation2 + $0x50] sm:$0xff]
      %v1647 = vld [vmem:[#allocation2 + $0x58] sm:$0xff]
      %v1648 = vld [vmem:[#allocation2 + $0x60] sm:$0xff]
      %v1649 = vld [vmem:[#allocation2 + $0x68] sm:$0xff]
      %v1650 = vld [vmem:[#allocation2 + $0x70] sm:$0xff]
      %v1651 = vld [vmem:[#allocation2 + $0x78] sm:$0xff]
      %v1652 = vld [vmem:[#allocation2 + $0x80] sm:$0xff]
      %v1653 = vld [vmem:[#allocation2 + $0x88] sm:$0xff]
      %v1654 = vld [vmem:[#allocation2 + $0x90] sm:$0xff]
      %v1655 = vld [vmem:[#allocation2 + $0x98] sm:$0xff]
      %v1656 = vld [vmem:[#allocation2 + $0xa0] sm:$0xff]
      %v1657 = vld [vmem:[#allocation2 + $0xa8] sm:$0xff]
      %v1658 = vld [vmem:[#allocation2 + $0xb0] sm:$0xff]
      %v1659 = vld [vmem:[#allocation2 + $0xb8] sm:$0xff]
      %v1660 = vld [vmem:[#allocation2 + $0xc0] sm:$0xff]
      %v1661 = vld [vmem:[#allocation2 + $0xc8] sm:$0xff]
      %v1662 = vld [vmem:[#allocation2 + $0xd0] sm:$0xff]
      %v1663 = vld [vmem:[#allocation2 + $0xd8] sm:$0xff]
      %v1664 = vld [vmem:[#allocation2 + $0xe0] sm:$0xff]
      %v1665 = vld [vmem:[#allocation2 + $0xe8] sm:$0xff]
      %v1666 = vld [vmem:[#allocation2 + $0xf0] sm:$0xff]
      %v1667 = vld [vmem:[#allocation2 + $0xf8] sm:$0xff]
      %v1668 = vld [vmem:[#allocation2 + $0x100] sm:$0xff]
      %v1669 = vld [vmem:[#allocation2 + $0x108] sm:$0xff]
      %v1670 = vld [vmem:[#allocation2 + $0x110] sm:$0xff]
      %v1671 = vpack.c.bf16 %v1640, %v1639
      %v1672 = vpack.c.bf16 %v1642, %v1641
      %v1673 = vpack.c.bf16 %v1644, %v1643
      %v1674 = vpack.c.bf16 %v1646, %v1645
      %v1675 = vpack.c.bf16 %v1648, %v1647
      %v1676 = vpack.c.bf16 %v1650, %v1649
      %v1677 = vpack.c.bf16 %v1652, %v1651
      %v1678 = vpack.c.bf16 %v1654, %v1653
      %v1679 = vpack.c.bf16 %v1656, %v1655
      %v1680 = vpack.c.bf16 %v1658, %v1657
      %v1681 = vpack.c.bf16 %v1660, %v1659
      %v1682 = vpack.c.bf16 %v1662, %v1661
      %v1683 = vpack.c.bf16 %v1664, %v1663
      %v1684 = vpack.c.bf16 %v1666, %v1665
      %v1685 = vpack.c.bf16 %v1668, %v1667
      %v1686 = vpack.c.bf16 %v1670, %v1669
      %s1687 = scalar_lea.vmem %s264, 32
      %v1688 = vld [vmem:[%s1687] sm:$0xf]
      %v1689 = vld [vmem:[%s1687 + $0x4] sm:$0xf]
      %v1692 = vunpack.c.l.b16 %v1688
      %v1693 = vunpack.c.l.b16 %v1689
      %v1694 = vpack.c.b16 %v1693, %v1692
      %v1697 = vsel %vm272, %v1671, 0
      %v1700 = vsel %vm272, %v1672, 0
      %v1703 = vsel %vm272, %v1673, 0
      %v1706 = vsel %vm272, %v1674, 0
      %v1709 = vsel %vm272, %v1675, 0
      %v1712 = vsel %vm272, %v1676, 0
      %v1715 = vsel %vm272, %v1677, 0
      %v1718 = vsel %vm272, %v1678, 0
      %v1721 = vsel %vm272, %v1679, 0
      %v1724 = vsel %vm272, %v1680, 0
      %v1727 = vsel %vm272, %v1681, 0
      %v1730 = vsel %vm272, %v1682, 0
      %v1733 = vsel %vm272, %v1683, 0
      %v1736 = vsel %vm272, %v1684, 0
      %v1739 = vsel %vm272, %v1685, 0
      %v1742 = vsel %vm272, %v1686, 0
      %1744 = vmatpush.bf16.msra.mxu0 0
      %1745 = vmatpush.bf16.msra.mxu0 0
      %1746 = vmatpush.bf16.msra.mxu0 0
      %1747 = vmatpush.bf16.msra.mxu0 0
      %1748 = vmatpush.bf16.msra.mxu0 0
      %1749 = vmatpush.bf16.msra.mxu0 0
      %1750 = vmatpush.bf16.msra.mxu0 0
      %1751 = vmatpush.bf16.msra.mxu0 %v1694
      %1752 = vmatmul.bf16.gmra.mxu0 %v1697
      %v1753 = vpop.f32.mrf.mxu0
      %v1754 = vadd.f32 0.0, %v1753
      %v1755 = vpop.f32.mrf.mxu0
      %v1756 = vadd.f32 0.0, %v1755
      %1757 = vmatmul.bf16.gmra.mxu0 %v1700
      %v1758 = vpop.f32.mrf.mxu0
      %v1759 = vadd.f32 0.0, %v1758
      %v1760 = vpop.f32.mrf.mxu0
      %v1761 = vadd.f32 0.0, %v1760
      %1762 = vmatmul.bf16.gmra.mxu0 %v1703
      %v1763 = vpop.f32.mrf.mxu0
      %v1764 = vadd.f32 0.0, %v1763
      %v1765 = vpop.f32.mrf.mxu0
      %v1766 = vadd.f32 0.0, %v1765
      %1767 = vmatmul.bf16.gmra.mxu0 %v1706
      %v1768 = vpop.f32.mrf.mxu0
      %v1769 = vadd.f32 0.0, %v1768
      %v1770 = vpop.f32.mrf.mxu0
      %v1771 = vadd.f32 0.0, %v1770
      %1772 = vmatmul.bf16.gmra.mxu0 %v1709
      %v1773 = vpop.f32.mrf.mxu0
      %v1774 = vadd.f32 0.0, %v1773
      %v1775 = vpop.f32.mrf.mxu0
      %v1776 = vadd.f32 0.0, %v1775
      %1777 = vmatmul.bf16.gmra.mxu0 %v1712
      %v1778 = vpop.f32.mrf.mxu0
      %v1779 = vadd.f32 0.0, %v1778
      %v1780 = vpop.f32.mrf.mxu0
      %v1781 = vadd.f32 0.0, %v1780
      %1782 = vmatmul.bf16.gmra.mxu0 %v1715
      %v1783 = vpop.f32.mrf.mxu0
      %v1784 = vadd.f32 0.0, %v1783
      %v1785 = vpop.f32.mrf.mxu0
      %v1786 = vadd.f32 0.0, %v1785
      %1787 = vmatmul.bf16.gmra.mxu0 %v1718
      %v1788 = vpop.f32.mrf.mxu0
      %v1789 = vadd.f32 0.0, %v1788
      %v1790 = vpop.f32.mrf.mxu0
      %v1791 = vadd.f32 0.0, %v1790
      %1792 = vmatmul.bf16.gmra.mxu0 %v1721
      %v1793 = vpop.f32.mrf.mxu0
      %v1794 = vadd.f32 0.0, %v1793
      %v1795 = vpop.f32.mrf.mxu0
      %v1796 = vadd.f32 0.0, %v1795
      %1797 = vmatmul.bf16.gmra.mxu0 %v1724
      %v1798 = vpop.f32.mrf.mxu0
      %v1799 = vadd.f32 0.0, %v1798
      %v1800 = vpop.f32.mrf.mxu0
      %v1801 = vadd.f32 0.0, %v1800
      %1802 = vmatmul.bf16.gmra.mxu0 %v1727
      %v1803 = vpop.f32.mrf.mxu0
      %v1804 = vadd.f32 0.0, %v1803
      %v1805 = vpop.f32.mrf.mxu0
      %v1806 = vadd.f32 0.0, %v1805
      %1807 = vmatmul.bf16.gmra.mxu0 %v1730
      %v1808 = vpop.f32.mrf.mxu0
      %v1809 = vadd.f32 0.0, %v1808
      %v1810 = vpop.f32.mrf.mxu0
      %v1811 = vadd.f32 0.0, %v1810
      %1812 = vmatmul.bf16.gmra.mxu0 %v1733
      %v1813 = vpop.f32.mrf.mxu0
      %v1814 = vadd.f32 0.0, %v1813
      %v1815 = vpop.f32.mrf.mxu0
      %v1816 = vadd.f32 0.0, %v1815
      %1817 = vmatmul.bf16.gmra.mxu0 %v1736
      %v1818 = vpop.f32.mrf.mxu0
      %v1819 = vadd.f32 0.0, %v1818
      %v1820 = vpop.f32.mrf.mxu0
      %v1821 = vadd.f32 0.0, %v1820
      %1822 = vmatmul.bf16.gmra.mxu0 %v1739
      %v1823 = vpop.f32.mrf.mxu0
      %v1824 = vadd.f32 0.0, %v1823
      %v1825 = vpop.f32.mrf.mxu0
      %v1826 = vadd.f32 0.0, %v1825
      %1827 = vmatmul.bf16.gmra.mxu0 %v1742
      %v1828 = vpop.f32.mrf.mxu0
      %v1829 = vadd.f32 0.0, %v1828
      %v1830 = vpop.f32.mrf.mxu0
      %v1831 = vadd.f32 0.0, %v1830
      %1832 = vdwg.mxu0
      %v1833 = vadd.f32 %v1607, %v1754
      %v1834 = vadd.f32 %v1608, %v1756
      %v1835 = vadd.f32 %v1609, %v1759
      %v1836 = vadd.f32 %v1610, %v1761
      %v1837 = vadd.f32 %v1611, %v1764
      %v1838 = vadd.f32 %v1612, %v1766
      %v1839 = vadd.f32 %v1613, %v1769
      %v1840 = vadd.f32 %v1614, %v1771
      %v1841 = vadd.f32 %v1615, %v1774
      %v1842 = vadd.f32 %v1616, %v1776
      %v1843 = vadd.f32 %v1617, %v1779
      %v1844 = vadd.f32 %v1618, %v1781
      %v1845 = vadd.f32 %v1619, %v1784
      %v1846 = vadd.f32 %v1620, %v1786
      %v1847 = vadd.f32 %v1621, %v1789
      %v1848 = vadd.f32 %v1622, %v1791
      %v1849 = vadd.f32 %v1623, %v1794
      %v1850 = vadd.f32 %v1624, %v1796
      %v1851 = vadd.f32 %v1625, %v1799
      %v1852 = vadd.f32 %v1626, %v1801
      %v1853 = vadd.f32 %v1627, %v1804
      %v1854 = vadd.f32 %v1628, %v1806
      %v1855 = vadd.f32 %v1629, %v1809
      %v1856 = vadd.f32 %v1630, %v1811
      %v1857 = vadd.f32 %v1631, %v1814
      %v1858 = vadd.f32 %v1632, %v1816
      %v1859 = vadd.f32 %v1633, %v1819
      %v1860 = vadd.f32 %v1634, %v1821
      %v1861 = vadd.f32 %v1635, %v1824
      %v1862 = vadd.f32 %v1636, %v1826
      %v1863 = vadd.f32 %v1637, %v1829
      %v1864 = vadd.f32 %v1638, %v1831
      %v1865 = vld [vmem:[#allocation2 + $0x19] sm:$0xff]
      %v1866 = vld [vmem:[#allocation2 + $0x21] sm:$0xff]
      %v1867 = vld [vmem:[#allocation2 + $0x29] sm:$0xff]
      %v1868 = vld [vmem:[#allocation2 + $0x31] sm:$0xff]
      %v1869 = vld [vmem:[#allocation2 + $0x39] sm:$0xff]
      %v1870 = vld [vmem:[#allocation2 + $0x41] sm:$0xff]
      %v1871 = vld [vmem:[#allocation2 + $0x49] sm:$0xff]
      %v1872 = vld [vmem:[#allocation2 + $0x51] sm:$0xff]
      %v1873 = vld [vmem:[#allocation2 + $0x59] sm:$0xff]
      %v1874 = vld [vmem:[#allocation2 + $0x61] sm:$0xff]
      %v1875 = vld [vmem:[#allocation2 + $0x69] sm:$0xff]
      %v1876 = vld [vmem:[#allocation2 + $0x71] sm:$0xff]
      %v1877 = vld [vmem:[#allocation2 + $0x79] sm:$0xff]
      %v1878 = vld [vmem:[#allocation2 + $0x81] sm:$0xff]
      %v1879 = vld [vmem:[#allocation2 + $0x89] sm:$0xff]
      %v1880 = vld [vmem:[#allocation2 + $0x91] sm:$0xff]
      %v1881 = vld [vmem:[#allocation2 + $0x99] sm:$0xff]
      %v1882 = vld [vmem:[#allocation2 + $0xa1] sm:$0xff]
      %v1883 = vld [vmem:[#allocation2 + $0xa9] sm:$0xff]
      %v1884 = vld [vmem:[#allocation2 + $0xb1] sm:$0xff]
      %v1885 = vld [vmem:[#allocation2 + $0xb9] sm:$0xff]
      %v1886 = vld [vmem:[#allocation2 + $0xc1] sm:$0xff]
      %v1887 = vld [vmem:[#allocation2 + $0xc9] sm:$0xff]
      %v1888 = vld [vmem:[#allocation2 + $0xd1] sm:$0xff]
      %v1889 = vld [vmem:[#allocation2 + $0xd9] sm:$0xff]
      %v1890 = vld [vmem:[#allocation2 + $0xe1] sm:$0xff]
      %v1891 = vld [vmem:[#allocation2 + $0xe9] sm:$0xff]
      %v1892 = vld [vmem:[#allocation2 + $0xf1] sm:$0xff]
      %v1893 = vld [vmem:[#allocation2 + $0xf9] sm:$0xff]
      %v1894 = vld [vmem:[#allocation2 + $0x101] sm:$0xff]
      %v1895 = vld [vmem:[#allocation2 + $0x109] sm:$0xff]
      %v1896 = vld [vmem:[#allocation2 + $0x111] sm:$0xff]
      %v1897 = vmul.f32 %v1865, %v672
      %v1898 = vmul.f32 %v1866, %v673
      %v1899 = vmul.f32 %v1867, %v674
      %v1900 = vmul.f32 %v1868, %v675
      %v1901 = vmul.f32 %v1869, %v676
      %v1902 = vmul.f32 %v1870, %v677
      %v1903 = vmul.f32 %v1871, %v678
      %v1904 = vmul.f32 %v1872, %v679
      %v1905 = vmul.f32 %v1873, %v680
      %v1906 = vmul.f32 %v1874, %v681
      %v1907 = vmul.f32 %v1875, %v682
      %v1908 = vmul.f32 %v1876, %v683
      %v1909 = vmul.f32 %v1877, %v684
      %v1910 = vmul.f32 %v1878, %v685
      %v1911 = vmul.f32 %v1879, %v686
      %v1912 = vmul.f32 %v1880, %v687
      %v1913 = vmul.f32 %v1881, %v688
      %v1914 = vmul.f32 %v1882, %v689
      %v1915 = vmul.f32 %v1883, %v690
      %v1916 = vmul.f32 %v1884, %v691
      %v1917 = vmul.f32 %v1885, %v692
      %v1918 = vmul.f32 %v1886, %v693
      %v1919 = vmul.f32 %v1887, %v694
      %v1920 = vmul.f32 %v1888, %v695
      %v1921 = vmul.f32 %v1889, %v696
      %v1922 = vmul.f32 %v1890, %v697
      %v1923 = vmul.f32 %v1891, %v698
      %v1924 = vmul.f32 %v1892, %v699
      %v1925 = vmul.f32 %v1893, %v700
      %v1926 = vmul.f32 %v1894, %v701
      %v1927 = vmul.f32 %v1895, %v702
      %v1928 = vmul.f32 %v1896, %v703
      %v1929 = vpack.c.bf16 %v1898, %v1897
      %v1930 = vpack.c.bf16 %v1900, %v1899
      %v1931 = vpack.c.bf16 %v1902, %v1901
      %v1932 = vpack.c.bf16 %v1904, %v1903
      %v1933 = vpack.c.bf16 %v1906, %v1905
      %v1934 = vpack.c.bf16 %v1908, %v1907
      %v1935 = vpack.c.bf16 %v1910, %v1909
      %v1936 = vpack.c.bf16 %v1912, %v1911
      %v1937 = vpack.c.bf16 %v1914, %v1913
      %v1938 = vpack.c.bf16 %v1916, %v1915
      %v1939 = vpack.c.bf16 %v1918, %v1917
      %v1940 = vpack.c.bf16 %v1920, %v1919
      %v1941 = vpack.c.bf16 %v1922, %v1921
      %v1942 = vpack.c.bf16 %v1924, %v1923
      %v1943 = vpack.c.bf16 %v1926, %v1925
      %v1944 = vpack.c.bf16 %v1928, %v1927
      %s1945 = scalar_lea.vmem %s264, 40
      %v1946 = vld [vmem:[%s1945] sm:$0xf]
      %v1947 = vld [vmem:[%s1945 + $0x4] sm:$0xf]
      %v1950 = vunpack.c.l.b16 %v1946
      %v1951 = vunpack.c.l.b16 %v1947
      %v1952 = vpack.c.b16 %v1951, %v1950
      %v1955 = vsel %vm272, %v1929, 0
      %v1958 = vsel %vm272, %v1930, 0
      %v1961 = vsel %vm272, %v1931, 0
      %v1964 = vsel %vm272, %v1932, 0
      %v1967 = vsel %vm272, %v1933, 0
      %v1970 = vsel %vm272, %v1934, 0
      %v1973 = vsel %vm272, %v1935, 0
      %v1976 = vsel %vm272, %v1936, 0
      %v1979 = vsel %vm272, %v1937, 0
      %v1982 = vsel %vm272, %v1938, 0
      %v1985 = vsel %vm272, %v1939, 0
      %v1988 = vsel %vm272, %v1940, 0
      %v1991 = vsel %vm272, %v1941, 0
      %v1994 = vsel %vm272, %v1942, 0
      %v1997 = vsel %vm272, %v1943, 0
      %v2000 = vsel %vm272, %v1944, 0
      %2002 = vmatpush.bf16.msra.mxu0 0
      %2003 = vmatpush.bf16.msra.mxu0 0
      %2004 = vmatpush.bf16.msra.mxu0 0
      %2005 = vmatpush.bf16.msra.mxu0 0
      %2006 = vmatpush.bf16.msra.mxu0 0
      %2007 = vmatpush.bf16.msra.mxu0 0
      %2008 = vmatpush.bf16.msra.mxu0 0
      %2009 = vmatpush.bf16.msra.mxu0 %v1952
      %2010 = vmatmul.bf16.gmra.mxu0 %v1955
      %v2011 = vpop.f32.mrf.mxu0
      %v2012 = vadd.f32 0.0, %v2011
      %v2013 = vpop.f32.mrf.mxu0
      %v2014 = vadd.f32 0.0, %v2013
      %2015 = vmatmul.bf16.gmra.mxu0 %v1958
      %v2016 = vpop.f32.mrf.mxu0
      %v2017 = vadd.f32 0.0, %v2016
      %v2018 = vpop.f32.mrf.mxu0
      %v2019 = vadd.f32 0.0, %v2018
      %2020 = vmatmul.bf16.gmra.mxu0 %v1961
      %v2021 = vpop.f32.mrf.mxu0
      %v2022 = vadd.f32 0.0, %v2021
      %v2023 = vpop.f32.mrf.mxu0
      %v2024 = vadd.f32 0.0, %v2023
      %2025 = vmatmul.bf16.gmra.mxu0 %v1964
      %v2026 = vpop.f32.mrf.mxu0
      %v2027 = vadd.f32 0.0, %v2026
      %v2028 = vpop.f32.mrf.mxu0
      %v2029 = vadd.f32 0.0, %v2028
      %2030 = vmatmul.bf16.gmra.mxu0 %v1967
      %v2031 = vpop.f32.mrf.mxu0
      %v2032 = vadd.f32 0.0, %v2031
      %v2033 = vpop.f32.mrf.mxu0
      %v2034 = vadd.f32 0.0, %v2033
      %2035 = vmatmul.bf16.gmra.mxu0 %v1970
      %v2036 = vpop.f32.mrf.mxu0
      %v2037 = vadd.f32 0.0, %v2036
      %v2038 = vpop.f32.mrf.mxu0
      %v2039 = vadd.f32 0.0, %v2038
      %2040 = vmatmul.bf16.gmra.mxu0 %v1973
      %v2041 = vpop.f32.mrf.mxu0
      %v2042 = vadd.f32 0.0, %v2041
      %v2043 = vpop.f32.mrf.mxu0
      %v2044 = vadd.f32 0.0, %v2043
      %2045 = vmatmul.bf16.gmra.mxu0 %v1976
      %v2046 = vpop.f32.mrf.mxu0
      %v2047 = vadd.f32 0.0, %v2046
      %v2048 = vpop.f32.mrf.mxu0
      %v2049 = vadd.f32 0.0, %v2048
      %2050 = vmatmul.bf16.gmra.mxu0 %v1979
      %v2051 = vpop.f32.mrf.mxu0
      %v2052 = vadd.f32 0.0, %v2051
      %v2053 = vpop.f32.mrf.mxu0
      %v2054 = vadd.f32 0.0, %v2053
      %2055 = vmatmul.bf16.gmra.mxu0 %v1982
      %v2056 = vpop.f32.mrf.mxu0
      %v2057 = vadd.f32 0.0, %v2056
      %v2058 = vpop.f32.mrf.mxu0
      %v2059 = vadd.f32 0.0, %v2058
      %2060 = vmatmul.bf16.gmra.mxu0 %v1985
      %v2061 = vpop.f32.mrf.mxu0
      %v2062 = vadd.f32 0.0, %v2061
      %v2063 = vpop.f32.mrf.mxu0
      %v2064 = vadd.f32 0.0, %v2063
      %2065 = vmatmul.bf16.gmra.mxu0 %v1988
      %v2066 = vpop.f32.mrf.mxu0
      %v2067 = vadd.f32 0.0, %v2066
      %v2068 = vpop.f32.mrf.mxu0
      %v2069 = vadd.f32 0.0, %v2068
      %2070 = vmatmul.bf16.gmra.mxu0 %v1991
      %v2071 = vpop.f32.mrf.mxu0
      %v2072 = vadd.f32 0.0, %v2071
      %v2073 = vpop.f32.mrf.mxu0
      %v2074 = vadd.f32 0.0, %v2073
      %2075 = vmatmul.bf16.gmra.mxu0 %v1994
      %v2076 = vpop.f32.mrf.mxu0
      %v2077 = vadd.f32 0.0, %v2076
      %v2078 = vpop.f32.mrf.mxu0
      %v2079 = vadd.f32 0.0, %v2078
      %2080 = vmatmul.bf16.gmra.mxu0 %v1997
      %v2081 = vpop.f32.mrf.mxu0
      %v2082 = vadd.f32 0.0, %v2081
      %v2083 = vpop.f32.mrf.mxu0
      %v2084 = vadd.f32 0.0, %v2083
      %2085 = vmatmul.bf16.gmra.mxu0 %v2000
      %v2086 = vpop.f32.mrf.mxu0
      %v2087 = vadd.f32 0.0, %v2086
      %v2088 = vpop.f32.mrf.mxu0
      %v2089 = vadd.f32 0.0, %v2088
      %2090 = vdwg.mxu0
      %v2091 = vadd.f32 %v1833, %v2012
      %v2092 = vadd.f32 %v1834, %v2014
      %v2093 = vadd.f32 %v1835, %v2017
      %v2094 = vadd.f32 %v1836, %v2019
      %v2095 = vadd.f32 %v1837, %v2022
      %v2096 = vadd.f32 %v1838, %v2024
      %v2097 = vadd.f32 %v1839, %v2027
      %v2098 = vadd.f32 %v1840, %v2029
      %v2099 = vadd.f32 %v1841, %v2032
      %v2100 = vadd.f32 %v1842, %v2034
      %v2101 = vadd.f32 %v1843, %v2037
      %v2102 = vadd.f32 %v1844, %v2039
      %v2103 = vadd.f32 %v1845, %v2042
      %v2104 = vadd.f32 %v1846, %v2044
      %v2105 = vadd.f32 %v1847, %v2047
      %v2106 = vadd.f32 %v1848, %v2049
      %v2107 = vadd.f32 %v1849, %v2052
      %v2108 = vadd.f32 %v1850, %v2054
      %v2109 = vadd.f32 %v1851, %v2057
      %v2110 = vadd.f32 %v1852, %v2059
      %v2111 = vadd.f32 %v1853, %v2062
      %v2112 = vadd.f32 %v1854, %v2064
      %v2113 = vadd.f32 %v1855, %v2067
      %v2114 = vadd.f32 %v1856, %v2069
      %v2115 = vadd.f32 %v1857, %v2072
      %v2116 = vadd.f32 %v1858, %v2074
      %v2117 = vadd.f32 %v1859, %v2077
      %v2118 = vadd.f32 %v1860, %v2079
      %v2119 = vadd.f32 %v1861, %v2082
      %v2120 = vadd.f32 %v1862, %v2084
      %v2121 = vadd.f32 %v1863, %v2087
      %v2122 = vadd.f32 %v1864, %v2089
      %v2123 = vld [vmem:[#allocation2 + $0x27] sm:$0xff]
      %v2124 = vld [vmem:[#allocation2 + $0x2f] sm:$0xff]
      %v2125 = vld [vmem:[#allocation2 + $0x37] sm:$0xff]
      %v2126 = vld [vmem:[#allocation2 + $0x3f] sm:$0xff]
      %v2127 = vld [vmem:[#allocation2 + $0x47] sm:$0xff]
      %v2128 = vld [vmem:[#allocation2 + $0x4f] sm:$0xff]
      %v2129 = vld [vmem:[#allocation2 + $0x57] sm:$0xff]
      %v2130 = vld [vmem:[#allocation2 + $0x5f] sm:$0xff]
      %v2131 = vld [vmem:[#allocation2 + $0x67] sm:$0xff]
      %v2132 = vld [vmem:[#allocation2 + $0x6f] sm:$0xff]
      %v2133 = vld [vmem:[#allocation2 + $0x77] sm:$0xff]
      %v2134 = vld [vmem:[#allocation2 + $0x7f] sm:$0xff]
      %v2135 = vld [vmem:[#allocation2 + $0x87] sm:$0xff]
      %v2136 = vld [vmem:[#allocation2 + $0x8f] sm:$0xff]
      %v2137 = vld [vmem:[#allocation2 + $0x97] sm:$0xff]
      %v2138 = vld [vmem:[#allocation2 + $0x9f] sm:$0xff]
      %v2139 = vld [vmem:[#allocation2 + $0xa7] sm:$0xff]
      %v2140 = vld [vmem:[#allocation2 + $0xaf] sm:$0xff]
      %v2141 = vld [vmem:[#allocation2 + $0xb7] sm:$0xff]
      %v2142 = vld [vmem:[#allocation2 + $0xbf] sm:$0xff]
      %v2143 = vld [vmem:[#allocation2 + $0xc7] sm:$0xff]
      %v2144 = vld [vmem:[#allocation2 + $0xcf] sm:$0xff]
      %v2145 = vld [vmem:[#allocation2 + $0xd7] sm:$0xff]
      %v2146 = vld [vmem:[#allocation2 + $0xdf] sm:$0xff]
      %v2147 = vld [vmem:[#allocation2 + $0xe7] sm:$0xff]
      %v2148 = vld [vmem:[#allocation2 + $0xef] sm:$0xff]
      %v2149 = vld [vmem:[#allocation2 + $0xf7] sm:$0xff]
      %v2150 = vld [vmem:[#allocation2 + $0xff] sm:$0xff]
      %v2151 = vld [vmem:[#allocation2 + $0x107] sm:$0xff]
      %v2152 = vld [vmem:[#allocation2 + $0x10f] sm:$0xff]
      %v2153 = vld [vmem:[#allocation2 + $0x117] sm:$0xff]
      %v2154 = vld [vmem:[#allocation2 + $0x11f] sm:$0xff]
      %v2155 = vmul.f32 %v2123, %v576
      %v2156 = vmul.f32 %v2124, %v577
      %v2157 = vmul.f32 %v2125, %v578
      %v2158 = vmul.f32 %v2126, %v579
      %v2159 = vmul.f32 %v2127, %v580
      %v2160 = vmul.f32 %v2128, %v581
      %v2161 = vmul.f32 %v2129, %v582
      %v2162 = vmul.f32 %v2130, %v583
      %v2163 = vmul.f32 %v2131, %v584
      %v2164 = vmul.f32 %v2132, %v585
      %v2165 = vmul.f32 %v2133, %v586
      %v2166 = vmul.f32 %v2134, %v587
      %v2167 = vmul.f32 %v2135, %v588
      %v2168 = vmul.f32 %v2136, %v589
      %v2169 = vmul.f32 %v2137, %v590
      %v2170 = vmul.f32 %v2138, %v591
      %v2171 = vmul.f32 %v2139, %v592
      %v2172 = vmul.f32 %v2140, %v593
      %v2173 = vmul.f32 %v2141, %v594
      %v2174 = vmul.f32 %v2142, %v595
      %v2175 = vmul.f32 %v2143, %v596
      %v2176 = vmul.f32 %v2144, %v597
      %v2177 = vmul.f32 %v2145, %v598
      %v2178 = vmul.f32 %v2146, %v599
      %v2179 = vmul.f32 %v2147, %v600
      %v2180 = vmul.f32 %v2148, %v601
      %v2181 = vmul.f32 %v2149, %v602
      %v2182 = vmul.f32 %v2150, %v603
      %v2183 = vmul.f32 %v2151, %v604
      %v2184 = vmul.f32 %v2152, %v605
      %v2185 = vmul.f32 %v2153, %v606
      %v2186 = vmul.f32 %v2154, %v607
      %v2187 = vpack.c.bf16 %v2156, %v2155
      %v2188 = vpack.c.bf16 %v2158, %v2157
      %v2189 = vpack.c.bf16 %v2160, %v2159
      %v2190 = vpack.c.bf16 %v2162, %v2161
      %v2191 = vpack.c.bf16 %v2164, %v2163
      %v2192 = vpack.c.bf16 %v2166, %v2165
      %v2193 = vpack.c.bf16 %v2168, %v2167
      %v2194 = vpack.c.bf16 %v2170, %v2169
      %v2195 = vpack.c.bf16 %v2172, %v2171
      %v2196 = vpack.c.bf16 %v2174, %v2173
      %v2197 = vpack.c.bf16 %v2176, %v2175
      %v2198 = vpack.c.bf16 %v2178, %v2177
      %v2199 = vpack.c.bf16 %v2180, %v2179
      %v2200 = vpack.c.bf16 %v2182, %v2181
      %v2201 = vpack.c.bf16 %v2184, %v2183
      %v2202 = vpack.c.bf16 %v2186, %v2185
      %s2203 = scalar_lea.vmem %s264, 48
      %v2204 = vld [vmem:[%s2203] sm:$0xf]
      %v2205 = vld [vmem:[%s2203 + $0x4] sm:$0xf]
      %v2208 = vunpack.c.l.b16 %v2204
      %v2209 = vunpack.c.l.b16 %v2205
      %v2210 = vpack.c.b16 %v2209, %v2208
      %v2213 = vsel %vm272, %v2187, 0
      %v2216 = vsel %vm272, %v2188, 0
      %v2219 = vsel %vm272, %v2189, 0
      %v2222 = vsel %vm272, %v2190, 0
      %v2225 = vsel %vm272, %v2191, 0
      %v2228 = vsel %vm272, %v2192, 0
      %v2231 = vsel %vm272, %v2193, 0
      %v2234 = vsel %vm272, %v2194, 0
      %v2237 = vsel %vm272, %v2195, 0
      %v2240 = vsel %vm272, %v2196, 0
      %v2243 = vsel %vm272, %v2197, 0
      %v2246 = vsel %vm272, %v2198, 0
      %v2249 = vsel %vm272, %v2199, 0
      %v2252 = vsel %vm272, %v2200, 0
      %v2255 = vsel %vm272, %v2201, 0
      %v2258 = vsel %vm272, %v2202, 0
      %2260 = vmatpush.bf16.msra.mxu0 0
      %2261 = vmatpush.bf16.msra.mxu0 0
      %2262 = vmatpush.bf16.msra.mxu0 0
      %2263 = vmatpush.bf16.msra.mxu0 0
      %2264 = vmatpush.bf16.msra.mxu0 0
      %2265 = vmatpush.bf16.msra.mxu0 0
      %2266 = vmatpush.bf16.msra.mxu0 0
      %2267 = vmatpush.bf16.msra.mxu0 %v2210
      %2268 = vmatmul.bf16.gmra.mxu0 %v2213
      %v2269 = vpop.f32.mrf.mxu0
      %v2270 = vadd.f32 0.0, %v2269
      %v2271 = vpop.f32.mrf.mxu0
      %v2272 = vadd.f32 0.0, %v2271
      %2273 = vmatmul.bf16.gmra.mxu0 %v2216
      %v2274 = vpop.f32.mrf.mxu0
      %v2275 = vadd.f32 0.0, %v2274
      %v2276 = vpop.f32.mrf.mxu0
      %v2277 = vadd.f32 0.0, %v2276
      %2278 = vmatmul.bf16.gmra.mxu0 %v2219
      %v2279 = vpop.f32.mrf.mxu0
      %v2280 = vadd.f32 0.0, %v2279
      %v2281 = vpop.f32.mrf.mxu0
      %v2282 = vadd.f32 0.0, %v2281
      %2283 = vmatmul.bf16.gmra.mxu0 %v2222
      %v2284 = vpop.f32.mrf.mxu0
      %v2285 = vadd.f32 0.0, %v2284
      %v2286 = vpop.f32.mrf.mxu0
      %v2287 = vadd.f32 0.0, %v2286
      %2288 = vmatmul.bf16.gmra.mxu0 %v2225
      %v2289 = vpop.f32.mrf.mxu0
      %v2290 = vadd.f32 0.0, %v2289
      %v2291 = vpop.f32.mrf.mxu0
      %v2292 = vadd.f32 0.0, %v2291
      %2293 = vmatmul.bf16.gmra.mxu0 %v2228
      %v2294 = vpop.f32.mrf.mxu0
      %v2295 = vadd.f32 0.0, %v2294
      %v2296 = vpop.f32.mrf.mxu0
      %v2297 = vadd.f32 0.0, %v2296
      %2298 = vmatmul.bf16.gmra.mxu0 %v2231
      %v2299 = vpop.f32.mrf.mxu0
      %v2300 = vadd.f32 0.0, %v2299
      %v2301 = vpop.f32.mrf.mxu0
      %v2302 = vadd.f32 0.0, %v2301
      %2303 = vmatmul.bf16.gmra.mxu0 %v2234
      %v2304 = vpop.f32.mrf.mxu0
      %v2305 = vadd.f32 0.0, %v2304
      %v2306 = vpop.f32.mrf.mxu0
      %v2307 = vadd.f32 0.0, %v2306
      %2308 = vmatmul.bf16.gmra.mxu0 %v2237
      %v2309 = vpop.f32.mrf.mxu0
      %v2310 = vadd.f32 0.0, %v2309
      %v2311 = vpop.f32.mrf.mxu0
      %v2312 = vadd.f32 0.0, %v2311
      %2313 = vmatmul.bf16.gmra.mxu0 %v2240
      %v2314 = vpop.f32.mrf.mxu0
      %v2315 = vadd.f32 0.0, %v2314
      %v2316 = vpop.f32.mrf.mxu0
      %v2317 = vadd.f32 0.0, %v2316
      %2318 = vmatmul.bf16.gmra.mxu0 %v2243
      %v2319 = vpop.f32.mrf.mxu0
      %v2320 = vadd.f32 0.0, %v2319
      %v2321 = vpop.f32.mrf.mxu0
      %v2322 = vadd.f32 0.0, %v2321
      %2323 = vmatmul.bf16.gmra.mxu0 %v2246
      %v2324 = vpop.f32.mrf.mxu0
      %v2325 = vadd.f32 0.0, %v2324
      %v2326 = vpop.f32.mrf.mxu0
      %v2327 = vadd.f32 0.0, %v2326
      %2328 = vmatmul.bf16.gmra.mxu0 %v2249
      %v2329 = vpop.f32.mrf.mxu0
      %v2330 = vadd.f32 0.0, %v2329
      %v2331 = vpop.f32.mrf.mxu0
      %v2332 = vadd.f32 0.0, %v2331
      %2333 = vmatmul.bf16.gmra.mxu0 %v2252
      %v2334 = vpop.f32.mrf.mxu0
      %v2335 = vadd.f32 0.0, %v2334
      %v2336 = vpop.f32.mrf.mxu0
      %v2337 = vadd.f32 0.0, %v2336
      %2338 = vmatmul.bf16.gmra.mxu0 %v2255
      %v2339 = vpop.f32.mrf.mxu0
      %v2340 = vadd.f32 0.0, %v2339
      %v2341 = vpop.f32.mrf.mxu0
      %v2342 = vadd.f32 0.0, %v2341
      %2343 = vmatmul.bf16.gmra.mxu0 %v2258
      %v2344 = vpop.f32.mrf.mxu0
      %v2345 = vadd.f32 0.0, %v2344
      %v2346 = vpop.f32.mrf.mxu0
      %v2347 = vadd.f32 0.0, %v2346
      %2348 = vdwg.mxu0
      %v2349 = vadd.f32 %v2091, %v2270
      %v2350 = vadd.f32 %v2092, %v2272
      %v2351 = vadd.f32 %v2093, %v2275
      %v2352 = vadd.f32 %v2094, %v2277
      %v2353 = vadd.f32 %v2095, %v2280
      %v2354 = vadd.f32 %v2096, %v2282
      %v2355 = vadd.f32 %v2097, %v2285
      %v2356 = vadd.f32 %v2098, %v2287
      %v2357 = vadd.f32 %v2099, %v2290
      %v2358 = vadd.f32 %v2100, %v2292
      %v2359 = vadd.f32 %v2101, %v2295
      %v2360 = vadd.f32 %v2102, %v2297
      %v2361 = vadd.f32 %v2103, %v2300
      %v2362 = vadd.f32 %v2104, %v2302
      %v2363 = vadd.f32 %v2105, %v2305
      %v2364 = vadd.f32 %v2106, %v2307
      %v2365 = vadd.f32 %v2107, %v2310
      %v2366 = vadd.f32 %v2108, %v2312
      %v2367 = vadd.f32 %v2109, %v2315
      %v2368 = vadd.f32 %v2110, %v2317
      %v2369 = vadd.f32 %v2111, %v2320
      %v2370 = vadd.f32 %v2112, %v2322
      %v2371 = vadd.f32 %v2113, %v2325
      %v2372 = vadd.f32 %v2114, %v2327
      %v2373 = vadd.f32 %v2115, %v2330
      %v2374 = vadd.f32 %v2116, %v2332
      %v2375 = vadd.f32 %v2117, %v2335
      %v2376 = vadd.f32 %v2118, %v2337
      %v2377 = vadd.f32 %v2119, %v2340
      %v2378 = vadd.f32 %v2120, %v2342
      %v2379 = vadd.f32 %v2121, %v2345
      %v2380 = vadd.f32 %v2122, %v2347
      %v2381 = vld [vmem:[#allocation2 + $0x28] sm:$0xff]
      %v2382 = vld [vmem:[#allocation2 + $0x30] sm:$0xff]
      %v2383 = vld [vmem:[#allocation2 + $0x38] sm:$0xff]
      %v2384 = vld [vmem:[#allocation2 + $0x40] sm:$0xff]
      %v2385 = vld [vmem:[#allocation2 + $0x48] sm:$0xff]
      %v2386 = vld [vmem:[#allocation2 + $0x50] sm:$0xff]
      %v2387 = vld [vmem:[#allocation2 + $0x58] sm:$0xff]
      %v2388 = vld [vmem:[#allocation2 + $0x60] sm:$0xff]
      %v2389 = vld [vmem:[#allocation2 + $0x68] sm:$0xff]
      %v2390 = vld [vmem:[#allocation2 + $0x70] sm:$0xff]
      %v2391 = vld [vmem:[#allocation2 + $0x78] sm:$0xff]
      %v2392 = vld [vmem:[#allocation2 + $0x80] sm:$0xff]
      %v2393 = vld [vmem:[#allocation2 + $0x88] sm:$0xff]
      %v2394 = vld [vmem:[#allocation2 + $0x90] sm:$0xff]
      %v2395 = vld [vmem:[#allocation2 + $0x98] sm:$0xff]
      %v2396 = vld [vmem:[#allocation2 + $0xa0] sm:$0xff]
      %v2397 = vld [vmem:[#allocation2 + $0xa8] sm:$0xff]
      %v2398 = vld [vmem:[#allocation2 + $0xb0] sm:$0xff]
      %v2399 = vld [vmem:[#allocation2 + $0xb8] sm:$0xff]
      %v2400 = vld [vmem:[#allocation2 + $0xc0] sm:$0xff]
      %v2401 = vld [vmem:[#allocation2 + $0xc8] sm:$0xff]
      %v2402 = vld [vmem:[#allocation2 + $0xd0] sm:$0xff]
      %v2403 = vld [vmem:[#allocation2 + $0xd8] sm:$0xff]
      %v2404 = vld [vmem:[#allocation2 + $0xe0] sm:$0xff]
      %v2405 = vld [vmem:[#allocation2 + $0xe8] sm:$0xff]
      %v2406 = vld [vmem:[#allocation2 + $0xf0] sm:$0xff]
      %v2407 = vld [vmem:[#allocation2 + $0xf8] sm:$0xff]
      %v2408 = vld [vmem:[#allocation2 + $0x100] sm:$0xff]
      %v2409 = vld [vmem:[#allocation2 + $0x108] sm:$0xff]
      %v2410 = vld [vmem:[#allocation2 + $0x110] sm:$0xff]
      %v2411 = vld [vmem:[#allocation2 + $0x118] sm:$0xff]
      %v2412 = vld [vmem:[#allocation2 + $0x120] sm:$0xff]
      %v2413 = vpack.c.bf16 %v2382, %v2381
      %v2414 = vpack.c.bf16 %v2384, %v2383
      %v2415 = vpack.c.bf16 %v2386, %v2385
      %v2416 = vpack.c.bf16 %v2388, %v2387
      %v2417 = vpack.c.bf16 %v2390, %v2389
      %v2418 = vpack.c.bf16 %v2392, %v2391
      %v2419 = vpack.c.bf16 %v2394, %v2393
      %v2420 = vpack.c.bf16 %v2396, %v2395
      %v2421 = vpack.c.bf16 %v2398, %v2397
      %v2422 = vpack.c.bf16 %v2400, %v2399
      %v2423 = vpack.c.bf16 %v2402, %v2401
      %v2424 = vpack.c.bf16 %v2404, %v2403
      %v2425 = vpack.c.bf16 %v2406, %v2405
      %v2426 = vpack.c.bf16 %v2408, %v2407
      %v2427 = vpack.c.bf16 %v2410, %v2409
      %v2428 = vpack.c.bf16 %v2412, %v2411
      %s2429 = scalar_lea.vmem %s264, 56
      %v2430 = vld [vmem:[%s2429] sm:$0xf]
      %v2431 = vld [vmem:[%s2429 + $0x4] sm:$0xf]
      %v2434 = vunpack.c.l.b16 %v2430
      %v2435 = vunpack.c.l.b16 %v2431
      %v2436 = vpack.c.b16 %v2435, %v2434
      %v2439 = vsel %vm272, %v2413, 0
      %v2442 = vsel %vm272, %v2414, 0
      %v2445 = vsel %vm272, %v2415, 0
      %v2448 = vsel %vm272, %v2416, 0
      %v2451 = vsel %vm272, %v2417, 0
      %v2454 = vsel %vm272, %v2418, 0
      %v2457 = vsel %vm272, %v2419, 0
      %v2460 = vsel %vm272, %v2420, 0
      %v2463 = vsel %vm272, %v2421, 0
      %v2466 = vsel %vm272, %v2422, 0
      %v2469 = vsel %vm272, %v2423, 0
      %v2472 = vsel %vm272, %v2424, 0
      %v2475 = vsel %vm272, %v2425, 0
      %v2478 = vsel %vm272, %v2426, 0
      %v2481 = vsel %vm272, %v2427, 0
      %v2484 = vsel %vm272, %v2428, 0
      %2486 = vmatpush.bf16.msra.mxu0 0
      %2487 = vmatpush.bf16.msra.mxu0 0
      %2488 = vmatpush.bf16.msra.mxu0 0
      %2489 = vmatpush.bf16.msra.mxu0 0
      %2490 = vmatpush.bf16.msra.mxu0 0
      %2491 = vmatpush.bf16.msra.mxu0 0
      %2492 = vmatpush.bf16.msra.mxu0 0
      %2493 = vmatpush.bf16.msra.mxu0 %v2436
      %2494 = vmatmul.bf16.gmra.mxu0 %v2439
      %v2495 = vpop.f32.mrf.mxu0
      %v2496 = vadd.f32 0.0, %v2495
      %v2497 = vpop.f32.mrf.mxu0
      %v2498 = vadd.f32 0.0, %v2497
      %2499 = vmatmul.bf16.gmra.mxu0 %v2442
      %v2500 = vpop.f32.mrf.mxu0
      %v2501 = vadd.f32 0.0, %v2500
      %v2502 = vpop.f32.mrf.mxu0
      %v2503 = vadd.f32 0.0, %v2502
      %2504 = vmatmul.bf16.gmra.mxu0 %v2445
      %v2505 = vpop.f32.mrf.mxu0
      %v2506 = vadd.f32 0.0, %v2505
      %v2507 = vpop.f32.mrf.mxu0
      %v2508 = vadd.f32 0.0, %v2507
      %2509 = vmatmul.bf16.gmra.mxu0 %v2448
      %v2510 = vpop.f32.mrf.mxu0
      %v2511 = vadd.f32 0.0, %v2510
      %v2512 = vpop.f32.mrf.mxu0
      %v2513 = vadd.f32 0.0, %v2512
      %2514 = vmatmul.bf16.gmra.mxu0 %v2451
      %v2515 = vpop.f32.mrf.mxu0
      %v2516 = vadd.f32 0.0, %v2515
      %v2517 = vpop.f32.mrf.mxu0
      %v2518 = vadd.f32 0.0, %v2517
      %2519 = vmatmul.bf16.gmra.mxu0 %v2454
      %v2520 = vpop.f32.mrf.mxu0
      %v2521 = vadd.f32 0.0, %v2520
      %v2522 = vpop.f32.mrf.mxu0
      %v2523 = vadd.f32 0.0, %v2522
      %2524 = vmatmul.bf16.gmra.mxu0 %v2457
      %v2525 = vpop.f32.mrf.mxu0
      %v2526 = vadd.f32 0.0, %v2525
      %v2527 = vpop.f32.mrf.mxu0
      %v2528 = vadd.f32 0.0, %v2527
      %2529 = vmatmul.bf16.gmra.mxu0 %v2460
      %v2530 = vpop.f32.mrf.mxu0
      %v2531 = vadd.f32 0.0, %v2530
      %v2532 = vpop.f32.mrf.mxu0
      %v2533 = vadd.f32 0.0, %v2532
      %2534 = vmatmul.bf16.gmra.mxu0 %v2463
      %v2535 = vpop.f32.mrf.mxu0
      %v2536 = vadd.f32 0.0, %v2535
      %v2537 = vpop.f32.mrf.mxu0
      %v2538 = vadd.f32 0.0, %v2537
      %2539 = vmatmul.bf16.gmra.mxu0 %v2466
      %v2540 = vpop.f32.mrf.mxu0
      %v2541 = vadd.f32 0.0, %v2540
      %v2542 = vpop.f32.mrf.mxu0
      %v2543 = vadd.f32 0.0, %v2542
      %2544 = vmatmul.bf16.gmra.mxu0 %v2469
      %v2545 = vpop.f32.mrf.mxu0
      %v2546 = vadd.f32 0.0, %v2545
      %v2547 = vpop.f32.mrf.mxu0
      %v2548 = vadd.f32 0.0, %v2547
      %2549 = vmatmul.bf16.gmra.mxu0 %v2472
      %v2550 = vpop.f32.mrf.mxu0
      %v2551 = vadd.f32 0.0, %v2550
      %v2552 = vpop.f32.mrf.mxu0
      %v2553 = vadd.f32 0.0, %v2552
      %2554 = vmatmul.bf16.gmra.mxu0 %v2475
      %v2555 = vpop.f32.mrf.mxu0
      %v2556 = vadd.f32 0.0, %v2555
      %v2557 = vpop.f32.mrf.mxu0
      %v2558 = vadd.f32 0.0, %v2557
      %2559 = vmatmul.bf16.gmra.mxu0 %v2478
      %v2560 = vpop.f32.mrf.mxu0
      %v2561 = vadd.f32 0.0, %v2560
      %v2562 = vpop.f32.mrf.mxu0
      %v2563 = vadd.f32 0.0, %v2562
      %2564 = vmatmul.bf16.gmra.mxu0 %v2481
      %v2565 = vpop.f32.mrf.mxu0
      %v2566 = vadd.f32 0.0, %v2565
      %v2567 = vpop.f32.mrf.mxu0
      %v2568 = vadd.f32 0.0, %v2567
      %2569 = vmatmul.bf16.gmra.mxu0 %v2484
      %v2570 = vpop.f32.mrf.mxu0
      %v2571 = vadd.f32 0.0, %v2570
      %v2572 = vpop.f32.mrf.mxu0
      %v2573 = vadd.f32 0.0, %v2572
      %2574 = vdwg.mxu0
      %v2575 = vadd.f32 %v2349, %v2496
      %v2576 = vadd.f32 %v2350, %v2498
      %v2577 = vadd.f32 %v2351, %v2501
      %v2578 = vadd.f32 %v2352, %v2503
      %v2579 = vadd.f32 %v2353, %v2506
      %v2580 = vadd.f32 %v2354, %v2508
      %v2581 = vadd.f32 %v2355, %v2511
      %v2582 = vadd.f32 %v2356, %v2513
      %v2583 = vadd.f32 %v2357, %v2516
      %v2584 = vadd.f32 %v2358, %v2518
      %v2585 = vadd.f32 %v2359, %v2521
      %v2586 = vadd.f32 %v2360, %v2523
      %v2587 = vadd.f32 %v2361, %v2526
      %v2588 = vadd.f32 %v2362, %v2528
      %v2589 = vadd.f32 %v2363, %v2531
      %v2590 = vadd.f32 %v2364, %v2533
      %v2591 = vadd.f32 %v2365, %v2536
      %v2592 = vadd.f32 %v2366, %v2538
      %v2593 = vadd.f32 %v2367, %v2541
      %v2594 = vadd.f32 %v2368, %v2543
      %v2595 = vadd.f32 %v2369, %v2546
      %v2596 = vadd.f32 %v2370, %v2548
      %v2597 = vadd.f32 %v2371, %v2551
      %v2598 = vadd.f32 %v2372, %v2553
      %v2599 = vadd.f32 %v2373, %v2556
      %v2600 = vadd.f32 %v2374, %v2558
      %v2601 = vadd.f32 %v2375, %v2561
      %v2602 = vadd.f32 %v2376, %v2563
      %v2603 = vadd.f32 %v2377, %v2566
      %v2604 = vadd.f32 %v2378, %v2568
      %v2605 = vadd.f32 %v2379, %v2571
      %v2606 = vadd.f32 %v2380, %v2573
      %v2607 = vld [vmem:[#allocation2 + $0x29] sm:$0xff]
      %v2608 = vld [vmem:[#allocation2 + $0x31] sm:$0xff]
      %v2609 = vld [vmem:[#allocation2 + $0x39] sm:$0xff]
      %v2610 = vld [vmem:[#allocation2 + $0x41] sm:$0xff]
      %v2611 = vld [vmem:[#allocation2 + $0x49] sm:$0xff]
      %v2612 = vld [vmem:[#allocation2 + $0x51] sm:$0xff]
      %v2613 = vld [vmem:[#allocation2 + $0x59] sm:$0xff]
      %v2614 = vld [vmem:[#allocation2 + $0x61] sm:$0xff]
      %v2615 = vld [vmem:[#allocation2 + $0x69] sm:$0xff]
      %v2616 = vld [vmem:[#allocation2 + $0x71] sm:$0xff]
      %v2617 = vld [vmem:[#allocation2 + $0x79] sm:$0xff]
      %v2618 = vld [vmem:[#allocation2 + $0x81] sm:$0xff]
      %v2619 = vld [vmem:[#allocation2 + $0x89] sm:$0xff]
      %v2620 = vld [vmem:[#allocation2 + $0x91] sm:$0xff]
      %v2621 = vld [vmem:[#allocation2 + $0x99] sm:$0xff]
      %v2622 = vld [vmem:[#allocation2 + $0xa1] sm:$0xff]
      %v2623 = vld [vmem:[#allocation2 + $0xa9] sm:$0xff]
      %v2624 = vld [vmem:[#allocation2 + $0xb1] sm:$0xff]
      %v2625 = vld [vmem:[#allocation2 + $0xb9] sm:$0xff]
      %v2626 = vld [vmem:[#allocation2 + $0xc1] sm:$0xff]
      %v2627 = vld [vmem:[#allocation2 + $0xc9] sm:$0xff]
      %v2628 = vld [vmem:[#allocation2 + $0xd1] sm:$0xff]
      %v2629 = vld [vmem:[#allocation2 + $0xd9] sm:$0xff]
      %v2630 = vld [vmem:[#allocation2 + $0xe1] sm:$0xff]
      %v2631 = vld [vmem:[#allocation2 + $0xe9] sm:$0xff]
      %v2632 = vld [vmem:[#allocation2 + $0xf1] sm:$0xff]
      %v2633 = vld [vmem:[#allocation2 + $0xf9] sm:$0xff]
      %v2634 = vld [vmem:[#allocation2 + $0x101] sm:$0xff]
      %v2635 = vld [vmem:[#allocation2 + $0x109] sm:$0xff]
      %v2636 = vld [vmem:[#allocation2 + $0x111] sm:$0xff]
      %v2637 = vld [vmem:[#allocation2 + $0x119] sm:$0xff]
      %v2638 = vld [vmem:[#allocation2 + $0x121] sm:$0xff]
      %v2639 = vmul.f32 %v2607, %v672
      %v2640 = vmul.f32 %v2608, %v673
      %v2641 = vmul.f32 %v2609, %v674
      %v2642 = vmul.f32 %v2610, %v675
      %v2643 = vmul.f32 %v2611, %v676
      %v2644 = vmul.f32 %v2612, %v677
      %v2645 = vmul.f32 %v2613, %v678
      %v2646 = vmul.f32 %v2614, %v679
      %v2647 = vmul.f32 %v2615, %v680
      %v2648 = vmul.f32 %v2616, %v681
      %v2649 = vmul.f32 %v2617, %v682
      %v2650 = vmul.f32 %v2618, %v683
      %v2651 = vmul.f32 %v2619, %v684
      %v2652 = vmul.f32 %v2620, %v685
      %v2653 = vmul.f32 %v2621, %v686
      %v2654 = vmul.f32 %v2622, %v687
      %v2655 = vmul.f32 %v2623, %v688
      %v2656 = vmul.f32 %v2624, %v689
      %v2657 = vmul.f32 %v2625, %v690
      %v2658 = vmul.f32 %v2626, %v691
      %v2659 = vmul.f32 %v2627, %v692
      %v2660 = vmul.f32 %v2628, %v693
      %v2661 = vmul.f32 %v2629, %v694
      %v2662 = vmul.f32 %v2630, %v695
      %v2663 = vmul.f32 %v2631, %v696
      %v2664 = vmul.f32 %v2632, %v697
      %v2665 = vmul.f32 %v2633, %v698
      %v2666 = vmul.f32 %v2634, %v699
      %v2667 = vmul.f32 %v2635, %v700
      %v2668 = vmul.f32 %v2636, %v701
      %v2669 = vmul.f32 %v2637, %v702
      %v2670 = vmul.f32 %v2638, %v703
      %v2671 = vpack.c.bf16 %v2640, %v2639
      %v2672 = vpack.c.bf16 %v2642, %v2641
      %v2673 = vpack.c.bf16 %v2644, %v2643
      %v2674 = vpack.c.bf16 %v2646, %v2645
      %v2675 = vpack.c.bf16 %v2648, %v2647
      %v2676 = vpack.c.bf16 %v2650, %v2649
      %v2677 = vpack.c.bf16 %v2652, %v2651
      %v2678 = vpack.c.bf16 %v2654, %v2653
      %v2679 = vpack.c.bf16 %v2656, %v2655
      %v2680 = vpack.c.bf16 %v2658, %v2657
      %v2681 = vpack.c.bf16 %v2660, %v2659
      %v2682 = vpack.c.bf16 %v2662, %v2661
      %v2683 = vpack.c.bf16 %v2664, %v2663
      %v2684 = vpack.c.bf16 %v2666, %v2665
      %v2685 = vpack.c.bf16 %v2668, %v2667
      %v2686 = vpack.c.bf16 %v2670, %v2669
      %s2687 = scalar_lea.vmem %s264, 64
      %v2688 = vld [vmem:[%s2687] sm:$0xf]
      %v2689 = vld [vmem:[%s2687 + $0x4] sm:$0xf]
      %v2692 = vunpack.c.l.b16 %v2688
      %v2693 = vunpack.c.l.b16 %v2689
      %v2694 = vpack.c.b16 %v2693, %v2692
      %v2697 = vsel %vm272, %v2671, 0
      %v2700 = vsel %vm272, %v2672, 0
      %v2703 = vsel %vm272, %v2673, 0
      %v2706 = vsel %vm272, %v2674, 0
      %v2709 = vsel %vm272, %v2675, 0
      %v2712 = vsel %vm272, %v2676, 0
      %v2715 = vsel %vm272, %v2677, 0
      %v2718 = vsel %vm272, %v2678, 0
      %v2721 = vsel %vm272, %v2679, 0
      %v2724 = vsel %vm272, %v2680, 0
      %v2727 = vsel %vm272, %v2681, 0
      %v2730 = vsel %vm272, %v2682, 0
      %v2733 = vsel %vm272, %v2683, 0
      %v2736 = vsel %vm272, %v2684, 0
      %v2739 = vsel %vm272, %v2685, 0
      %v2742 = vsel %vm272, %v2686, 0
      %2744 = vmatpush.bf16.msra.mxu0 0
      %2745 = vmatpush.bf16.msra.mxu0 0
      %2746 = vmatpush.bf16.msra.mxu0 0
      %2747 = vmatpush.bf16.msra.mxu0 0
      %2748 = vmatpush.bf16.msra.mxu0 0
      %2749 = vmatpush.bf16.msra.mxu0 0
      %2750 = vmatpush.bf16.msra.mxu0 0
      %2751 = vmatpush.bf16.msra.mxu0 %v2694
      %2752 = vmatmul.bf16.gmra.mxu0 %v2697
      %v2753 = vpop.f32.mrf.mxu0
      %v2754 = vadd.f32 0.0, %v2753
      %v2755 = vpop.f32.mrf.mxu0
      %v2756 = vadd.f32 0.0, %v2755
      %2757 = vmatmul.bf16.gmra.mxu0 %v2700
      %v2758 = vpop.f32.mrf.mxu0
      %v2759 = vadd.f32 0.0, %v2758
      %v2760 = vpop.f32.mrf.mxu0
      %v2761 = vadd.f32 0.0, %v2760
      %2762 = vmatmul.bf16.gmra.mxu0 %v2703
      %v2763 = vpop.f32.mrf.mxu0
      %v2764 = vadd.f32 0.0, %v2763
      %v2765 = vpop.f32.mrf.mxu0
      %v2766 = vadd.f32 0.0, %v2765
      %2767 = vmatmul.bf16.gmra.mxu0 %v2706
      %v2768 = vpop.f32.mrf.mxu0
      %v2769 = vadd.f32 0.0, %v2768
      %v2770 = vpop.f32.mrf.mxu0
      %v2771 = vadd.f32 0.0, %v2770
      %2772 = vmatmul.bf16.gmra.mxu0 %v2709
      %v2773 = vpop.f32.mrf.mxu0
      %v2774 = vadd.f32 0.0, %v2773
      %v2775 = vpop.f32.mrf.mxu0
      %v2776 = vadd.f32 0.0, %v2775
      %2777 = vmatmul.bf16.gmra.mxu0 %v2712
      %v2778 = vpop.f32.mrf.mxu0
      %v2779 = vadd.f32 0.0, %v2778
      %v2780 = vpop.f32.mrf.mxu0
      %v2781 = vadd.f32 0.0, %v2780
      %2782 = vmatmul.bf16.gmra.mxu0 %v2715
      %v2783 = vpop.f32.mrf.mxu0
      %v2784 = vadd.f32 0.0, %v2783
      %v2785 = vpop.f32.mrf.mxu0
      %v2786 = vadd.f32 0.0, %v2785
      %2787 = vmatmul.bf16.gmra.mxu0 %v2718
      %v2788 = vpop.f32.mrf.mxu0
      %v2789 = vadd.f32 0.0, %v2788
      %v2790 = vpop.f32.mrf.mxu0
      %v2791 = vadd.f32 0.0, %v2790
      %2792 = vmatmul.bf16.gmra.mxu0 %v2721
      %v2793 = vpop.f32.mrf.mxu0
      %v2794 = vadd.f32 0.0, %v2793
      %v2795 = vpop.f32.mrf.mxu0
      %v2796 = vadd.f32 0.0, %v2795
      %2797 = vmatmul.bf16.gmra.mxu0 %v2724
      %v2798 = vpop.f32.mrf.mxu0
      %v2799 = vadd.f32 0.0, %v2798
      %v2800 = vpop.f32.mrf.mxu0
      %v2801 = vadd.f32 0.0, %v2800
      %2802 = vmatmul.bf16.gmra.mxu0 %v2727
      %v2803 = vpop.f32.mrf.mxu0
      %v2804 = vadd.f32 0.0, %v2803
      %v2805 = vpop.f32.mrf.mxu0
      %v2806 = vadd.f32 0.0, %v2805
      %2807 = vmatmul.bf16.gmra.mxu0 %v2730
      %v2808 = vpop.f32.mrf.mxu0
      %v2809 = vadd.f32 0.0, %v2808
      %v2810 = vpop.f32.mrf.mxu0
      %v2811 = vadd.f32 0.0, %v2810
      %2812 = vmatmul.bf16.gmra.mxu0 %v2733
      %v2813 = vpop.f32.mrf.mxu0
      %v2814 = vadd.f32 0.0, %v2813
      %v2815 = vpop.f32.mrf.mxu0
      %v2816 = vadd.f32 0.0, %v2815
      %2817 = vmatmul.bf16.gmra.mxu0 %v2736
      %v2818 = vpop.f32.mrf.mxu0
      %v2819 = vadd.f32 0.0, %v2818
      %v2820 = vpop.f32.mrf.mxu0
      %v2821 = vadd.f32 0.0, %v2820
      %2822 = vmatmul.bf16.gmra.mxu0 %v2739
      %v2823 = vpop.f32.mrf.mxu0
      %v2824 = vadd.f32 0.0, %v2823
      %v2825 = vpop.f32.mrf.mxu0
      %v2826 = vadd.f32 0.0, %v2825
      %2827 = vmatmul.bf16.gmra.mxu0 %v2742
      %v2828 = vpop.f32.mrf.mxu0
      %v2829 = vadd.f32 0.0, %v2828
      %v2830 = vpop.f32.mrf.mxu0
      %v2831 = vadd.f32 0.0, %v2830
      %2832 = vdwg.mxu0
      %v2833 = vadd.f32 %v2575, %v2754
      %v2834 = vadd.f32 %v2576, %v2756
      %v2835 = vadd.f32 %v2577, %v2759
      %v2836 = vadd.f32 %v2578, %v2761
      %v2837 = vadd.f32 %v2579, %v2764
      %v2838 = vadd.f32 %v2580, %v2766
      %v2839 = vadd.f32 %v2581, %v2769
      %v2840 = vadd.f32 %v2582, %v2771
      %v2841 = vadd.f32 %v2583, %v2774
      %v2842 = vadd.f32 %v2584, %v2776
      %v2843 = vadd.f32 %v2585, %v2779
      %v2844 = vadd.f32 %v2586, %v2781
      %v2845 = vadd.f32 %v2587, %v2784
      %v2846 = vadd.f32 %v2588, %v2786
      %v2847 = vadd.f32 %v2589, %v2789
      %v2848 = vadd.f32 %v2590, %v2791
      %v2849 = vadd.f32 %v2591, %v2794
      %v2850 = vadd.f32 %v2592, %v2796
      %v2851 = vadd.f32 %v2593, %v2799
      %v2852 = vadd.f32 %v2594, %v2801
      %v2853 = vadd.f32 %v2595, %v2804
      %v2854 = vadd.f32 %v2596, %v2806
      %v2855 = vadd.f32 %v2597, %v2809
      %v2856 = vadd.f32 %v2598, %v2811
      %v2857 = vadd.f32 %v2599, %v2814
      %v2858 = vadd.f32 %v2600, %v2816
      %v2859 = vadd.f32 %v2601, %v2819
      %v2860 = vadd.f32 %v2602, %v2821
      %v2861 = vadd.f32 %v2603, %v2824
      %v2862 = vadd.f32 %v2604, %v2826
      %v2863 = vadd.f32 %v2605, %v2829
      %v2864 = vadd.f32 %v2606, %v2831
      %p2865 = scmp.eq.s32.totalorder %s20, 0
      // Predicated region
      $region37: #{dense_block_forward.3} parent=35 // pred_check
        %p2866 = pneg %p2865
      $region38: #{dense_block_forward.3} parent=35 // pred_check_branch
        %2868 = sbr.rel (%p2866) target = $region40
      $region39: #{dense_block_forward.3} parent=35 // pred_region
        %vm2869 = vcmask 31744
        %2870 = vst.msk [vmem:[%s270] sm:$0xff] %vm2869, 0.0
        %2871 = vst.msk [vmem:[%s270 + $0x8] sm:$0xff] %vm2869, 0.0
        %2872 = vst.msk [vmem:[%s270 + $0x10] sm:$0xff] %vm2869, 0.0
        %2873 = vst.msk [vmem:[%s270 + $0x18] sm:$0xff] %vm2869, 0.0
        %2874 = vst.msk [vmem:[%s270 + $0x20] sm:$0xff] %vm2869, 0.0
        %2875 = vst.msk [vmem:[%s270 + $0x28] sm:$0xff] %vm2869, 0.0
        %2876 = vst.msk [vmem:[%s270 + $0x30] sm:$0xff] %vm2869, 0.0
        %2877 = vst.msk [vmem:[%s270 + $0x38] sm:$0xff] %vm2869, 0.0
        %2878 = vst.msk [vmem:[%s270 + $0x40] sm:$0xff] %vm2869, 0.0
        %2879 = vst.msk [vmem:[%s270 + $0x48] sm:$0xff] %vm2869, 0.0
        %2880 = vst.msk [vmem:[%s270 + $0x50] sm:$0xff] %vm2869, 0.0
        %2881 = vst.msk [vmem:[%s270 + $0x58] sm:$0xff] %vm2869, 0.0
        %2882 = vst.msk [vmem:[%s270 + $0x60] sm:$0xff] %vm2869, 0.0
        %2883 = vst.msk [vmem:[%s270 + $0x68] sm:$0xff] %vm2869, 0.0
        %2884 = vst.msk [vmem:[%s270 + $0x70] sm:$0xff] %vm2869, 0.0
        %2885 = vst.msk [vmem:[%s270 + $0x78] sm:$0xff] %vm2869, 0.0
        %2886 = vst.msk [vmem:[%s270 + $0x80] sm:$0xff] %vm2869, 0.0
        %2887 = vst.msk [vmem:[%s270 + $0x88] sm:$0xff] %vm2869, 0.0
        %2888 = vst.msk [vmem:[%s270 + $0x90] sm:$0xff] %vm2869, 0.0
        %2889 = vst.msk [vmem:[%s270 + $0x98] sm:$0xff] %vm2869, 0.0
        %2890 = vst.msk [vmem:[%s270 + $0xa0] sm:$0xff] %vm2869, 0.0
        %2891 = vst.msk [vmem:[%s270 + $0xa8] sm:$0xff] %vm2869, 0.0
        %2892 = vst.msk [vmem:[%s270 + $0xb0] sm:$0xff] %vm2869, 0.0
        %2893 = vst.msk [vmem:[%s270 + $0xb8] sm:$0xff] %vm2869, 0.0
        %2894 = vst.msk [vmem:[%s270 + $0xc0] sm:$0xff] %vm2869, 0.0
        %2895 = vst.msk [vmem:[%s270 + $0xc8] sm:$0xff] %vm2869, 0.0
        %2896 = vst.msk [vmem:[%s270 + $0xd0] sm:$0xff] %vm2869, 0.0
        %2897 = vst.msk [vmem:[%s270 + $0xd8] sm:$0xff] %vm2869, 0.0
        %2898 = vst.msk [vmem:[%s270 + $0xe0] sm:$0xff] %vm2869, 0.0
        %2899 = vst.msk [vmem:[%s270 + $0xe8] sm:$0xff] %vm2869, 0.0
        %2900 = vst.msk [vmem:[%s270 + $0xf0] sm:$0xff] %vm2869, 0.0
        %2901 = vst.msk [vmem:[%s270 + $0xf8] sm:$0xff] %vm2869, 0.0
      $region40: #{dense_block_forward.3} parent=35 // pred_fallthru
        _
      %v2902 = vld [vmem:[%s270] sm:$0xff]
      %v2903 = vld [vmem:[%s270 + $0x8] sm:$0xff]
      %v2904 = vld [vmem:[%s270 + $0x10] sm:$0xff]
      %v2905 = vld [vmem:[%s270 + $0x18] sm:$0xff]
      %v2906 = vld [vmem:[%s270 + $0x20] sm:$0xff]
      %v2907 = vld [vmem:[%s270 + $0x28] sm:$0xff]
      %v2908 = vld [vmem:[%s270 + $0x30] sm:$0xff]
      %v2909 = vld [vmem:[%s270 + $0x38] sm:$0xff]
      %v2910 = vld [vmem:[%s270 + $0x40] sm:$0xff]
      %v2911 = vld [vmem:[%s270 + $0x48] sm:$0xff]
      %v2912 = vld [vmem:[%s270 + $0x50] sm:$0xff]
      %v2913 = vld [vmem:[%s270 + $0x58] sm:$0xff]
      %v2914 = vld [vmem:[%s270 + $0x60] sm:$0xff]
      %v2915 = vld [vmem:[%s270 + $0x68] sm:$0xff]
      %v2916 = vld [vmem:[%s270 + $0x70] sm:$0xff]
      %v2917 = vld [vmem:[%s270 + $0x78] sm:$0xff]
      %v2918 = vld [vmem:[%s270 + $0x80] sm:$0xff]
      %v2919 = vld [vmem:[%s270 + $0x88] sm:$0xff]
      %v2920 = vld [vmem:[%s270 + $0x90] sm:$0xff]
      %v2921 = vld [vmem:[%s270 + $0x98] sm:$0xff]
      %v2922 = vld [vmem:[%s270 + $0xa0] sm:$0xff]
      %v2923 = vld [vmem:[%s270 + $0xa8] sm:$0xff]
      %v2924 = vld [vmem:[%s270 + $0xb0] sm:$0xff]
      %v2925 = vld [vmem:[%s270 + $0xb8] sm:$0xff]
      %v2926 = vld [vmem:[%s270 + $0xc0] sm:$0xff]
      %v2927 = vld [vmem:[%s270 + $0xc8] sm:$0xff]
      %v2928 = vld [vmem:[%s270 + $0xd0] sm:$0xff]
      %v2929 = vld [vmem:[%s270 + $0xd8] sm:$0xff]
      %v2930 = vld [vmem:[%s270 + $0xe0] sm:$0xff]
      %v2931 = vld [vmem:[%s270 + $0xe8] sm:$0xff]
      %v2932 = vld [vmem:[%s270 + $0xf0] sm:$0xff]
      %v2933 = vld [vmem:[%s270 + $0xf8] sm:$0xff]
      %v2934 = vadd.f32 %v2902, %v2833
      %v2935 = vadd.f32 %v2903, %v2834
      %v2936 = vadd.f32 %v2904, %v2835
      %v2937 = vadd.f32 %v2905, %v2836
      %v2938 = vadd.f32 %v2906, %v2837
      %v2939 = vadd.f32 %v2907, %v2838
      %v2940 = vadd.f32 %v2908, %v2839
      %v2941 = vadd.f32 %v2909, %v2840
      %v2942 = vadd.f32 %v2910, %v2841
      %v2943 = vadd.f32 %v2911, %v2842
      %v2944 = vadd.f32 %v2912, %v2843
      %v2945 = vadd.f32 %v2913, %v2844
      %v2946 = vadd.f32 %v2914, %v2845
      %v2947 = vadd.f32 %v2915, %v2846
      %v2948 = vadd.f32 %v2916, %v2847
      %v2949 = vadd.f32 %v2917, %v2848
      %v2950 = vadd.f32 %v2918, %v2849
      %v2951 = vadd.f32 %v2919, %v2850
      %v2952 = vadd.f32 %v2920, %v2851
      %v2953 = vadd.f32 %v2921, %v2852
      %v2954 = vadd.f32 %v2922, %v2853
      %v2955 = vadd.f32 %v2923, %v2854
      %v2956 = vadd.f32 %v2924, %v2855
      %v2957 = vadd.f32 %v2925, %v2856
      %v2958 = vadd.f32 %v2926, %v2857
      %v2959 = vadd.f32 %v2927, %v2858
      %v2960 = vadd.f32 %v2928, %v2859
      %v2961 = vadd.f32 %v2929, %v2860
      %v2962 = vadd.f32 %v2930, %v2861
      %v2963 = vadd.f32 %v2931, %v2862
      %v2964 = vadd.f32 %v2932, %v2863
      %v2965 = vadd.f32 %v2933, %v2864
      %vm2966 = vcmask 31744
      %2967 = vst.msk [vmem:[%s270] sm:$0xff] %vm2966, %v2934
      %2968 = vst.msk [vmem:[%s270 + $0x8] sm:$0xff] %vm2966, %v2935
      %2969 = vst.msk [vmem:[%s270 + $0x10] sm:$0xff] %vm2966, %v2936
      %2970 = vst.msk [vmem:[%s270 + $0x18] sm:$0xff] %vm2966, %v2937
      %2971 = vst.msk [vmem:[%s270 + $0x20] sm:$0xff] %vm2966, %v2938
      %2972 = vst.msk [vmem:[%s270 + $0x28] sm:$0xff] %vm2966, %v2939
      %2973 = vst.msk [vmem:[%s270 + $0x30] sm:$0xff] %vm2966, %v2940
      %2974 = vst.msk [vmem:[%s270 + $0x38] sm:$0xff] %vm2966, %v2941
      %2975 = vst.msk [vmem:[%s270 + $0x40] sm:$0xff] %vm2966, %v2942
      %2976 = vst.msk [vmem:[%s270 + $0x48] sm:$0xff] %vm2966, %v2943
      %2977 = vst.msk [vmem:[%s270 + $0x50] sm:$0xff] %vm2966, %v2944
      %2978 = vst.msk [vmem:[%s270 + $0x58] sm:$0xff] %vm2966, %v2945
      %2979 = vst.msk [vmem:[%s270 + $0x60] sm:$0xff] %vm2966, %v2946
      %2980 = vst.msk [vmem:[%s270 + $0x68] sm:$0xff] %vm2966, %v2947
      %2981 = vst.msk [vmem:[%s270 + $0x70] sm:$0xff] %vm2966, %v2948
      %2982 = vst.msk [vmem:[%s270 + $0x78] sm:$0xff] %vm2966, %v2949
      %2983 = vst.msk [vmem:[%s270 + $0x80] sm:$0xff] %vm2966, %v2950
      %2984 = vst.msk [vmem:[%s270 + $0x88] sm:$0xff] %vm2966, %v2951
      %2985 = vst.msk [vmem:[%s270 + $0x90] sm:$0xff] %vm2966, %v2952
      %2986 = vst.msk [vmem:[%s270 + $0x98] sm:$0xff] %vm2966, %v2953
      %2987 = vst.msk [vmem:[%s270 + $0xa0] sm:$0xff] %vm2966, %v2954
      %2988 = vst.msk [vmem:[%s270 + $0xa8] sm:$0xff] %vm2966, %v2955
      %2989 = vst.msk [vmem:[%s270 + $0xb0] sm:$0xff] %vm2966, %v2956
      %2990 = vst.msk [vmem:[%s270 + $0xb8] sm:$0xff] %vm2966, %v2957
      %2991 = vst.msk [vmem:[%s270 + $0xc0] sm:$0xff] %vm2966, %v2958
      %2992 = vst.msk [vmem:[%s270 + $0xc8] sm:$0xff] %vm2966, %v2959
      %2993 = vst.msk [vmem:[%s270 + $0xd0] sm:$0xff] %vm2966, %v2960
      %2994 = vst.msk [vmem:[%s270 + $0xd8] sm:$0xff] %vm2966, %v2961
      %2995 = vst.msk [vmem:[%s270 + $0xe0] sm:$0xff] %vm2966, %v2962
      %2996 = vst.msk [vmem:[%s270 + $0xe8] sm:$0xff] %vm2966, %v2963
      %2997 = vst.msk [vmem:[%s270 + $0xf0] sm:$0xff] %vm2966, %v2964
      %2998 = vst.msk [vmem:[%s270 + $0xf8] sm:$0xff] %vm2966, %v2965
      %p2999 = scmp.lt.s32.totalorder %s19, 1
      %s3000 = scalar_select %p2999, %s19, 1
      %s3001 = smul.addr %s3000, 32
      %s3002 = smul.addr %s3001, 8
      %s3003 = scalar_lea.vmem %s4, %s3002
      // Predicated region
      $region41: #{dense_block_forward.3} parent=35 // pred_check
        %p3004 = pneg %p151
      $region42: #{dense_block_forward.3} parent=35 // pred_check_branch
        %3006 = sbr.rel (%p3004) target = $region44
      $region43: #{dense_block_forward.3} parent=35 // pred_region
        _
      $region44: #{dense_block_forward.3} parent=35 // pred_fallthru
        _
    $region36: #{dense_block_forward.3} parent=5 // pred_fallthru
      _
    %p3007 = scmp.le.s32.totalorder 2, %s10
    // Predicated region
    $region45: #{dense_block_forward.3} parent=5 // pred_check
      %p3008 = pneg %p3007
    $region46: #{dense_block_forward.3} parent=5 // pred_check_branch
      %3010 = sbr.rel (%p3008) target = $region48
    $region47: #{dense_block_forward.3} parent=5 // pred_region
      %s3011 = ssub.s32 %s10, 2
      // Predicated region
      $region49: #{dense_block_forward.3} parent=47 // pred_check
        %p3012 = pneg %p157
      $region50: #{dense_block_forward.3} parent=47 // pred_check_branch
        %3014 = sbr.rel (%p3012) target = $region52
      $region51: #{dense_block_forward.3} parent=47 // pred_region
        %p3015 = scmp.lt.s32.totalorder %s21, 1
        %s3016 = scalar_select %p3015, %s21, 1
        %s3017 = smul.addr %s3016, 32
        %s3018 = smul.addr %s3017, 8
        %s3019 = scalar_lea.vmem %s4, %s3018
      $region52: #{dense_block_forward.3} parent=47 // pred_fallthru
        _
    $region48: #{dense_block_forward.3} parent=5 // pred_fallthru
      _
  $region6: #{dense_block_forward.3} parent=0 // loop_footer
    %s14 = sadd.s32 1, %s10
  $region7: #{dense_block_forward.3} parent=0 // loop_footer_branch
    %9 = sbr.rel target = $region3
  $region8: #{dense_block_forward.3} parent=0 // loop_exit
    _

</llo_original>
